<compile_context>
chip_gen: v5e
topology: v5e:2x2
jax: 0.10.0
libtpu: 0.0.40
codegen_flags: <defaults>
</compile_context>

<pallas_src>
import functools

import jax
import jax.numpy as jnp
from jax import lax
from jax.experimental import pallas as pl
from jax.experimental.pallas import tpu as pltpu

# ---- model hyperparameters (mirror LSTM2.__init__ defaults, small test sizes) ----
NUM_LAYERS = 5
NUM_HIDDEN = 12
NUM_INPUT_FEATURES = 4
NUM_OUTPUT_FEATURES = 3
FC1_DIM = 128
# The module slices output[:, -num_layers:, :] and fc_1 takes
# num_layers*num_hidden features; keep a separate constant for the head's
# "last 5 timesteps" so it doesn't silently change if NUM_LAYERS changes.
TAIL_STEPS = NUM_LAYERS


def _lstm2_kernel(x_ref, wih0_ref, wihr_ref, whh_ref, b_ref,
                  fc1w_ref, fc1b_ref, fc2w_ref, fc2b_ref, out_ref,
                  *, num_layers, num_hidden, seq_len, batch, tail_steps):
    L, H, S, B, T = num_layers, num_hidden, seq_len, batch, tail_steps
    G = 4 * H
    f32, bf16 = jnp.float32, jnp.bfloat16

    # Lane-constant vectors for the single full-width tanh (hoisted; built at
    # the full (B, G) shape so no per-cell sublane broadcast is emitted).
    # Gate column order is i | f | g | o.
    lane = lax.broadcasted_iota(jnp.int32, (B, G), 1)
    is_g_col = (lane >= 2 * H) & (lane < 3 * H)
    scale = jnp.where(is_g_col, 1.0, 0.5).astype(f32)    # also the post-tanh factor
    offset = jnp.where(is_g_col, 0.0, 0.5).astype(f32)

    # Hoisted per-layer bias broadcasts (layers >= 1; layer 0's bias is folded
    # into the batched input GEMM). JAX does not CSE broadcast_in_dim, so do it
    # once here instead of once per cell.
    bias_b = [None] + [jnp.broadcast_to(b_ref[l], (B, G)).astype(f32)
                       for l in range(1, L)]

    # Layer-0 input-to-hidden GEMM for the whole sequence: one MXU call.
    gz0 = jnp.dot(x_ref[...], wih0_ref[...], preferred_element_type=f32)
    gz0 = gz0 + jnp.broadcast_to(b_ref[0], (S * B, G)).astype(f32)      # (S*B, G)

    def cell(pre, w_hh_l, h_bf, c):
        """One LSTM cell. pre = x-part(+bias) of the gates, (B, G) f32."""
        g = pre + jnp.dot(h_bf, w_hh_l, preferred_element_type=f32)
        t = jnp.tanh(scale * g)            # ONE EUP pass over all 4 gates
        a = scale * t + offset             # i|f|o -> sigmoid, g -> tanh
        i_g = a[:, 0:H]
        f_g = a[:, H:2 * H]
        g_g = a[:, 2 * H:3 * H]
        o_g = a[:, 3 * H:4 * H]
        c_new = f_g * c + i_g * g_g
        h_new = o_g * jnp.tanh(c_new)      # second (and last) EUP op of the cell
        return h_new, h_new.astype(bf16), c_new

    h_bf = [jnp.zeros((B, H), bf16) for _ in range(L)]   # matmul-side carries
    c = [jnp.zeros((B, H), f32) for _ in range(L)]       # elementwise carries
    top_h = [None] * T                                   # last T top-layer h_t (f32)

    # Wavefront over diagonals d = l + t: every cell on a diagonal only reads
    # values produced on diagonal d-1, so the fully unrolled Python loop lets
    # the LLO scheduler interleave their MXU pushes, EUP pops and VALU combines.
    for d in range(L + S - 1):
        prev_h_bf = list(h_bf)             # snapshot: reads come from diag d-1
        prev_c = list(c)
        for l in range(max(0, d - S + 1), min(L, d + 1)):
            t = d - l
            if l == 0:
                pre = gz0[t * B:(t + 1) * B, :]
            else:
                pre = bias_b[l] + jnp.dot(prev_h_bf[l - 1], wihr_ref[l - 1],
                                          preferred_element_type=f32)
            h_f, h_b, c_new = cell(pre, whh_ref[l], prev_h_bf[l], prev_c[l])
            h_bf[l] = h_b
            c[l] = c_new
            if l == L - 1 and t >= S - T:
                top_h[t - (S - T)] = h_f

    # Head: relu(flatten(last T top-layer h)) -> fc_1 -> relu -> dropout(0.0)
    # -> fc. FC1 is a single (B, T*H) @ (T*H, 128) matmul.
    feats = jnp.maximum(jnp.concatenate(top_h, axis=1), 0.0)            # (B, T*H)
    z1 = jnp.dot(feats.astype(bf16), fc1w_ref[...],
                 preferred_element_type=f32) + fc1b_ref[...]
    z1 = jnp.maximum(z1, 0.0)
    # TODO(synk): nn.Dropout(p=0.0) is the identity here; no RNG path emitted.
    out = jnp.dot(z1.astype(bf16), fc2w_ref[...],
                  preferred_element_type=f32) + fc2b_ref[...]
    out_ref[...] = out


def lstm2_forward(x, params):
    """x: (batch, seq, NUM_INPUT_FEATURES) float32 -> (batch, NUM_OUTPUT_FEATURES)."""
    B, S, F = x.shape
    assert F == NUM_INPUT_FEATURES and S >= TAIL_STEPS
    L, H, T, O = NUM_LAYERS, NUM_HIDDEN, TAIL_STEPS, NUM_OUTPUT_FEATURES
    G = 4 * H
    bf16 = jnp.bfloat16

    # Time-major, flattened to (S*B, F) so layer 0's input GEMM is one MXU call.
    x_flat = jnp.transpose(x, (1, 0, 2)).reshape(S * B, F).astype(bf16)

    kernel = functools.partial(_lstm2_kernel, num_layers=L, num_hidden=H,
                               seq_len=S, batch=B, tail_steps=T)
    vmem = pl.BlockSpec(memory_space=pltpu.MemorySpace.VMEM)

    # Advisory scheduling hint for XLA around the custom call.
    flops = (2 * S * B * F * G                  # layer-0 input GEMM
             + 2 * (L - 1) * S * B * H * G      # input GEMMs, layers 1..L-1
             + 2 * L * S * B * H * G            # recurrent GEMMs
             + 2 * B * (T * H) * FC1_DIM        # fc_1
             + 2 * B * FC1_DIM * O)             # fc
    transcendentals = L * S * B * (G + H)       # fused gate tanh + tanh(c)
    bytes_accessed = (2 * (S * B * F + F * G + (L - 1) * H * G + L * H * G
                           + T * H * FC1_DIM + FC1_DIM * O)       # bf16 operands
                      + 4 * (L * G + FC1_DIM + O + B * O))        # f32 biases + out
    cost = pl.CostEstimate(flops=flops, transcendentals=transcendentals,
                           bytes_accessed=bytes_accessed)

    # No grid: footprint is tens of KB (<< 64 MiB v7x / 128 MiB v5e/v6e VMEM).
    # For large batch, add a batch grid with
    # compiler_params=pltpu.CompilerParams(dimension_semantics=("parallel",))
    # so both v7x TensorCores are used; at B=2 a grid only adds overhead.
    return pl.pallas_call(
        kernel,
        out_shape=jax.ShapeDtypeStruct((B, O), jnp.float32),
        in_specs=[vmem] * 9,
        out_specs=vmem,
        cost_estimate=cost,
    )(x_flat,
      params["wih0"].astype(bf16), params["wihr"].astype(bf16),
      params["whh"].astype(bf16), params["b"],
      params["fc1w"].astype(bf16), params["fc1b"],
      params["fc2w"].astype(bf16), params["fc2b"])


def init_params(key):
    """Deterministic synthetic parameters with PyTorch-style uniform scaling.

    LSTM weights are stored gate-fused and pre-transposed for right-multiply:
      wih0: (F, 4H)   wihr: (L-1, H, 4H)   whh: (L, H, 4H)   b: (L, 1, 4H)
    (gate column order i | f | g | o, b = b_ih + b_hh). fc1 weight is stored
    flat as (T*H, 128) so the FC1 head is a single matmul in the kernel.
    """
    L, H, F, O, T = (NUM_LAYERS, NUM_HIDDEN, NUM_INPUT_FEATURES,
                     NUM_OUTPUT_FEATURES, TAIL_STEPS)
    G = 4 * H
    ks = jax.random.split(key, 8)
    u = lambda k, shape, s: jax.random.uniform(k, shape, jnp.float32, -s, s)
    k_lstm = 1.0 / float(H) ** 0.5
    k_fc1 = 1.0 / float(T * H) ** 0.5
    k_fc2 = 1.0 / float(FC1_DIM) ** 0.5
    return dict(
        wih0=u(ks[0], (F, G), k_lstm),                  # layer 0 input weights (T, fused)
        wihr=u(ks[1], (L - 1, H, G), k_lstm),           # layers 1..L-1 input weights
        whh=u(ks[2], (L, H, G), k_lstm),                # recurrent weights
        b=u(ks[3], (L, 1, G), 2.0 * k_lstm),            # combined b_ih + b_hh
        fc1w=u(ks[4], (T * H, FC1_DIM), k_fc1),         # fc_1 weight (T), flat
        fc1b=u(ks[5], (1, FC1_DIM), k_fc1),
        fc2w=u(ks[6], (FC1_DIM, O), k_fc2),             # fc weight (T)
        fc2b=u(ks[7], (1, O), k_fc2),
    )


def lstm2_reference(x, p):
    """Pure-JAX f32 reference with identical semantics (mirrors nn.LSTM equations)."""
    B, S, _ = x.shape
    L, H, T = NUM_LAYERS, NUM_HIDDEN, TAIL_STEPS
    layer_in = x.astype(jnp.float32)
    for l in range(L):
        w_ih = p["wih0"] if l == 0 else p["wihr"][l - 1]          # (in, 4H)
        w_hh = p["whh"][l]                                        # (H, 4H)
        bias = p["b"][l]                                          # (1, 4H)
        h = jnp.zeros((B, H), jnp.float32)
        c = jnp.zeros((B, H), jnp.float32)
        outs = []
        for t in range(S):
            g = layer_in[:, t, :] @ w_ih + h @ w_hh + bias
            i_g = jax.nn.sigmoid(g[:, 0:H])
            f_g = jax.nn.sigmoid(g[:, H:2 * H])
            g_g = jnp.tanh(g[:, 2 * H:3 * H])
            o_g = jax.nn.sigmoid(g[:, 3 * H:4 * H])
            c = f_g * c + i_g * g_g
            h = o_g * jnp.tanh(c)
            outs.append(h)
        layer_in = jnp.stack(outs, axis=1)                        # (B, S, H)
    feats = layer_in[:, -T:, :].reshape(B, T * H)
    z = jnp.maximum(feats, 0.0)
    z = z @ p["fc1w"] + p["fc1b"]
    z = jnp.maximum(z, 0.0)
    return z @ p["fc2w"] + p["fc2b"]


if __name__ == "__main__":
    key = jax.random.PRNGKey(0)
    k_params, k_x = jax.random.split(key)
    params = init_params(k_params)

    batch, seq = 2, 8
    x = jax.random.normal(k_x, (batch, seq, NUM_INPUT_FEATURES), jnp.float32)

    out = jax.block_until_ready(jax.jit(lstm2_forward)(x, params))
    ref = lstm2_reference(x, params)

    assert out.shape == (batch, NUM_OUTPUT_FEATURES), out.shape
    # bf16 MXU operands (review item 5): tolerance relaxed from 1e-4 to 2e-2
    # against the f32 reference (review correctness note #3). Observed error is
    # ~1e-3, so this bound keeps ~10-20x headroom.
    assert jnp.allclose(out, ref, atol=2e-2, rtol=2e-2), (out, ref)
    print("KERNEL_OK")
</pallas_src>

<mosaic_0001>
module attributes {stable_mosaic.version = 11 : i64} {
  func.func @_lstm2_kernel(%arg0: memref<16x4xbf16, #tpu.memory_space<vmem>>, %arg1: memref<4x48xbf16, #tpu.memory_space<vmem>>, %arg2: memref<4x12x48xbf16, #tpu.memory_space<vmem>>, %arg3: memref<5x12x48xbf16, #tpu.memory_space<vmem>>, %arg4: memref<5x1x48xf32, #tpu.memory_space<vmem>>, %arg5: memref<60x128xbf16, #tpu.memory_space<vmem>>, %arg6: memref<1x128xf32, #tpu.memory_space<vmem>>, %arg7: memref<128x3xbf16, #tpu.memory_space<vmem>>, %arg8: memref<1x3xf32, #tpu.memory_space<vmem>>, %arg9: memref<2x3xf32, #tpu.memory_space<vmem>>) attributes {dimension_semantics = [], scalar_prefetch = 0 : i64, scratch_operands = 0 : i64, tpu.core_type = #tpu.core_type<tc>} {
    %0 = tpu.iota {dimensions = array<i32: 1>} : vector<2x48xi32>
    %c24_i32 = arith.constant 24 : i32
    %1 = vector.broadcast %c24_i32 : i32 to vector<2x48xi32>
    %2 = arith.cmpi sge, %0, %1 : vector<2x48xi32>
    %c36_i32 = arith.constant 36 : i32
    %3 = vector.broadcast %c36_i32 : i32 to vector<2x48xi32>
    %4 = arith.cmpi slt, %0, %3 : vector<2x48xi32>
    %5 = arith.andi %2, %4 : vector<2x48xi1>
    %cst = arith.constant 1.000000e+00 : f32
    %cst_0 = arith.constant 5.000000e-01 : f32
    %6 = vector.broadcast %cst : f32 to vector<2x48xf32>
    %7 = vector.broadcast %cst_0 : f32 to vector<2x48xf32>
    %8 = arith.select %5, %6, %7 : vector<2x48xi1>, vector<2x48xf32>
    %cst_1 = arith.constant 0.000000e+00 : f32
    %cst_2 = arith.constant 5.000000e-01 : f32
    %9 = vector.broadcast %cst_1 : f32 to vector<2x48xf32>
    %10 = vector.broadcast %cst_2 : f32 to vector<2x48xf32>
    %11 = arith.select %5, %9, %10 : vector<2x48xi1>, vector<2x48xf32>
    %c1 = arith.constant 1 : index
    %c0 = arith.constant 0 : index
    %c0_3 = arith.constant 0 : index
    %12 = vector.load %arg4[%c1, %c0, %c0_3] : memref<5x1x48xf32, #tpu.memory_space<vmem>>, vector<1x1x48xf32>
    %13 = vector.shape_cast %12 : vector<1x1x48xf32> to vector<1x48xf32>
    %14 = vector.shape_cast %13 : vector<1x48xf32> to vector<1x48xf32>
    %15 = vector.broadcast %14 : vector<1x48xf32> to vector<2x48xf32>
    %c2 = arith.constant 2 : index
    %c0_4 = arith.constant 0 : index
    %c0_5 = arith.constant 0 : index
    %16 = vector.load %arg4[%c2, %c0_4, %c0_5] : memref<5x1x48xf32, #tpu.memory_space<vmem>>, vector<1x1x48xf32>
    %17 = vector.shape_cast %16 : vector<1x1x48xf32> to vector<1x48xf32>
    %18 = vector.shape_cast %17 : vector<1x48xf32> to vector<1x48xf32>
    %19 = vector.broadcast %18 : vector<1x48xf32> to vector<2x48xf32>
    %c3 = arith.constant 3 : index
    %c0_6 = arith.constant 0 : index
    %c0_7 = arith.constant 0 : index
    %20 = vector.load %arg4[%c3, %c0_6, %c0_7] : memref<5x1x48xf32, #tpu.memory_space<vmem>>, vector<1x1x48xf32>
    %21 = vector.shape_cast %20 : vector<1x1x48xf32> to vector<1x48xf32>
    %22 = vector.shape_cast %21 : vector<1x48xf32> to vector<1x48xf32>
    %23 = vector.broadcast %22 : vector<1x48xf32> to vector<2x48xf32>
    %c4 = arith.constant 4 : index
    %c0_8 = arith.constant 0 : index
    %c0_9 = arith.constant 0 : index
    %24 = vector.load %arg4[%c4, %c0_8, %c0_9] : memref<5x1x48xf32, #tpu.memory_space<vmem>>, vector<1x1x48xf32>
    %25 = vector.shape_cast %24 : vector<1x1x48xf32> to vector<1x48xf32>
    %26 = vector.shape_cast %25 : vector<1x48xf32> to vector<1x48xf32>
    %27 = vector.broadcast %26 : vector<1x48xf32> to vector<2x48xf32>
    %c0_10 = arith.constant 0 : index
    %c0_11 = arith.constant 0 : index
    %28 = vector.load %arg0[%c0_10, %c0_11] : memref<16x4xbf16, #tpu.memory_space<vmem>>, vector<16x4xbf16>
    %c0_12 = arith.constant 0 : index
    %c0_13 = arith.constant 0 : index
    %29 = vector.load %arg1[%c0_12, %c0_13] : memref<4x48xbf16, #tpu.memory_space<vmem>>, vector<4x48xbf16>
    %cst_14 = arith.constant dense<0.000000e+00> : vector<16x48xf32>
    %30 = tpu.matmul %28, %29, %cst_14 {dimension_numbers = #tpu.dot_dimension_numbers<[1], [0], [0], [1], [0, 0, 1, 1], [], []>} : vector<16x4xbf16>, vector<4x48xbf16>, vector<16x48xf32> -> vector<16x48xf32>
    %c0_15 = arith.constant 0 : index
    %c0_16 = arith.constant 0 : index
    %c0_17 = arith.constant 0 : index
    %31 = vector.load %arg4[%c0_15, %c0_16, %c0_17] : memref<5x1x48xf32, #tpu.memory_space<vmem>>, vector<1x1x48xf32>
    %32 = vector.shape_cast %31 : vector<1x1x48xf32> to vector<1x48xf32>
    %33 = vector.shape_cast %32 : vector<1x48xf32> to vector<1x48xf32>
    %34 = vector.broadcast %33 : vector<1x48xf32> to vector<16x48xf32>
    %35 = arith.addf %30, %34 : vector<16x48xf32>
    %cst_18 = arith.constant 0.000000e+00 : bf16
    %36 = vector.broadcast %cst_18 : bf16 to vector<2x12xbf16>
    %cst_19 = arith.constant 0.000000e+00 : bf16
    %37 = vector.broadcast %cst_19 : bf16 to vector<2x12xbf16>
    %cst_20 = arith.constant 0.000000e+00 : bf16
    %38 = vector.broadcast %cst_20 : bf16 to vector<2x12xbf16>
    %cst_21 = arith.constant 0.000000e+00 : bf16
    %39 = vector.broadcast %cst_21 : bf16 to vector<2x12xbf16>
    %cst_22 = arith.constant 0.000000e+00 : bf16
    %40 = vector.broadcast %cst_22 : bf16 to vector<2x12xbf16>
    %cst_23 = arith.constant 0.000000e+00 : f32
    %41 = vector.broadcast %cst_23 : f32 to vector<2x12xf32>
    %cst_24 = arith.constant 0.000000e+00 : f32
    %42 = vector.broadcast %cst_24 : f32 to vector<2x12xf32>
    %cst_25 = arith.constant 0.000000e+00 : f32
    %43 = vector.broadcast %cst_25 : f32 to vector<2x12xf32>
    %cst_26 = arith.constant 0.000000e+00 : f32
    %44 = vector.broadcast %cst_26 : f32 to vector<2x12xf32>
    %cst_27 = arith.constant 0.000000e+00 : f32
    %45 = vector.broadcast %cst_27 : f32 to vector<2x12xf32>
    %46 = vector.extract_strided_slice %35 {offsets = [0, 0], sizes = [2, 48], strides = [1, 1]} : vector<16x48xf32> to vector<2x48xf32>
    %c0_28 = arith.constant 0 : index
    %c0_29 = arith.constant 0 : index
    %c0_30 = arith.constant 0 : index
    %47 = vector.load %arg3[%c0_28, %c0_29, %c0_30] : memref<5x12x48xbf16, #tpu.memory_space<vmem>>, vector<1x12x48xbf16>
    %48 = vector.shape_cast %47 : vector<1x12x48xbf16> to vector<12x48xbf16>
    %cst_31 = arith.constant dense<0.000000e+00> : vector<2x48xf32>
    %49 = tpu.matmul %36, %48, %cst_31 {dimension_numbers = #tpu.dot_dimension_numbers<[1], [0], [0], [1], [0, 0, 1, 1], [], []>} : vector<2x12xbf16>, vector<12x48xbf16>, vector<2x48xf32> -> vector<2x48xf32>
    %50 = arith.addf %46, %49 : vector<2x48xf32>
    %51 = arith.mulf %8, %50 : vector<2x48xf32>
    %52 = math.tanh %51 : vector<2x48xf32>
    %53 = arith.mulf %8, %52 : vector<2x48xf32>
    %54 = arith.addf %53, %11 : vector<2x48xf32>
    %55 = vector.extract_strided_slice %54 {offsets = [0, 0], sizes = [2, 12], strides = [1, 1]} : vector<2x48xf32> to vector<2x12xf32>
    %56 = vector.extract_strided_slice %54 {offsets = [0, 12], sizes = [2, 12], strides = [1, 1]} : vector<2x48xf32> to vector<2x12xf32>
    %57 = vector.extract_strided_slice %54 {offsets = [0, 24], sizes = [2, 12], strides = [1, 1]} : vector<2x48xf32> to vector<2x12xf32>
    %58 = vector.extract_strided_slice %54 {offsets = [0, 36], sizes = [2, 12], strides = [1, 1]} : vector<2x48xf32> to vector<2x12xf32>
    %59 = arith.mulf %56, %41 : vector<2x12xf32>
    %60 = arith.mulf %55, %57 : vector<2x12xf32>
    %61 = arith.addf %59, %60 : vector<2x12xf32>
    %62 = math.tanh %61 : vector<2x12xf32>
    %63 = arith.mulf %58, %62 : vector<2x12xf32>
    %64 = arith.truncf %63 : vector<2x12xf32> to vector<2x12xbf16>
    %65 = vector.extract_strided_slice %35 {offsets = [2, 0], sizes = [2, 48], strides = [1, 1]} : vector<16x48xf32> to vector<2x48xf32>
    %c0_32 = arith.constant 0 : index
    %c0_33 = arith.constant 0 : index
    %c0_34 = arith.constant 0 : index
    %66 = vector.load %arg3[%c0_32, %c0_33, %c0_34] : memref<5x12x48xbf16, #tpu.memory_space<vmem>>, vector<1x12x48xbf16>
    %67 = vector.shape_cast %66 : vector<1x12x48xbf16> to vector<12x48xbf16>
    %cst_35 = arith.constant dense<0.000000e+00> : vector<2x48xf32>
    %68 = tpu.matmul %64, %67, %cst_35 {dimension_numbers = #tpu.dot_dimension_numbers<[1], [0], [0], [1], [0, 0, 1, 1], [], []>} : vector<2x12xbf16>, vector<12x48xbf16>, vector<2x48xf32> -> vector<2x48xf32>
    %69 = arith.addf %65, %68 : vector<2x48xf32>
    %70 = arith.mulf %8, %69 : vector<2x48xf32>
    %71 = math.tanh %70 : vector<2x48xf32>
    %72 = arith.mulf %8, %71 : vector<2x48xf32>
    %73 = arith.addf %72, %11 : vector<2x48xf32>
    %74 = vector.extract_strided_slice %73 {offsets = [0, 0], sizes = [2, 12], strides = [1, 1]} : vector<2x48xf32> to vector<2x12xf32>
    %75 = vector.extract_strided_slice %73 {offsets = [0, 12], sizes = [2, 12], strides = [1, 1]} : vector<2x48xf32> to vector<2x12xf32>
    %76 = vector.extract_strided_slice %73 {offsets = [0, 24], sizes = [2, 12], strides = [1, 1]} : vector<2x48xf32> to vector<2x12xf32>
    %77 = vector.extract_strided_slice %73 {offsets = [0, 36], sizes = [2, 12], strides = [1, 1]} : vector<2x48xf32> to vector<2x12xf32>
    %78 = arith.mulf %75, %61 : vector<2x12xf32>
    %79 = arith.mulf %74, %76 : vector<2x12xf32>
    %80 = arith.addf %78, %79 : vector<2x12xf32>
    %81 = math.tanh %80 : vector<2x12xf32>
    %82 = arith.mulf %77, %81 : vector<2x12xf32>
    %83 = arith.truncf %82 : vector<2x12xf32> to vector<2x12xbf16>
    %c0_36 = arith.constant 0 : index
    %c0_37 = arith.constant 0 : index
    %c0_38 = arith.constant 0 : index
    %84 = vector.load %arg2[%c0_36, %c0_37, %c0_38] : memref<4x12x48xbf16, #tpu.memory_space<vmem>>, vector<1x12x48xbf16>
    %85 = vector.shape_cast %84 : vector<1x12x48xbf16> to vector<12x48xbf16>
    %cst_39 = arith.constant dense<0.000000e+00> : vector<2x48xf32>
    %86 = tpu.matmul %64, %85, %cst_39 {dimension_numbers = #tpu.dot_dimension_numbers<[1], [0], [0], [1], [0, 0, 1, 1], [], []>} : vector<2x12xbf16>, vector<12x48xbf16>, vector<2x48xf32> -> vector<2x48xf32>
    %87 = arith.addf %15, %86 : vector<2x48xf32>
    %c1_40 = arith.constant 1 : index
    %c0_41 = arith.constant 0 : index
    %c0_42 = arith.constant 0 : index
    %88 = vector.load %arg3[%c1_40, %c0_41, %c0_42] : memref<5x12x48xbf16, #tpu.memory_space<vmem>>, vector<1x12x48xbf16>
    %89 = vector.shape_cast %88 : vector<1x12x48xbf16> to vector<12x48xbf16>
    %cst_43 = arith.constant dense<0.000000e+00> : vector<2x48xf32>
    %90 = tpu.matmul %37, %89, %cst_43 {dimension_numbers = #tpu.dot_dimension_numbers<[1], [0], [0], [1], [0, 0, 1, 1], [], []>} : vector<2x12xbf16>, vector<12x48xbf16>, vector<2x48xf32> -> vector<2x48xf32>
    %91 = arith.addf %87, %90 : vector<2x48xf32>
    %92 = arith.mulf %8, %91 : vector<2x48xf32>
    %93 = math.tanh %92 : vector<2x48xf32>
    %94 = arith.mulf %8, %93 : vector<2x48xf32>
    %95 = arith.addf %94, %11 : vector<2x48xf32>
    %96 = vector.extract_strided_slice %95 {offsets = [0, 0], sizes = [2, 12], strides = [1, 1]} : vector<2x48xf32> to vector<2x12xf32>
    %97 = vector.extract_strided_slice %95 {offsets = [0, 12], sizes = [2, 12], strides = [1, 1]} : vector<2x48xf32> to vector<2x12xf32>
    %98 = vector.extract_strided_slice %95 {offsets = [0, 24], sizes = [2, 12], strides = [1, 1]} : vector<2x48xf32> to vector<2x12xf32>
    %99 = vector.extract_strided_slice %95 {offsets = [0, 36], sizes = [2, 12], strides = [1, 1]} : vector<2x48xf32> to vector<2x12xf32>
    %100 = arith.mulf %97, %42 : vector<2x12xf32>
    %101 = arith.mulf %96, %98 : vector<2x12xf32>
    %102 = arith.addf %100, %101 : vector<2x12xf32>
    %103 = math.tanh %102 : vector<2x12xf32>
    %104 = arith.mulf %99, %103 : vector<2x12xf32>
    %105 = arith.truncf %104 : vector<2x12xf32> to vector<2x12xbf16>
    %106 = vector.extract_strided_slice %35 {offsets = [4, 0], sizes = [2, 48], strides = [1, 1]} : vector<16x48xf32> to vector<2x48xf32>
    %c0_44 = arith.constant 0 : index
    %c0_45 = arith.constant 0 : index
    %c0_46 = arith.constant 0 : index
    %107 = vector.load %arg3[%c0_44, %c0_45, %c0_46] : memref<5x12x48xbf16, #tpu.memory_space<vmem>>, vector<1x12x48xbf16>
    %108 = vector.shape_cast %107 : vector<1x12x48xbf16> to vector<12x48xbf16>
    %cst_47 = arith.constant dense<0.000000e+00> : vector<2x48xf32>
    %109 = tpu.matmul %83, %108, %cst_47 {dimension_numbers = #tpu.dot_dimension_numbers<[1], [0], [0], [1], [0, 0, 1, 1], [], []>} : vector<2x12xbf16>, vector<12x48xbf16>, vector<2x48xf32> -> vector<2x48xf32>
    %110 = arith.addf %106, %109 : vector<2x48xf32>
    %111 = arith.mulf %8, %110 : vector<2x48xf32>
    %112 = math.tanh %111 : vector<2x48xf32>
    %113 = arith.mulf %8, %112 : vector<2x48xf32>
    %114 = arith.addf %113, %11 : vector<2x48xf32>
    %115 = vector.extract_strided_slice %114 {offsets = [0, 0], sizes = [2, 12], strides = [1, 1]} : vector<2x48xf32> to vector<2x12xf32>
    %116 = vector.extract_strided_slice %114 {offsets = [0, 12], sizes = [2, 12], strides = [1, 1]} : vector<2x48xf32> to vector<2x12xf32>
    %117 = vector.extract_strided_slice %114 {offsets = [0, 24], sizes = [2, 12], strides = [1, 1]} : vector<2x48xf32> to vector<2x12xf32>
    %118 = vector.extract_strided_slice %114 {offsets = [0, 36], sizes = [2, 12], strides = [1, 1]} : vector<2x48xf32> to vector<2x12xf32>
    %119 = arith.mulf %116, %80 : vector<2x12xf32>
    %120 = arith.mulf %115, %117 : vector<2x12xf32>
    %121 = arith.addf %119, %120 : vector<2x12xf32>
    %122 = math.tanh %121 : vector<2x12xf32>
    %123 = arith.mulf %118, %122 : vector<2x12xf32>
    %124 = arith.truncf %123 : vector<2x12xf32> to vector<2x12xbf16>
    %c0_48 = arith.constant 0 : index
    %c0_49 = arith.constant 0 : index
    %c0_50 = arith.constant 0 : index
    %125 = vector.load %arg2[%c0_48, %c0_49, %c0_50] : memref<4x12x48xbf16, #tpu.memory_space<vmem>>, vector<1x12x48xbf16>
    %126 = vector.shape_cast %125 : vector<1x12x48xbf16> to vector<12x48xbf16>
    %cst_51 = arith.constant dense<0.000000e+00> : vector<2x48xf32>
    %127 = tpu.matmul %83, %126, %cst_51 {dimension_numbers = #tpu.dot_dimension_numbers<[1], [0], [0], [1], [0, 0, 1, 1], [], []>} : vector<2x12xbf16>, vector<12x48xbf16>, vector<2x48xf32> -> vector<2x48xf32>
    %128 = arith.addf %15, %127 : vector<2x48xf32>
    %c1_52 = arith.constant 1 : index
    %c0_53 = arith.constant 0 : index
    %c0_54 = arith.constant 0 : index
    %129 = vector.load %arg3[%c1_52, %c0_53, %c0_54] : memref<5x12x48xbf16, #tpu.memory_space<vmem>>, vector<1x12x48xbf16>
    %130 = vector.shape_cast %129 : vector<1x12x48xbf16> to vector<12x48xbf16>
    %cst_55 = arith.constant dense<0.000000e+00> : vector<2x48xf32>
    %131 = tpu.matmul %105, %130, %cst_55 {dimension_numbers = #tpu.dot_dimension_numbers<[1], [0], [0], [1], [0, 0, 1, 1], [], []>} : vector<2x12xbf16>, vector<12x48xbf16>, vector<2x48xf32> -> vector<2x48xf32>
    %132 = arith.addf %128, %131 : vector<2x48xf32>
    %133 = arith.mulf %8, %132 : vector<2x48xf32>
    %134 = math.tanh %133 : vector<2x48xf32>
    %135 = arith.mulf %8, %134 : vector<2x48xf32>
    %136 = arith.addf %135, %11 : vector<2x48xf32>
    %137 = vector.extract_strided_slice %136 {offsets = [0, 0], sizes = [2, 12], strides = [1, 1]} : vector<2x48xf32> to vector<2x12xf32>
    %138 = vector.extract_strided_slice %136 {offsets = [0, 12], sizes = [2, 12], strides = [1, 1]} : vector<2x48xf32> to vector<2x12xf32>
    %139 = vector.extract_strided_slice %136 {offsets = [0, 24], sizes = [2, 12], strides = [1, 1]} : vector<2x48xf32> to vector<2x12xf32>
    %140 = vector.extract_strided_slice %136 {offsets = [0, 36], sizes = [2, 12], strides = [1, 1]} : vector<2x48xf32> to vector<2x12xf32>
    %141 = arith.mulf %138, %102 : vector<2x12xf32>
    %142 = arith.mulf %137, %139 : vector<2x12xf32>
    %143 = arith.addf %141, %142 : vector<2x12xf32>
    %144 = math.tanh %143 : vector<2x12xf32>
    %145 = arith.mulf %140, %144 : vector<2x12xf32>
    %146 = arith.truncf %145 : vector<2x12xf32> to vector<2x12xbf16>
    %c1_56 = arith.constant 1 : index
    %c0_57 = arith.constant 0 : index
    %c0_58 = arith.constant 0 : index
    %147 = vector.load %arg2[%c1_56, %c0_57, %c0_58] : memref<4x12x48xbf16, #tpu.memory_space<vmem>>, vector<1x12x48xbf16>
    %148 = vector.shape_cast %147 : vector<1x12x48xbf16> to vector<12x48xbf16>
    %cst_59 = arith.constant dense<0.000000e+00> : vector<2x48xf32>
    %149 = tpu.matmul %105, %148, %cst_59 {dimension_numbers = #tpu.dot_dimension_numbers<[1], [0], [0], [1], [0, 0, 1, 1], [], []>} : vector<2x12xbf16>, vector<12x48xbf16>, vector<2x48xf32> -> vector<2x48xf32>
    %150 = arith.addf %19, %149 : vector<2x48xf32>
    %c2_60 = arith.constant 2 : index
    %c0_61 = arith.constant 0 : index
    %c0_62 = arith.constant 0 : index
    %151 = vector.load %arg3[%c2_60, %c0_61, %c0_62] : memref<5x12x48xbf16, #tpu.memory_space<vmem>>, vector<1x12x48xbf16>
    %152 = vector.shape_cast %151 : vector<1x12x48xbf16> to vector<12x48xbf16>
    %cst_63 = arith.constant dense<0.000000e+00> : vector<2x48xf32>
    %153 = tpu.matmul %38, %152, %cst_63 {dimension_numbers = #tpu.dot_dimension_numbers<[1], [0], [0], [1], [0, 0, 1, 1], [], []>} : vector<2x12xbf16>, vector<12x48xbf16>, vector<2x48xf32> -> vector<2x48xf32>
    %154 = arith.addf %150, %153 : vector<2x48xf32>
    %155 = arith.mulf %8, %154 : vector<2x48xf32>
    %156 = math.tanh %155 : vector<2x48xf32>
    %157 = arith.mulf %8, %156 : vector<2x48xf32>
    %158 = arith.addf %157, %11 : vector<2x48xf32>
    %159 = vector.extract_strided_slice %158 {offsets = [0, 0], sizes = [2, 12], strides = [1, 1]} : vector<2x48xf32> to vector<2x12xf32>
    %160 = vector.extract_strided_slice %158 {offsets = [0, 12], sizes = [2, 12], strides = [1, 1]} : vector<2x48xf32> to vector<2x12xf32>
    %161 = vector.extract_strided_slice %158 {offsets = [0, 24], sizes = [2, 12], strides = [1, 1]} : vector<2x48xf32> to vector<2x12xf32>
    %162 = vector.extract_strided_slice %158 {offsets = [0, 36], sizes = [2, 12], strides = [1, 1]} : vector<2x48xf32> to vector<2x12xf32>
    %163 = arith.mulf %160, %43 : vector<2x12xf32>
    %164 = arith.mulf %159, %161 : vector<2x12xf32>
    %165 = arith.addf %163, %164 : vector<2x12xf32>
    %166 = math.tanh %165 : vector<2x12xf32>
    %167 = arith.mulf %162, %166 : vector<2x12xf32>
    %168 = arith.truncf %167 : vector<2x12xf32> to vector<2x12xbf16>
    %169 = vector.extract_strided_slice %35 {offsets = [6, 0], sizes = [2, 48], strides = [1, 1]} : vector<16x48xf32> to vector<2x48xf32>
    %c0_64 = arith.constant 0 : index
    %c0_65 = arith.constant 0 : index
    %c0_66 = arith.constant 0 : index
    %170 = vector.load %arg3[%c0_64, %c0_65, %c0_66] : memref<5x12x48xbf16, #tpu.memory_space<vmem>>, vector<1x12x48xbf16>
    %171 = vector.shape_cast %170 : vector<1x12x48xbf16> to vector<12x48xbf16>
    %cst_67 = arith.constant dense<0.000000e+00> : vector<2x48xf32>
    %172 = tpu.matmul %124, %171, %cst_67 {dimension_numbers = #tpu.dot_dimension_numbers<[1], [0], [0], [1], [0, 0, 1, 1], [], []>} : vector<2x12xbf16>, vector<12x48xbf16>, vector<2x48xf32> -> vector<2x48xf32>
    %173 = arith.addf %169, %172 : vector<2x48xf32>
    %174 = arith.mulf %8, %173 : vector<2x48xf32>
    %175 = math.tanh %174 : vector<2x48xf32>
    %176 = arith.mulf %8, %175 : vector<2x48xf32>
    %177 = arith.addf %176, %11 : vector<2x48xf32>
    %178 = vector.extract_strided_slice %177 {offsets = [0, 0], sizes = [2, 12], strides = [1, 1]} : vector<2x48xf32> to vector<2x12xf32>
    %179 = vector.extract_strided_slice %177 {offsets = [0, 12], sizes = [2, 12], strides = [1, 1]} : vector<2x48xf32> to vector<2x12xf32>
    %180 = vector.extract_strided_slice %177 {offsets = [0, 24], sizes = [2, 12], strides = [1, 1]} : vector<2x48xf32> to vector<2x12xf32>
    %181 = vector.extract_strided_slice %177 {offsets = [0, 36], sizes = [2, 12], strides = [1, 1]} : vector<2x48xf32> to vector<2x12xf32>
    %182 = arith.mulf %179, %121 : vector<2x12xf32>
    %183 = arith.mulf %178, %180 : vector<2x12xf32>
    %184 = arith.addf %182, %183 : vector<2x12xf32>
    %185 = math.tanh %184 : vector<2x12xf32>
    %186 = arith.mulf %181, %185 : vector<2x12xf32>
    %187 = arith.truncf %186 : vector<2x12xf32> to vector<2x12xbf16>
    %c0_68 = arith.constant 0 : index
    %c0_69 = arith.constant 0 : index
    %c0_70 = arith.constant 0 : index
    %188 = vector.load %arg2[%c0_68, %c0_69, %c0_70] : memref<4x12x48xbf16, #tpu.memory_space<vmem>>, vector<1x12x48xbf16>
    %189 = vector.shape_cast %188 : vector<1x12x48xbf16> to vector<12x48xbf16>
    %cst_71 = arith.constant dense<0.000000e+00> : vector<2x48xf32>
    %190 = tpu.matmul %124, %189, %cst_71 {dimension_numbers = #tpu.dot_dimension_numbers<[1], [0], [0], [1], [0, 0, 1, 1], [], []>} : vector<2x12xbf16>, vector<12x48xbf16>, vector<2x48xf32> -> vector<2x48xf32>
    %191 = arith.addf %15, %190 : vector<2x48xf32>
    %c1_72 = arith.constant 1 : index
    %c0_73 = arith.constant 0 : index
    %c0_74 = arith.constant 0 : index
    %192 = vector.load %arg3[%c1_72, %c0_73, %c0_74] : memref<5x12x48xbf16, #tpu.memory_space<vmem>>, vector<1x12x48xbf16>
    %193 = vector.shape_cast %192 : vector<1x12x48xbf16> to vector<12x48xbf16>
    %cst_75 = arith.constant dense<0.000000e+00> : vector<2x48xf32>
    %194 = tpu.matmul %146, %193, %cst_75 {dimension_numbers = #tpu.dot_dimension_numbers<[1], [0], [0], [1], [0, 0, 1, 1], [], []>} : vector<2x12xbf16>, vector<12x48xbf16>, vector<2x48xf32> -> vector<2x48xf32>
    %195 = arith.addf %191, %194 : vector<2x48xf32>
    %196 = arith.mulf %8, %195 : vector<2x48xf32>
    %197 = math.tanh %196 : vector<2x48xf32>
    %198 = arith.mulf %8, %197 : vector<2x48xf32>
    %199 = arith.addf %198, %11 : vector<2x48xf32>
    %200 = vector.extract_strided_slice %199 {offsets = [0, 0], sizes = [2, 12], strides = [1, 1]} : vector<2x48xf32> to vector<2x12xf32>
    %201 = vector.extract_strided_slice %199 {offsets = [0, 12], sizes = [2, 12], strides = [1, 1]} : vector<2x48xf32> to vector<2x12xf32>
    %202 = vector.extract_strided_slice %199 {offsets = [0, 24], sizes = [2, 12], strides = [1, 1]} : vector<2x48xf32> to vector<2x12xf32>
    %203 = vector.extract_strided_slice %199 {offsets = [0, 36], sizes = [2, 12], strides = [1, 1]} : vector<2x48xf32> to vector<2x12xf32>
    %204 = arith.mulf %201, %143 : vector<2x12xf32>
    %205 = arith.mulf %200, %202 : vector<2x12xf32>
    %206 = arith.addf %204, %205 : vector<2x12xf32>
    %207 = math.tanh %206 : vector<2x12xf32>
    %208 = arith.mulf %203, %207 : vector<2x12xf32>
    %209 = arith.truncf %208 : vector<2x12xf32> to vector<2x12xbf16>
    %c1_76 = arith.constant 1 : index
    %c0_77 = arith.constant 0 : index
    %c0_78 = arith.constant 0 : index
    %210 = vector.load %arg2[%c1_76, %c0_77, %c0_78] : memref<4x12x48xbf16, #tpu.memory_space<vmem>>, vector<1x12x48xbf16>
    %211 = vector.shape_cast %210 : vector<1x12x48xbf16> to vector<12x48xbf16>
    %cst_79 = arith.constant dense<0.000000e+00> : vector<2x48xf32>
    %212 = tpu.matmul %146, %211, %cst_79 {dimension_numbers = #tpu.dot_dimension_numbers<[1], [0], [0], [1], [0, 0, 1, 1], [], []>} : vector<2x12xbf16>, vector<12x48xbf16>, vector<2x48xf32> -> vector<2x48xf32>
    %213 = arith.addf %19, %212 : vector<2x48xf32>
    %c2_80 = arith.constant 2 : index
    %c0_81 = arith.constant 0 : index
    %c0_82 = arith.constant 0 : index
    %214 = vector.load %arg3[%c2_80, %c0_81, %c0_82] : memref<5x12x48xbf16, #tpu.memory_space<vmem>>, vector<1x12x48xbf16>
    %215 = vector.shape_cast %214 : vector<1x12x48xbf16> to vector<12x48xbf16>
    %cst_83 = arith.constant dense<0.000000e+00> : vector<2x48xf32>
    %216 = tpu.matmul %168, %215, %cst_83 {dimension_numbers = #tpu.dot_dimension_numbers<[1], [0], [0], [1], [0, 0, 1, 1], [], []>} : vector<2x12xbf16>, vector<12x48xbf16>, vector<2x48xf32> -> vector<2x48xf32>
    %217 = arith.addf %213, %216 : vector<2x48xf32>
    %218 = arith.mulf %8, %217 : vector<2x48xf32>
    %219 = math.tanh %218 : vector<2x48xf32>
    %220 = arith.mulf %8, %219 : vector<2x48xf32>
    %221 = arith.addf %220, %11 : vector<2x48xf32>
    %222 = vector.extract_strided_slice %221 {offsets = [0, 0], sizes = [2, 12], strides = [1, 1]} : vector<2x48xf32> to vector<2x12xf32>
    %223 = vector.extract_strided_slice %221 {offsets = [0, 12], sizes = [2, 12], strides = [1, 1]} : vector<2x48xf32> to vector<2x12xf32>
    %224 = vector.extract_strided_slice %221 {offsets = [0, 24], sizes = [2, 12], strides = [1, 1]} : vector<2x48xf32> to vector<2x12xf32>
    %225 = vector.extract_strided_slice %221 {offsets = [0, 36], sizes = [2, 12], strides = [1, 1]} : vector<2x48xf32> to vector<2x12xf32>
    %226 = arith.mulf %223, %165 : vector<2x12xf32>
    %227 = arith.mulf %222, %224 : vector<2x12xf32>
    %228 = arith.addf %226, %227 : vector<2x12xf32>
    %229 = math.tanh %228 : vector<2x12xf32>
    %230 = arith.mulf %225, %229 : vector<2x12xf32>
    %231 = arith.truncf %230 : vector<2x12xf32> to vector<2x12xbf16>
    %c2_84 = arith.constant 2 : index
    %c0_85 = arith.constant 0 : index
    %c0_86 = arith.constant 0 : index
    %232 = vector.load %arg2[%c2_84, %c0_85, %c0_86] : memref<4x12x48xbf16, #tpu.memory_space<vmem>>, vector<1x12x48xbf16>
    %233 = vector.shape_cast %232 : vector<1x12x48xbf16> to vector<12x48xbf16>
    %cst_87 = arith.constant dense<0.000000e+00> : vector<2x48xf32>
    %234 = tpu.matmul %168, %233, %cst_87 {dimension_numbers = #tpu.dot_dimension_numbers<[1], [0], [0], [1], [0, 0, 1, 1], [], []>} : vector<2x12xbf16>, vector<12x48xbf16>, vector<2x48xf32> -> vector<2x48xf32>
    %235 = arith.addf %23, %234 : vector<2x48xf32>
    %c3_88 = arith.constant 3 : index
    %c0_89 = arith.constant 0 : index
    %c0_90 = arith.constant 0 : index
    %236 = vector.load %arg3[%c3_88, %c0_89, %c0_90] : memref<5x12x48xbf16, #tpu.memory_space<vmem>>, vector<1x12x48xbf16>
    %237 = vector.shape_cast %236 : vector<1x12x48xbf16> to vector<12x48xbf16>
    %cst_91 = arith.constant dense<0.000000e+00> : vector<2x48xf32>
    %238 = tpu.matmul %39, %237, %cst_91 {dimension_numbers = #tpu.dot_dimension_numbers<[1], [0], [0], [1], [0, 0, 1, 1], [], []>} : vector<2x12xbf16>, vector<12x48xbf16>, vector<2x48xf32> -> vector<2x48xf32>
    %239 = arith.addf %235, %238 : vector<2x48xf32>
    %240 = arith.mulf %8, %239 : vector<2x48xf32>
    %241 = math.tanh %240 : vector<2x48xf32>
    %242 = arith.mulf %8, %241 : vector<2x48xf32>
    %243 = arith.addf %242, %11 : vector<2x48xf32>
    %244 = vector.extract_strided_slice %243 {offsets = [0, 0], sizes = [2, 12], strides = [1, 1]} : vector<2x48xf32> to vector<2x12xf32>
    %245 = vector.extract_strided_slice %243 {offsets = [0, 12], sizes = [2, 12], strides = [1, 1]} : vector<2x48xf32> to vector<2x12xf32>
    %246 = vector.extract_strided_slice %243 {offsets = [0, 24], sizes = [2, 12], strides = [1, 1]} : vector<2x48xf32> to vector<2x12xf32>
    %247 = vector.extract_strided_slice %243 {offsets = [0, 36], sizes = [2, 12], strides = [1, 1]} : vector<2x48xf32> to vector<2x12xf32>
    %248 = arith.mulf %245, %44 : vector<2x12xf32>
    %249 = arith.mulf %244, %246 : vector<2x12xf32>
    %250 = arith.addf %248, %249 : vector<2x12xf32>
    %251 = math.tanh %250 : vector<2x12xf32>
    %252 = arith.mulf %247, %251 : vector<2x12xf32>
    %253 = arith.truncf %252 : vector<2x12xf32> to vector<2x12xbf16>
    %254 = vector.extract_strided_slice %35 {offsets = [8, 0], sizes = [2, 48], strides = [1, 1]} : vector<16x48xf32> to vector<2x48xf32>
    %c0_92 = arith.constant 0 : index
    %c0_93 = arith.constant 0 : index
    %c0_94 = arith.constant 0 : index
    %255 = vector.load %arg3[%c0_92, %c0_93, %c0_94] : memref<5x12x48xbf16, #tpu.memory_space<vmem>>, vector<1x12x48xbf16>
    %256 = vector.shape_cast %255 : vector<1x12x48xbf16> to vector<12x48xbf16>
    %cst_95 = arith.constant dense<0.000000e+00> : vector<2x48xf32>
    %257 = tpu.matmul %187, %256, %cst_95 {dimension_numbers = #tpu.dot_dimension_numbers<[1], [0], [0], [1], [0, 0, 1, 1], [], []>} : vector<2x12xbf16>, vector<12x48xbf16>, vector<2x48xf32> -> vector<2x48xf32>
    %258 = arith.addf %254, %257 : vector<2x48xf32>
    %259 = arith.mulf %8, %258 : vector<2x48xf32>
    %260 = math.tanh %259 : vector<2x48xf32>
    %261 = arith.mulf %8, %260 : vector<2x48xf32>
    %262 = arith.addf %261, %11 : vector<2x48xf32>
    %263 = vector.extract_strided_slice %262 {offsets = [0, 0], sizes = [2, 12], strides = [1, 1]} : vector<2x48xf32> to vector<2x12xf32>
    %264 = vector.extract_strided_slice %262 {offsets = [0, 12], sizes = [2, 12], strides = [1, 1]} : vector<2x48xf32> to vector<2x12xf32>
    %265 = vector.extract_strided_slice %262 {offsets = [0, 24], sizes = [2, 12], strides = [1, 1]} : vector<2x48xf32> to vector<2x12xf32>
    %266 = vector.extract_strided_slice %262 {offsets = [0, 36], sizes = [2, 12], strides = [1, 1]} : vector<2x48xf32> to vector<2x12xf32>
    %267 = arith.mulf %264, %184 : vector<2x12xf32>
    %268 = arith.mulf %263, %265 : vector<2x12xf32>
    %269 = arith.addf %267, %268 : vector<2x12xf32>
    %270 = math.tanh %269 : vector<2x12xf32>
    %271 = arith.mulf %266, %270 : vector<2x12xf32>
    %272 = arith.truncf %271 : vector<2x12xf32> to vector<2x12xbf16>
    %c0_96 = arith.constant 0 : index
    %c0_97 = arith.constant 0 : index
    %c0_98 = arith.constant 0 : index
    %273 = vector.load %arg2[%c0_96, %c0_97, %c0_98] : memref<4x12x48xbf16, #tpu.memory_space<vmem>>, vector<1x12x48xbf16>
    %274 = vector.shape_cast %273 : vector<1x12x48xbf16> to vector<12x48xbf16>
    %cst_99 = arith.constant dense<0.000000e+00> : vector<2x48xf32>
    %275 = tpu.matmul %187, %274, %cst_99 {dimension_numbers = #tpu.dot_dimension_numbers<[1], [0], [0], [1], [0, 0, 1, 1], [], []>} : vector<2x12xbf16>, vector<12x48xbf16>, vector<2x48xf32> -> vector<2x48xf32>
    %276 = arith.addf %15, %275 : vector<2x48xf32>
    %c1_100 = arith.constant 1 : index
    %c0_101 = arith.constant 0 : index
    %c0_102 = arith.constant 0 : index
    %277 = vector.load %arg3[%c1_100, %c0_101, %c0_102] : memref<5x12x48xbf16, #tpu.memory_space<vmem>>, vector<1x12x48xbf16>
    %278 = vector.shape_cast %277 : vector<1x12x48xbf16> to vector<12x48xbf16>
    %cst_103 = arith.constant dense<0.000000e+00> : vector<2x48xf32>
    %279 = tpu.matmul %209, %278, %cst_103 {dimension_numbers = #tpu.dot_dimension_numbers<[1], [0], [0], [1], [0, 0, 1, 1], [], []>} : vector<2x12xbf16>, vector<12x48xbf16>, vector<2x48xf32> -> vector<2x48xf32>
    %280 = arith.addf %276, %279 : vector<2x48xf32>
    %281 = arith.mulf %8, %280 : vector<2x48xf32>
    %282 = math.tanh %281 : vector<2x48xf32>
    %283 = arith.mulf %8, %282 : vector<2x48xf32>
    %284 = arith.addf %283, %11 : vector<2x48xf32>
    %285 = vector.extract_strided_slice %284 {offsets = [0, 0], sizes = [2, 12], strides = [1, 1]} : vector<2x48xf32> to vector<2x12xf32>
    %286 = vector.extract_strided_slice %284 {offsets = [0, 12], sizes = [2, 12], strides = [1, 1]} : vector<2x48xf32> to vector<2x12xf32>
    %287 = vector.extract_strided_slice %284 {offsets = [0, 24], sizes = [2, 12], strides = [1, 1]} : vector<2x48xf32> to vector<2x12xf32>
    %288 = vector.extract_strided_slice %284 {offsets = [0, 36], sizes = [2, 12], strides = [1, 1]} : vector<2x48xf32> to vector<2x12xf32>
    %289 = arith.mulf %286, %206 : vector<2x12xf32>
    %290 = arith.mulf %285, %287 : vector<2x12xf32>
    %291 = arith.addf %289, %290 : vector<2x12xf32>
    %292 = math.tanh %291 : vector<2x12xf32>
    %293 = arith.mulf %288, %292 : vector<2x12xf32>
    %294 = arith.truncf %293 : vector<2x12xf32> to vector<2x12xbf16>
    %c1_104 = arith.constant 1 : index
    %c0_105 = arith.constant 0 : index
    %c0_106 = arith.constant 0 : index
    %295 = vector.load %arg2[%c1_104, %c0_105, %c0_106] : memref<4x12x48xbf16, #tpu.memory_space<vmem>>, vector<1x12x48xbf16>
    %296 = vector.shape_cast %295 : vector<1x12x48xbf16> to vector<12x48xbf16>
    %cst_107 = arith.constant dense<0.000000e+00> : vector<2x48xf32>
    %297 = tpu.matmul %209, %296, %cst_107 {dimension_numbers = #tpu.dot_dimension_numbers<[1], [0], [0], [1], [0, 0, 1, 1], [], []>} : vector<2x12xbf16>, vector<12x48xbf16>, vector<2x48xf32> -> vector<2x48xf32>
    %298 = arith.addf %19, %297 : vector<2x48xf32>
    %c2_108 = arith.constant 2 : index
    %c0_109 = arith.constant 0 : index
    %c0_110 = arith.constant 0 : index
    %299 = vector.load %arg3[%c2_108, %c0_109, %c0_110] : memref<5x12x48xbf16, #tpu.memory_space<vmem>>, vector<1x12x48xbf16>
    %300 = vector.shape_cast %299 : vector<1x12x48xbf16> to vector<12x48xbf16>
    %cst_111 = arith.constant dense<0.000000e+00> : vector<2x48xf32>
    %301 = tpu.matmul %231, %300, %cst_111 {dimension_numbers = #tpu.dot_dimension_numbers<[1], [0], [0], [1], [0, 0, 1, 1], [], []>} : vector<2x12xbf16>, vector<12x48xbf16>, vector<2x48xf32> -> vector<2x48xf32>
    %302 = arith.addf %298, %301 : vector<2x48xf32>
    %303 = arith.mulf %8, %302 : vector<2x48xf32>
    %304 = math.tanh %303 : vector<2x48xf32>
    %305 = arith.mulf %8, %304 : vector<2x48xf32>
    %306 = arith.addf %305, %11 : vector<2x48xf32>
    %307 = vector.extract_strided_slice %306 {offsets = [0, 0], sizes = [2, 12], strides = [1, 1]} : vector<2x48xf32> to vector<2x12xf32>
    %308 = vector.extract_strided_slice %306 {offsets = [0, 12], sizes = [2, 12], strides = [1, 1]} : vector<2x48xf32> to vector<2x12xf32>
    %309 = vector.extract_strided_slice %306 {offsets = [0, 24], sizes = [2, 12], strides = [1, 1]} : vector<2x48xf32> to vector<2x12xf32>
    %310 = vector.extract_strided_slice %306 {offsets = [0, 36], sizes = [2, 12], strides = [1, 1]} : vector<2x48xf32> to vector<2x12xf32>
    %311 = arith.mulf %308, %228 : vector<2x12xf32>
    %312 = arith.mulf %307, %309 : vector<2x12xf32>
    %313 = arith.addf %311, %312 : vector<2x12xf32>
    %314 = math.tanh %313 : vector<2x12xf32>
    %315 = arith.mulf %310, %314 : vector<2x12xf32>
    %316 = arith.truncf %315 : vector<2x12xf32> to vector<2x12xbf16>
    %c2_112 = arith.constant 2 : index
    %c0_113 = arith.constant 0 : index
    %c0_114 = arith.constant 0 : index
    %317 = vector.load %arg2[%c2_112, %c0_113, %c0_114] : memref<4x12x48xbf16, #tpu.memory_space<vmem>>, vector<1x12x48xbf16>
    %318 = vector.shape_cast %317 : vector<1x12x48xbf16> to vector<12x48xbf16>
    %cst_115 = arith.constant dense<0.000000e+00> : vector<2x48xf32>
    %319 = tpu.matmul %231, %318, %cst_115 {dimension_numbers = #tpu.dot_dimension_numbers<[1], [0], [0], [1], [0, 0, 1, 1], [], []>} : vector<2x12xbf16>, vector<12x48xbf16>, vector<2x48xf32> -> vector<2x48xf32>
    %320 = arith.addf %23, %319 : vector<2x48xf32>
    %c3_116 = arith.constant 3 : index
    %c0_117 = arith.constant 0 : index
    %c0_118 = arith.constant 0 : index
    %321 = vector.load %arg3[%c3_116, %c0_117, %c0_118] : memref<5x12x48xbf16, #tpu.memory_space<vmem>>, vector<1x12x48xbf16>
    %322 = vector.shape_cast %321 : vector<1x12x48xbf16> to vector<12x48xbf16>
    %cst_119 = arith.constant dense<0.000000e+00> : vector<2x48xf32>
    %323 = tpu.matmul %253, %322, %cst_119 {dimension_numbers = #tpu.dot_dimension_numbers<[1], [0], [0], [1], [0, 0, 1, 1], [], []>} : vector<2x12xbf16>, vector<12x48xbf16>, vector<2x48xf32> -> vector<2x48xf32>
    %324 = arith.addf %320, %323 : vector<2x48xf32>
    %325 = arith.mulf %8, %324 : vector<2x48xf32>
    %326 = math.tanh %325 : vector<2x48xf32>
    %327 = arith.mulf %8, %326 : vector<2x48xf32>
    %328 = arith.addf %327, %11 : vector<2x48xf32>
    %329 = vector.extract_strided_slice %328 {offsets = [0, 0], sizes = [2, 12], strides = [1, 1]} : vector<2x48xf32> to vector<2x12xf32>
    %330 = vector.extract_strided_slice %328 {offsets = [0, 12], sizes = [2, 12], strides = [1, 1]} : vector<2x48xf32> to vector<2x12xf32>
    %331 = vector.extract_strided_slice %328 {offsets = [0, 24], sizes = [2, 12], strides = [1, 1]} : vector<2x48xf32> to vector<2x12xf32>
    %332 = vector.extract_strided_slice %328 {offsets = [0, 36], sizes = [2, 12], strides = [1, 1]} : vector<2x48xf32> to vector<2x12xf32>
    %333 = arith.mulf %330, %250 : vector<2x12xf32>
    %334 = arith.mulf %329, %331 : vector<2x12xf32>
    %335 = arith.addf %333, %334 : vector<2x12xf32>
    %336 = math.tanh %335 : vector<2x12xf32>
    %337 = arith.mulf %332, %336 : vector<2x12xf32>
    %338 = arith.truncf %337 : vector<2x12xf32> to vector<2x12xbf16>
    %c3_120 = arith.constant 3 : index
    %c0_121 = arith.constant 0 : index
    %c0_122 = arith.constant 0 : index
    %339 = vector.load %arg2[%c3_120, %c0_121, %c0_122] : memref<4x12x48xbf16, #tpu.memory_space<vmem>>, vector<1x12x48xbf16>
    %340 = vector.shape_cast %339 : vector<1x12x48xbf16> to vector<12x48xbf16>
    %cst_123 = arith.constant dense<0.000000e+00> : vector<2x48xf32>
    %341 = tpu.matmul %253, %340, %cst_123 {dimension_numbers = #tpu.dot_dimension_numbers<[1], [0], [0], [1], [0, 0, 1, 1], [], []>} : vector<2x12xbf16>, vector<12x48xbf16>, vector<2x48xf32> -> vector<2x48xf32>
    %342 = arith.addf %27, %341 : vector<2x48xf32>
    %c4_124 = arith.constant 4 : index
    %c0_125 = arith.constant 0 : index
    %c0_126 = arith.constant 0 : index
    %343 = vector.load %arg3[%c4_124, %c0_125, %c0_126] : memref<5x12x48xbf16, #tpu.memory_space<vmem>>, vector<1x12x48xbf16>
    %344 = vector.shape_cast %343 : vector<1x12x48xbf16> to vector<12x48xbf16>
    %cst_127 = arith.constant dense<0.000000e+00> : vector<2x48xf32>
    %345 = tpu.matmul %40, %344, %cst_127 {dimension_numbers = #tpu.dot_dimension_numbers<[1], [0], [0], [1], [0, 0, 1, 1], [], []>} : vector<2x12xbf16>, vector<12x48xbf16>, vector<2x48xf32> -> vector<2x48xf32>
    %346 = arith.addf %342, %345 : vector<2x48xf32>
    %347 = arith.mulf %8, %346 : vector<2x48xf32>
    %348 = math.tanh %347 : vector<2x48xf32>
    %349 = arith.mulf %8, %348 : vector<2x48xf32>
    %350 = arith.addf %349, %11 : vector<2x48xf32>
    %351 = vector.extract_strided_slice %350 {offsets = [0, 0], sizes = [2, 12], strides = [1, 1]} : vector<2x48xf32> to vector<2x12xf32>
    %352 = vector.extract_strided_slice %350 {offsets = [0, 12], sizes = [2, 12], strides = [1, 1]} : vector<2x48xf32> to vector<2x12xf32>
    %353 = vector.extract_strided_slice %350 {offsets = [0, 24], sizes = [2, 12], strides = [1, 1]} : vector<2x48xf32> to vector<2x12xf32>
    %354 = vector.extract_strided_slice %350 {offsets = [0, 36], sizes = [2, 12], strides = [1, 1]} : vector<2x48xf32> to vector<2x12xf32>
    %355 = arith.mulf %352, %45 : vector<2x12xf32>
    %356 = arith.mulf %351, %353 : vector<2x12xf32>
    %357 = arith.addf %355, %356 : vector<2x12xf32>
    %358 = math.tanh %357 : vector<2x12xf32>
    %359 = arith.mulf %354, %358 : vector<2x12xf32>
    %360 = arith.truncf %359 : vector<2x12xf32> to vector<2x12xbf16>
    %361 = vector.extract_strided_slice %35 {offsets = [10, 0], sizes = [2, 48], strides = [1, 1]} : vector<16x48xf32> to vector<2x48xf32>
    %c0_128 = arith.constant 0 : index
    %c0_129 = arith.constant 0 : index
    %c0_130 = arith.constant 0 : index
    %362 = vector.load %arg3[%c0_128, %c0_129, %c0_130] : memref<5x12x48xbf16, #tpu.memory_space<vmem>>, vector<1x12x48xbf16>
    %363 = vector.shape_cast %362 : vector<1x12x48xbf16> to vector<12x48xbf16>
    %cst_131 = arith.constant dense<0.000000e+00> : vector<2x48xf32>
    %364 = tpu.matmul %272, %363, %cst_131 {dimension_numbers = #tpu.dot_dimension_numbers<[1], [0], [0], [1], [0, 0, 1, 1], [], []>} : vector<2x12xbf16>, vector<12x48xbf16>, vector<2x48xf32> -> vector<2x48xf32>
    %365 = arith.addf %361, %364 : vector<2x48xf32>
    %366 = arith.mulf %8, %365 : vector<2x48xf32>
    %367 = math.tanh %366 : vector<2x48xf32>
    %368 = arith.mulf %8, %367 : vector<2x48xf32>
    %369 = arith.addf %368, %11 : vector<2x48xf32>
    %370 = vector.extract_strided_slice %369 {offsets = [0, 0], sizes = [2, 12], strides = [1, 1]} : vector<2x48xf32> to vector<2x12xf32>
    %371 = vector.extract_strided_slice %369 {offsets = [0, 12], sizes = [2, 12], strides = [1, 1]} : vector<2x48xf32> to vector<2x12xf32>
    %372 = vector.extract_strided_slice %369 {offsets = [0, 24], sizes = [2, 12], strides = [1, 1]} : vector<2x48xf32> to vector<2x12xf32>
    %373 = vector.extract_strided_slice %369 {offsets = [0, 36], sizes = [2, 12], strides = [1, 1]} : vector<2x48xf32> to vector<2x12xf32>
    %374 = arith.mulf %371, %269 : vector<2x12xf32>
    %375 = arith.mulf %370, %372 : vector<2x12xf32>
    %376 = arith.addf %374, %375 : vector<2x12xf32>
    %377 = math.tanh %376 : vector<2x12xf32>
    %378 = arith.mulf %373, %377 : vector<2x12xf32>
    %379 = arith.truncf %378 : vector<2x12xf32> to vector<2x12xbf16>
    %c0_132 = arith.constant 0 : index
    %c0_133 = arith.constant 0 : index
    %c0_134 = arith.constant 0 : index
    %380 = vector.load %arg2[%c0_132, %c0_133, %c0_134] : memref<4x12x48xbf16, #tpu.memory_space<vmem>>, vector<1x12x48xbf16>
    %381 = vector.shape_cast %380 : vector<1x12x48xbf16> to vector<12x48xbf16>
    %cst_135 = arith.constant dense<0.000000e+00> : vector<2x48xf32>
    %382 = tpu.matmul %272, %381, %cst_135 {dimension_numbers = #tpu.dot_dimension_numbers<[1], [0], [0], [1], [0, 0, 1, 1], [], []>} : vector<2x12xbf16>, vector<12x48xbf16>, vector<2x48xf32> -> vector<2x48xf32>
    %383 = arith.addf %15, %382 : vector<2x48xf32>
    %c1_136 = arith.constant 1 : index
    %c0_137 = arith.constant 0 : index
    %c0_138 = arith.constant 0 : index
    %384 = vector.load %arg3[%c1_136, %c0_137, %c0_138] : memref<5x12x48xbf16, #tpu.memory_space<vmem>>, vector<1x12x48xbf16>
    %385 = vector.shape_cast %384 : vector<1x12x48xbf16> to vector<12x48xbf16>
    %cst_139 = arith.constant dense<0.000000e+00> : vector<2x48xf32>
    %386 = tpu.matmul %294, %385, %cst_139 {dimension_numbers = #tpu.dot_dimension_numbers<[1], [0], [0], [1], [0, 0, 1, 1], [], []>} : vector<2x12xbf16>, vector<12x48xbf16>, vector<2x48xf32> -> vector<2x48xf32>
    %387 = arith.addf %383, %386 : vector<2x48xf32>
    %388 = arith.mulf %8, %387 : vector<2x48xf32>
    %389 = math.tanh %388 : vector<2x48xf32>
    %390 = arith.mulf %8, %389 : vector<2x48xf32>
    %391 = arith.addf %390, %11 : vector<2x48xf32>
    %392 = vector.extract_strided_slice %391 {offsets = [0, 0], sizes = [2, 12], strides = [1, 1]} : vector<2x48xf32> to vector<2x12xf32>
    %393 = vector.extract_strided_slice %391 {offsets = [0, 12], sizes = [2, 12], strides = [1, 1]} : vector<2x48xf32> to vector<2x12xf32>
    %394 = vector.extract_strided_slice %391 {offsets = [0, 24], sizes = [2, 12], strides = [1, 1]} : vector<2x48xf32> to vector<2x12xf32>
    %395 = vector.extract_strided_slice %391 {offsets = [0, 36], sizes = [2, 12], strides = [1, 1]} : vector<2x48xf32> to vector<2x12xf32>
    %396 = arith.mulf %393, %291 : vector<2x12xf32>
    %397 = arith.mulf %392, %394 : vector<2x12xf32>
    %398 = arith.addf %396, %397 : vector<2x12xf32>
    %399 = math.tanh %398 : vector<2x12xf32>
    %400 = arith.mulf %395, %399 : vector<2x12xf32>
    %401 = arith.truncf %400 : vector<2x12xf32> to vector<2x12xbf16>
    %c1_140 = arith.constant 1 : index
    %c0_141 = arith.constant 0 : index
    %c0_142 = arith.constant 0 : index
    %402 = vector.load %arg2[%c1_140, %c0_141, %c0_142] : memref<4x12x48xbf16, #tpu.memory_space<vmem>>, vector<1x12x48xbf16>
    %403 = vector.shape_cast %402 : vector<1x12x48xbf16> to vector<12x48xbf16>
    %cst_143 = arith.constant dense<0.000000e+00> : vector<2x48xf32>
    %404 = tpu.matmul %294, %403, %cst_143 {dimension_numbers = #tpu.dot_dimension_numbers<[1], [0], [0], [1], [0, 0, 1, 1], [], []>} : vector<2x12xbf16>, vector<12x48xbf16>, vector<2x48xf32> -> vector<2x48xf32>
    %405 = arith.addf %19, %404 : vector<2x48xf32>
    %c2_144 = arith.constant 2 : index
    %c0_145 = arith.constant 0 : index
    %c0_146 = arith.constant 0 : index
    %406 = vector.load %arg3[%c2_144, %c0_145, %c0_146] : memref<5x12x48xbf16, #tpu.memory_space<vmem>>, vector<1x12x48xbf16>
    %407 = vector.shape_cast %406 : vector<1x12x48xbf16> to vector<12x48xbf16>
    %cst_147 = arith.constant dense<0.000000e+00> : vector<2x48xf32>
    %408 = tpu.matmul %316, %407, %cst_147 {dimension_numbers = #tpu.dot_dimension_numbers<[1], [0], [0], [1], [0, 0, 1, 1], [], []>} : vector<2x12xbf16>, vector<12x48xbf16>, vector<2x48xf32> -> vector<2x48xf32>
    %409 = arith.addf %405, %408 : vector<2x48xf32>
    %410 = arith.mulf %8, %409 : vector<2x48xf32>
    %411 = math.tanh %410 : vector<2x48xf32>
    %412 = arith.mulf %8, %411 : vector<2x48xf32>
    %413 = arith.addf %412, %11 : vector<2x48xf32>
    %414 = vector.extract_strided_slice %413 {offsets = [0, 0], sizes = [2, 12], strides = [1, 1]} : vector<2x48xf32> to vector<2x12xf32>
    %415 = vector.extract_strided_slice %413 {offsets = [0, 12], sizes = [2, 12], strides = [1, 1]} : vector<2x48xf32> to vector<2x12xf32>
    %416 = vector.extract_strided_slice %413 {offsets = [0, 24], sizes = [2, 12], strides = [1, 1]} : vector<2x48xf32> to vector<2x12xf32>
    %417 = vector.extract_strided_slice %413 {offsets = [0, 36], sizes = [2, 12], strides = [1, 1]} : vector<2x48xf32> to vector<2x12xf32>
    %418 = arith.mulf %415, %313 : vector<2x12xf32>
    %419 = arith.mulf %414, %416 : vector<2x12xf32>
    %420 = arith.addf %418, %419 : vector<2x12xf32>
    %421 = math.tanh %420 : vector<2x12xf32>
    %422 = arith.mulf %417, %421 : vector<2x12xf32>
    %423 = arith.truncf %422 : vector<2x12xf32> to vector<2x12xbf16>
    %c2_148 = arith.constant 2 : index
    %c0_149 = arith.constant 0 : index
    %c0_150 = arith.constant 0 : index
    %424 = vector.load %arg2[%c2_148, %c0_149, %c0_150] : memref<4x12x48xbf16, #tpu.memory_space<vmem>>, vector<1x12x48xbf16>
    %425 = vector.shape_cast %424 : vector<1x12x48xbf16> to vector<12x48xbf16>
    %cst_151 = arith.constant dense<0.000000e+00> : vector<2x48xf32>
    %426 = tpu.matmul %316, %425, %cst_151 {dimension_numbers = #tpu.dot_dimension_numbers<[1], [0], [0], [1], [0, 0, 1, 1], [], []>} : vector<2x12xbf16>, vector<12x48xbf16>, vector<2x48xf32> -> vector<2x48xf32>
    %427 = arith.addf %23, %426 : vector<2x48xf32>
    %c3_152 = arith.constant 3 : index
    %c0_153 = arith.constant 0 : index
    %c0_154 = arith.constant 0 : index
    %428 = vector.load %arg3[%c3_152, %c0_153, %c0_154] : memref<5x12x48xbf16, #tpu.memory_space<vmem>>, vector<1x12x48xbf16>
    %429 = vector.shape_cast %428 : vector<1x12x48xbf16> to vector<12x48xbf16>
    %cst_155 = arith.constant dense<0.000000e+00> : vector<2x48xf32>
    %430 = tpu.matmul %338, %429, %cst_155 {dimension_numbers = #tpu.dot_dimension_numbers<[1], [0], [0], [1], [0, 0, 1, 1], [], []>} : vector<2x12xbf16>, vector<12x48xbf16>, vector<2x48xf32> -> vector<2x48xf32>
    %431 = arith.addf %427, %430 : vector<2x48xf32>
    %432 = arith.mulf %8, %431 : vector<2x48xf32>
    %433 = math.tanh %432 : vector<2x48xf32>
    %434 = arith.mulf %8, %433 : vector<2x48xf32>
    %435 = arith.addf %434, %11 : vector<2x48xf32>
    %436 = vector.extract_strided_slice %435 {offsets = [0, 0], sizes = [2, 12], strides = [1, 1]} : vector<2x48xf32> to vector<2x12xf32>
    %437 = vector.extract_strided_slice %435 {offsets = [0, 12], sizes = [2, 12], strides = [1, 1]} : vector<2x48xf32> to vector<2x12xf32>
    %438 = vector.extract_strided_slice %435 {offsets = [0, 24], sizes = [2, 12], strides = [1, 1]} : vector<2x48xf32> to vector<2x12xf32>
    %439 = vector.extract_strided_slice %435 {offsets = [0, 36], sizes = [2, 12], strides = [1, 1]} : vector<2x48xf32> to vector<2x12xf32>
    %440 = arith.mulf %437, %335 : vector<2x12xf32>
    %441 = arith.mulf %436, %438 : vector<2x12xf32>
    %442 = arith.addf %440, %441 : vector<2x12xf32>
    %443 = math.tanh %442 : vector<2x12xf32>
    %444 = arith.mulf %439, %443 : vector<2x12xf32>
    %445 = arith.truncf %444 : vector<2x12xf32> to vector<2x12xbf16>
    %c3_156 = arith.constant 3 : index
    %c0_157 = arith.constant 0 : index
    %c0_158 = arith.constant 0 : index
    %446 = vector.load %arg2[%c3_156, %c0_157, %c0_158] : memref<4x12x48xbf16, #tpu.memory_space<vmem>>, vector<1x12x48xbf16>
    %447 = vector.shape_cast %446 : vector<1x12x48xbf16> to vector<12x48xbf16>
    %cst_159 = arith.constant dense<0.000000e+00> : vector<2x48xf32>
    %448 = tpu.matmul %338, %447, %cst_159 {dimension_numbers = #tpu.dot_dimension_numbers<[1], [0], [0], [1], [0, 0, 1, 1], [], []>} : vector<2x12xbf16>, vector<12x48xbf16>, vector<2x48xf32> -> vector<2x48xf32>
    %449 = arith.addf %27, %448 : vector<2x48xf32>
    %c4_160 = arith.constant 4 : index
    %c0_161 = arith.constant 0 : index
    %c0_162 = arith.constant 0 : index
    %450 = vector.load %arg3[%c4_160, %c0_161, %c0_162] : memref<5x12x48xbf16, #tpu.memory_space<vmem>>, vector<1x12x48xbf16>
    %451 = vector.shape_cast %450 : vector<1x12x48xbf16> to vector<12x48xbf16>
    %cst_163 = arith.constant dense<0.000000e+00> : vector<2x48xf32>
    %452 = tpu.matmul %360, %451, %cst_163 {dimension_numbers = #tpu.dot_dimension_numbers<[1], [0], [0], [1], [0, 0, 1, 1], [], []>} : vector<2x12xbf16>, vector<12x48xbf16>, vector<2x48xf32> -> vector<2x48xf32>
    %453 = arith.addf %449, %452 : vector<2x48xf32>
    %454 = arith.mulf %8, %453 : vector<2x48xf32>
    %455 = math.tanh %454 : vector<2x48xf32>
    %456 = arith.mulf %8, %455 : vector<2x48xf32>
    %457 = arith.addf %456, %11 : vector<2x48xf32>
    %458 = vector.extract_strided_slice %457 {offsets = [0, 0], sizes = [2, 12], strides = [1, 1]} : vector<2x48xf32> to vector<2x12xf32>
    %459 = vector.extract_strided_slice %457 {offsets = [0, 12], sizes = [2, 12], strides = [1, 1]} : vector<2x48xf32> to vector<2x12xf32>
    %460 = vector.extract_strided_slice %457 {offsets = [0, 24], sizes = [2, 12], strides = [1, 1]} : vector<2x48xf32> to vector<2x12xf32>
    %461 = vector.extract_strided_slice %457 {offsets = [0, 36], sizes = [2, 12], strides = [1, 1]} : vector<2x48xf32> to vector<2x12xf32>
    %462 = arith.mulf %459, %357 : vector<2x12xf32>
    %463 = arith.mulf %458, %460 : vector<2x12xf32>
    %464 = arith.addf %462, %463 : vector<2x12xf32>
    %465 = math.tanh %464 : vector<2x12xf32>
    %466 = arith.mulf %461, %465 : vector<2x12xf32>
    %467 = arith.truncf %466 : vector<2x12xf32> to vector<2x12xbf16>
    %468 = vector.extract_strided_slice %35 {offsets = [12, 0], sizes = [2, 48], strides = [1, 1]} : vector<16x48xf32> to vector<2x48xf32>
    %c0_164 = arith.constant 0 : index
    %c0_165 = arith.constant 0 : index
    %c0_166 = arith.constant 0 : index
    %469 = vector.load %arg3[%c0_164, %c0_165, %c0_166] : memref<5x12x48xbf16, #tpu.memory_space<vmem>>, vector<1x12x48xbf16>
    %470 = vector.shape_cast %469 : vector<1x12x48xbf16> to vector<12x48xbf16>
    %cst_167 = arith.constant dense<0.000000e+00> : vector<2x48xf32>
    %471 = tpu.matmul %379, %470, %cst_167 {dimension_numbers = #tpu.dot_dimension_numbers<[1], [0], [0], [1], [0, 0, 1, 1], [], []>} : vector<2x12xbf16>, vector<12x48xbf16>, vector<2x48xf32> -> vector<2x48xf32>
    %472 = arith.addf %468, %471 : vector<2x48xf32>
    %473 = arith.mulf %8, %472 : vector<2x48xf32>
    %474 = math.tanh %473 : vector<2x48xf32>
    %475 = arith.mulf %8, %474 : vector<2x48xf32>
    %476 = arith.addf %475, %11 : vector<2x48xf32>
    %477 = vector.extract_strided_slice %476 {offsets = [0, 0], sizes = [2, 12], strides = [1, 1]} : vector<2x48xf32> to vector<2x12xf32>
    %478 = vector.extract_strided_slice %476 {offsets = [0, 12], sizes = [2, 12], strides = [1, 1]} : vector<2x48xf32> to vector<2x12xf32>
    %479 = vector.extract_strided_slice %476 {offsets = [0, 24], sizes = [2, 12], strides = [1, 1]} : vector<2x48xf32> to vector<2x12xf32>
    %480 = vector.extract_strided_slice %476 {offsets = [0, 36], sizes = [2, 12], strides = [1, 1]} : vector<2x48xf32> to vector<2x12xf32>
    %481 = arith.mulf %478, %376 : vector<2x12xf32>
    %482 = arith.mulf %477, %479 : vector<2x12xf32>
    %483 = arith.addf %481, %482 : vector<2x12xf32>
    %484 = math.tanh %483 : vector<2x12xf32>
    %485 = arith.mulf %480, %484 : vector<2x12xf32>
    %486 = arith.truncf %485 : vector<2x12xf32> to vector<2x12xbf16>
    %c0_168 = arith.constant 0 : index
    %c0_169 = arith.constant 0 : index
    %c0_170 = arith.constant 0 : index
    %487 = vector.load %arg2[%c0_168, %c0_169, %c0_170] : memref<4x12x48xbf16, #tpu.memory_space<vmem>>, vector<1x12x48xbf16>
    %488 = vector.shape_cast %487 : vector<1x12x48xbf16> to vector<12x48xbf16>
    %cst_171 = arith.constant dense<0.000000e+00> : vector<2x48xf32>
    %489 = tpu.matmul %379, %488, %cst_171 {dimension_numbers = #tpu.dot_dimension_numbers<[1], [0], [0], [1], [0, 0, 1, 1], [], []>} : vector<2x12xbf16>, vector<12x48xbf16>, vector<2x48xf32> -> vector<2x48xf32>
    %490 = arith.addf %15, %489 : vector<2x48xf32>
    %c1_172 = arith.constant 1 : index
    %c0_173 = arith.constant 0 : index
    %c0_174 = arith.constant 0 : index
    %491 = vector.load %arg3[%c1_172, %c0_173, %c0_174] : memref<5x12x48xbf16, #tpu.memory_space<vmem>>, vector<1x12x48xbf16>
    %492 = vector.shape_cast %491 : vector<1x12x48xbf16> to vector<12x48xbf16>
    %cst_175 = arith.constant dense<0.000000e+00> : vector<2x48xf32>
    %493 = tpu.matmul %401, %492, %cst_175 {dimension_numbers = #tpu.dot_dimension_numbers<[1], [0], [0], [1], [0, 0, 1, 1], [], []>} : vector<2x12xbf16>, vector<12x48xbf16>, vector<2x48xf32> -> vector<2x48xf32>
    %494 = arith.addf %490, %493 : vector<2x48xf32>
    %495 = arith.mulf %8, %494 : vector<2x48xf32>
    %496 = math.tanh %495 : vector<2x48xf32>
    %497 = arith.mulf %8, %496 : vector<2x48xf32>
    %498 = arith.addf %497, %11 : vector<2x48xf32>
    %499 = vector.extract_strided_slice %498 {offsets = [0, 0], sizes = [2, 12], strides = [1, 1]} : vector<2x48xf32> to vector<2x12xf32>
    %500 = vector.extract_strided_slice %498 {offsets = [0, 12], sizes = [2, 12], strides = [1, 1]} : vector<2x48xf32> to vector<2x12xf32>
    %501 = vector.extract_strided_slice %498 {offsets = [0, 24], sizes = [2, 12], strides = [1, 1]} : vector<2x48xf32> to vector<2x12xf32>
    %502 = vector.extract_strided_slice %498 {offsets = [0, 36], sizes = [2, 12], strides = [1, 1]} : vector<2x48xf32> to vector<2x12xf32>
    %503 = arith.mulf %500, %398 : vector<2x12xf32>
    %504 = arith.mulf %499, %501 : vector<2x12xf32>
    %505 = arith.addf %503, %504 : vector<2x12xf32>
    %506 = math.tanh %505 : vector<2x12xf32>
    %507 = arith.mulf %502, %506 : vector<2x12xf32>
    %508 = arith.truncf %507 : vector<2x12xf32> to vector<2x12xbf16>
    %c1_176 = arith.constant 1 : index
    %c0_177 = arith.constant 0 : index
    %c0_178 = arith.constant 0 : index
    %509 = vector.load %arg2[%c1_176, %c0_177, %c0_178] : memref<4x12x48xbf16, #tpu.memory_space<vmem>>, vector<1x12x48xbf16>
    %510 = vector.shape_cast %509 : vector<1x12x48xbf16> to vector<12x48xbf16>
    %cst_179 = arith.constant dense<0.000000e+00> : vector<2x48xf32>
    %511 = tpu.matmul %401, %510, %cst_179 {dimension_numbers = #tpu.dot_dimension_numbers<[1], [0], [0], [1], [0, 0, 1, 1], [], []>} : vector<2x12xbf16>, vector<12x48xbf16>, vector<2x48xf32> -> vector<2x48xf32>
    %512 = arith.addf %19, %511 : vector<2x48xf32>
    %c2_180 = arith.constant 2 : index
    %c0_181 = arith.constant 0 : index
    %c0_182 = arith.constant 0 : index
    %513 = vector.load %arg3[%c2_180, %c0_181, %c0_182] : memref<5x12x48xbf16, #tpu.memory_space<vmem>>, vector<1x12x48xbf16>
    %514 = vector.shape_cast %513 : vector<1x12x48xbf16> to vector<12x48xbf16>
    %cst_183 = arith.constant dense<0.000000e+00> : vector<2x48xf32>
    %515 = tpu.matmul %423, %514, %cst_183 {dimension_numbers = #tpu.dot_dimension_numbers<[1], [0], [0], [1], [0, 0, 1, 1], [], []>} : vector<2x12xbf16>, vector<12x48xbf16>, vector<2x48xf32> -> vector<2x48xf32>
    %516 = arith.addf %512, %515 : vector<2x48xf32>
    %517 = arith.mulf %8, %516 : vector<2x48xf32>
    %518 = math.tanh %517 : vector<2x48xf32>
    %519 = arith.mulf %8, %518 : vector<2x48xf32>
    %520 = arith.addf %519, %11 : vector<2x48xf32>
    %521 = vector.extract_strided_slice %520 {offsets = [0, 0], sizes = [2, 12], strides = [1, 1]} : vector<2x48xf32> to vector<2x12xf32>
    %522 = vector.extract_strided_slice %520 {offsets = [0, 12], sizes = [2, 12], strides = [1, 1]} : vector<2x48xf32> to vector<2x12xf32>
    %523 = vector.extract_strided_slice %520 {offsets = [0, 24], sizes = [2, 12], strides = [1, 1]} : vector<2x48xf32> to vector<2x12xf32>
    %524 = vector.extract_strided_slice %520 {offsets = [0, 36], sizes = [2, 12], strides = [1, 1]} : vector<2x48xf32> to vector<2x12xf32>
    %525 = arith.mulf %522, %420 : vector<2x12xf32>
    %526 = arith.mulf %521, %523 : vector<2x12xf32>
    %527 = arith.addf %525, %526 : vector<2x12xf32>
    %528 = math.tanh %527 : vector<2x12xf32>
    %529 = arith.mulf %524, %528 : vector<2x12xf32>
    %530 = arith.truncf %529 : vector<2x12xf32> to vector<2x12xbf16>
    %c2_184 = arith.constant 2 : index
    %c0_185 = arith.constant 0 : index
    %c0_186 = arith.constant 0 : index
    %531 = vector.load %arg2[%c2_184, %c0_185, %c0_186] : memref<4x12x48xbf16, #tpu.memory_space<vmem>>, vector<1x12x48xbf16>
    %532 = vector.shape_cast %531 : vector<1x12x48xbf16> to vector<12x48xbf16>
    %cst_187 = arith.constant dense<0.000000e+00> : vector<2x48xf32>
    %533 = tpu.matmul %423, %532, %cst_187 {dimension_numbers = #tpu.dot_dimension_numbers<[1], [0], [0], [1], [0, 0, 1, 1], [], []>} : vector<2x12xbf16>, vector<12x48xbf16>, vector<2x48xf32> -> vector<2x48xf32>
    %534 = arith.addf %23, %533 : vector<2x48xf32>
    %c3_188 = arith.constant 3 : index
    %c0_189 = arith.constant 0 : index
    %c0_190 = arith.constant 0 : index
    %535 = vector.load %arg3[%c3_188, %c0_189, %c0_190] : memref<5x12x48xbf16, #tpu.memory_space<vmem>>, vector<1x12x48xbf16>
    %536 = vector.shape_cast %535 : vector<1x12x48xbf16> to vector<12x48xbf16>
    %cst_191 = arith.constant dense<0.000000e+00> : vector<2x48xf32>
    %537 = tpu.matmul %445, %536, %cst_191 {dimension_numbers = #tpu.dot_dimension_numbers<[1], [0], [0], [1], [0, 0, 1, 1], [], []>} : vector<2x12xbf16>, vector<12x48xbf16>, vector<2x48xf32> -> vector<2x48xf32>
    %538 = arith.addf %534, %537 : vector<2x48xf32>
    %539 = arith.mulf %8, %538 : vector<2x48xf32>
    %540 = math.tanh %539 : vector<2x48xf32>
    %541 = arith.mulf %8, %540 : vector<2x48xf32>
    %542 = arith.addf %541, %11 : vector<2x48xf32>
    %543 = vector.extract_strided_slice %542 {offsets = [0, 0], sizes = [2, 12], strides = [1, 1]} : vector<2x48xf32> to vector<2x12xf32>
    %544 = vector.extract_strided_slice %542 {offsets = [0, 12], sizes = [2, 12], strides = [1, 1]} : vector<2x48xf32> to vector<2x12xf32>
    %545 = vector.extract_strided_slice %542 {offsets = [0, 24], sizes = [2, 12], strides = [1, 1]} : vector<2x48xf32> to vector<2x12xf32>
    %546 = vector.extract_strided_slice %542 {offsets = [0, 36], sizes = [2, 12], strides = [1, 1]} : vector<2x48xf32> to vector<2x12xf32>
    %547 = arith.mulf %544, %442 : vector<2x12xf32>
    %548 = arith.mulf %543, %545 : vector<2x12xf32>
    %549 = arith.addf %547, %548 : vector<2x12xf32>
    %550 = math.tanh %549 : vector<2x12xf32>
    %551 = arith.mulf %546, %550 : vector<2x12xf32>
    %552 = arith.truncf %551 : vector<2x12xf32> to vector<2x12xbf16>
    %c3_192 = arith.constant 3 : index
    %c0_193 = arith.constant 0 : index
    %c0_194 = arith.constant 0 : index
    %553 = vector.load %arg2[%c3_192, %c0_193, %c0_194] : memref<4x12x48xbf16, #tpu.memory_space<vmem>>, vector<1x12x48xbf16>
    %554 = vector.shape_cast %553 : vector<1x12x48xbf16> to vector<12x48xbf16>
    %cst_195 = arith.constant dense<0.000000e+00> : vector<2x48xf32>
    %555 = tpu.matmul %445, %554, %cst_195 {dimension_numbers = #tpu.dot_dimension_numbers<[1], [0], [0], [1], [0, 0, 1, 1], [], []>} : vector<2x12xbf16>, vector<12x48xbf16>, vector<2x48xf32> -> vector<2x48xf32>
    %556 = arith.addf %27, %555 : vector<2x48xf32>
    %c4_196 = arith.constant 4 : index
    %c0_197 = arith.constant 0 : index
    %c0_198 = arith.constant 0 : index
    %557 = vector.load %arg3[%c4_196, %c0_197, %c0_198] : memref<5x12x48xbf16, #tpu.memory_space<vmem>>, vector<1x12x48xbf16>
    %558 = vector.shape_cast %557 : vector<1x12x48xbf16> to vector<12x48xbf16>
    %cst_199 = arith.constant dense<0.000000e+00> : vector<2x48xf32>
    %559 = tpu.matmul %467, %558, %cst_199 {dimension_numbers = #tpu.dot_dimension_numbers<[1], [0], [0], [1], [0, 0, 1, 1], [], []>} : vector<2x12xbf16>, vector<12x48xbf16>, vector<2x48xf32> -> vector<2x48xf32>
    %560 = arith.addf %556, %559 : vector<2x48xf32>
    %561 = arith.mulf %8, %560 : vector<2x48xf32>
    %562 = math.tanh %561 : vector<2x48xf32>
    %563 = arith.mulf %8, %562 : vector<2x48xf32>
    %564 = arith.addf %563, %11 : vector<2x48xf32>
    %565 = vector.extract_strided_slice %564 {offsets = [0, 0], sizes = [2, 12], strides = [1, 1]} : vector<2x48xf32> to vector<2x12xf32>
    %566 = vector.extract_strided_slice %564 {offsets = [0, 12], sizes = [2, 12], strides = [1, 1]} : vector<2x48xf32> to vector<2x12xf32>
    %567 = vector.extract_strided_slice %564 {offsets = [0, 24], sizes = [2, 12], strides = [1, 1]} : vector<2x48xf32> to vector<2x12xf32>
    %568 = vector.extract_strided_slice %564 {offsets = [0, 36], sizes = [2, 12], strides = [1, 1]} : vector<2x48xf32> to vector<2x12xf32>
    %569 = arith.mulf %566, %464 : vector<2x12xf32>
    %570 = arith.mulf %565, %567 : vector<2x12xf32>
    %571 = arith.addf %569, %570 : vector<2x12xf32>
    %572 = math.tanh %571 : vector<2x12xf32>
    %573 = arith.mulf %568, %572 : vector<2x12xf32>
    %574 = arith.truncf %573 : vector<2x12xf32> to vector<2x12xbf16>
    %575 = vector.extract_strided_slice %35 {offsets = [14, 0], sizes = [2, 48], strides = [1, 1]} : vector<16x48xf32> to vector<2x48xf32>
    %c0_200 = arith.constant 0 : index
    %c0_201 = arith.constant 0 : index
    %c0_202 = arith.constant 0 : index
    %576 = vector.load %arg3[%c0_200, %c0_201, %c0_202] : memref<5x12x48xbf16, #tpu.memory_space<vmem>>, vector<1x12x48xbf16>
    %577 = vector.shape_cast %576 : vector<1x12x48xbf16> to vector<12x48xbf16>
    %cst_203 = arith.constant dense<0.000000e+00> : vector<2x48xf32>
    %578 = tpu.matmul %486, %577, %cst_203 {dimension_numbers = #tpu.dot_dimension_numbers<[1], [0], [0], [1], [0, 0, 1, 1], [], []>} : vector<2x12xbf16>, vector<12x48xbf16>, vector<2x48xf32> -> vector<2x48xf32>
    %579 = arith.addf %575, %578 : vector<2x48xf32>
    %580 = arith.mulf %8, %579 : vector<2x48xf32>
    %581 = math.tanh %580 : vector<2x48xf32>
    %582 = arith.mulf %8, %581 : vector<2x48xf32>
    %583 = arith.addf %582, %11 : vector<2x48xf32>
    %584 = vector.extract_strided_slice %583 {offsets = [0, 0], sizes = [2, 12], strides = [1, 1]} : vector<2x48xf32> to vector<2x12xf32>
    %585 = vector.extract_strided_slice %583 {offsets = [0, 12], sizes = [2, 12], strides = [1, 1]} : vector<2x48xf32> to vector<2x12xf32>
    %586 = vector.extract_strided_slice %583 {offsets = [0, 24], sizes = [2, 12], strides = [1, 1]} : vector<2x48xf32> to vector<2x12xf32>
    %587 = vector.extract_strided_slice %583 {offsets = [0, 36], sizes = [2, 12], strides = [1, 1]} : vector<2x48xf32> to vector<2x12xf32>
    %588 = arith.mulf %585, %483 : vector<2x12xf32>
    %589 = arith.mulf %584, %586 : vector<2x12xf32>
    %590 = arith.addf %588, %589 : vector<2x12xf32>
    %591 = math.tanh %590 : vector<2x12xf32>
    %592 = arith.mulf %587, %591 : vector<2x12xf32>
    %593 = arith.truncf %592 : vector<2x12xf32> to vector<2x12xbf16>
    %c0_204 = arith.constant 0 : index
    %c0_205 = arith.constant 0 : index
    %c0_206 = arith.constant 0 : index
    %594 = vector.load %arg2[%c0_204, %c0_205, %c0_206] : memref<4x12x48xbf16, #tpu.memory_space<vmem>>, vector<1x12x48xbf16>
    %595 = vector.shape_cast %594 : vector<1x12x48xbf16> to vector<12x48xbf16>
    %cst_207 = arith.constant dense<0.000000e+00> : vector<2x48xf32>
    %596 = tpu.matmul %486, %595, %cst_207 {dimension_numbers = #tpu.dot_dimension_numbers<[1], [0], [0], [1], [0, 0, 1, 1], [], []>} : vector<2x12xbf16>, vector<12x48xbf16>, vector<2x48xf32> -> vector<2x48xf32>
    %597 = arith.addf %15, %596 : vector<2x48xf32>
    %c1_208 = arith.constant 1 : index
    %c0_209 = arith.constant 0 : index
    %c0_210 = arith.constant 0 : index
    %598 = vector.load %arg3[%c1_208, %c0_209, %c0_210] : memref<5x12x48xbf16, #tpu.memory_space<vmem>>, vector<1x12x48xbf16>
    %599 = vector.shape_cast %598 : vector<1x12x48xbf16> to vector<12x48xbf16>
    %cst_211 = arith.constant dense<0.000000e+00> : vector<2x48xf32>
    %600 = tpu.matmul %508, %599, %cst_211 {dimension_numbers = #tpu.dot_dimension_numbers<[1], [0], [0], [1], [0, 0, 1, 1], [], []>} : vector<2x12xbf16>, vector<12x48xbf16>, vector<2x48xf32> -> vector<2x48xf32>
    %601 = arith.addf %597, %600 : vector<2x48xf32>
    %602 = arith.mulf %8, %601 : vector<2x48xf32>
    %603 = math.tanh %602 : vector<2x48xf32>
    %604 = arith.mulf %8, %603 : vector<2x48xf32>
    %605 = arith.addf %604, %11 : vector<2x48xf32>
    %606 = vector.extract_strided_slice %605 {offsets = [0, 0], sizes = [2, 12], strides = [1, 1]} : vector<2x48xf32> to vector<2x12xf32>
    %607 = vector.extract_strided_slice %605 {offsets = [0, 12], sizes = [2, 12], strides = [1, 1]} : vector<2x48xf32> to vector<2x12xf32>
    %608 = vector.extract_strided_slice %605 {offsets = [0, 24], sizes = [2, 12], strides = [1, 1]} : vector<2x48xf32> to vector<2x12xf32>
    %609 = vector.extract_strided_slice %605 {offsets = [0, 36], sizes = [2, 12], strides = [1, 1]} : vector<2x48xf32> to vector<2x12xf32>
    %610 = arith.mulf %607, %505 : vector<2x12xf32>
    %611 = arith.mulf %606, %608 : vector<2x12xf32>
    %612 = arith.addf %610, %611 : vector<2x12xf32>
    %613 = math.tanh %612 : vector<2x12xf32>
    %614 = arith.mulf %609, %613 : vector<2x12xf32>
    %615 = arith.truncf %614 : vector<2x12xf32> to vector<2x12xbf16>
    %c1_212 = arith.constant 1 : index
    %c0_213 = arith.constant 0 : index
    %c0_214 = arith.constant 0 : index
    %616 = vector.load %arg2[%c1_212, %c0_213, %c0_214] : memref<4x12x48xbf16, #tpu.memory_space<vmem>>, vector<1x12x48xbf16>
    %617 = vector.shape_cast %616 : vector<1x12x48xbf16> to vector<12x48xbf16>
    %cst_215 = arith.constant dense<0.000000e+00> : vector<2x48xf32>
    %618 = tpu.matmul %508, %617, %cst_215 {dimension_numbers = #tpu.dot_dimension_numbers<[1], [0], [0], [1], [0, 0, 1, 1], [], []>} : vector<2x12xbf16>, vector<12x48xbf16>, vector<2x48xf32> -> vector<2x48xf32>
    %619 = arith.addf %19, %618 : vector<2x48xf32>
    %c2_216 = arith.constant 2 : index
    %c0_217 = arith.constant 0 : index
    %c0_218 = arith.constant 0 : index
    %620 = vector.load %arg3[%c2_216, %c0_217, %c0_218] : memref<5x12x48xbf16, #tpu.memory_space<vmem>>, vector<1x12x48xbf16>
    %621 = vector.shape_cast %620 : vector<1x12x48xbf16> to vector<12x48xbf16>
    %cst_219 = arith.constant dense<0.000000e+00> : vector<2x48xf32>
    %622 = tpu.matmul %530, %621, %cst_219 {dimension_numbers = #tpu.dot_dimension_numbers<[1], [0], [0], [1], [0, 0, 1, 1], [], []>} : vector<2x12xbf16>, vector<12x48xbf16>, vector<2x48xf32> -> vector<2x48xf32>
    %623 = arith.addf %619, %622 : vector<2x48xf32>
    %624 = arith.mulf %8, %623 : vector<2x48xf32>
    %625 = math.tanh %624 : vector<2x48xf32>
    %626 = arith.mulf %8, %625 : vector<2x48xf32>
    %627 = arith.addf %626, %11 : vector<2x48xf32>
    %628 = vector.extract_strided_slice %627 {offsets = [0, 0], sizes = [2, 12], strides = [1, 1]} : vector<2x48xf32> to vector<2x12xf32>
    %629 = vector.extract_strided_slice %627 {offsets = [0, 12], sizes = [2, 12], strides = [1, 1]} : vector<2x48xf32> to vector<2x12xf32>
    %630 = vector.extract_strided_slice %627 {offsets = [0, 24], sizes = [2, 12], strides = [1, 1]} : vector<2x48xf32> to vector<2x12xf32>
    %631 = vector.extract_strided_slice %627 {offsets = [0, 36], sizes = [2, 12], strides = [1, 1]} : vector<2x48xf32> to vector<2x12xf32>
    %632 = arith.mulf %629, %527 : vector<2x12xf32>
    %633 = arith.mulf %628, %630 : vector<2x12xf32>
    %634 = arith.addf %632, %633 : vector<2x12xf32>
    %635 = math.tanh %634 : vector<2x12xf32>
    %636 = arith.mulf %631, %635 : vector<2x12xf32>
    %637 = arith.truncf %636 : vector<2x12xf32> to vector<2x12xbf16>
    %c2_220 = arith.constant 2 : index
    %c0_221 = arith.constant 0 : index
    %c0_222 = arith.constant 0 : index
    %638 = vector.load %arg2[%c2_220, %c0_221, %c0_222] : memref<4x12x48xbf16, #tpu.memory_space<vmem>>, vector<1x12x48xbf16>
    %639 = vector.shape_cast %638 : vector<1x12x48xbf16> to vector<12x48xbf16>
    %cst_223 = arith.constant dense<0.000000e+00> : vector<2x48xf32>
    %640 = tpu.matmul %530, %639, %cst_223 {dimension_numbers = #tpu.dot_dimension_numbers<[1], [0], [0], [1], [0, 0, 1, 1], [], []>} : vector<2x12xbf16>, vector<12x48xbf16>, vector<2x48xf32> -> vector<2x48xf32>
    %641 = arith.addf %23, %640 : vector<2x48xf32>
    %c3_224 = arith.constant 3 : index
    %c0_225 = arith.constant 0 : index
    %c0_226 = arith.constant 0 : index
    %642 = vector.load %arg3[%c3_224, %c0_225, %c0_226] : memref<5x12x48xbf16, #tpu.memory_space<vmem>>, vector<1x12x48xbf16>
    %643 = vector.shape_cast %642 : vector<1x12x48xbf16> to vector<12x48xbf16>
    %cst_227 = arith.constant dense<0.000000e+00> : vector<2x48xf32>
    %644 = tpu.matmul %552, %643, %cst_227 {dimension_numbers = #tpu.dot_dimension_numbers<[1], [0], [0], [1], [0, 0, 1, 1], [], []>} : vector<2x12xbf16>, vector<12x48xbf16>, vector<2x48xf32> -> vector<2x48xf32>
    %645 = arith.addf %641, %644 : vector<2x48xf32>
    %646 = arith.mulf %8, %645 : vector<2x48xf32>
    %647 = math.tanh %646 : vector<2x48xf32>
    %648 = arith.mulf %8, %647 : vector<2x48xf32>
    %649 = arith.addf %648, %11 : vector<2x48xf32>
    %650 = vector.extract_strided_slice %649 {offsets = [0, 0], sizes = [2, 12], strides = [1, 1]} : vector<2x48xf32> to vector<2x12xf32>
    %651 = vector.extract_strided_slice %649 {offsets = [0, 12], sizes = [2, 12], strides = [1, 1]} : vector<2x48xf32> to vector<2x12xf32>
    %652 = vector.extract_strided_slice %649 {offsets = [0, 24], sizes = [2, 12], strides = [1, 1]} : vector<2x48xf32> to vector<2x12xf32>
    %653 = vector.extract_strided_slice %649 {offsets = [0, 36], sizes = [2, 12], strides = [1, 1]} : vector<2x48xf32> to vector<2x12xf32>
    %654 = arith.mulf %651, %549 : vector<2x12xf32>
    %655 = arith.mulf %650, %652 : vector<2x12xf32>
    %656 = arith.addf %654, %655 : vector<2x12xf32>
    %657 = math.tanh %656 : vector<2x12xf32>
    %658 = arith.mulf %653, %657 : vector<2x12xf32>
    %659 = arith.truncf %658 : vector<2x12xf32> to vector<2x12xbf16>
    %c3_228 = arith.constant 3 : index
    %c0_229 = arith.constant 0 : index
    %c0_230 = arith.constant 0 : index
    %660 = vector.load %arg2[%c3_228, %c0_229, %c0_230] : memref<4x12x48xbf16, #tpu.memory_space<vmem>>, vector<1x12x48xbf16>
    %661 = vector.shape_cast %660 : vector<1x12x48xbf16> to vector<12x48xbf16>
    %cst_231 = arith.constant dense<0.000000e+00> : vector<2x48xf32>
    %662 = tpu.matmul %552, %661, %cst_231 {dimension_numbers = #tpu.dot_dimension_numbers<[1], [0], [0], [1], [0, 0, 1, 1], [], []>} : vector<2x12xbf16>, vector<12x48xbf16>, vector<2x48xf32> -> vector<2x48xf32>
    %663 = arith.addf %27, %662 : vector<2x48xf32>
    %c4_232 = arith.constant 4 : index
    %c0_233 = arith.constant 0 : index
    %c0_234 = arith.constant 0 : index
    %664 = vector.load %arg3[%c4_232, %c0_233, %c0_234] : memref<5x12x48xbf16, #tpu.memory_space<vmem>>, vector<1x12x48xbf16>
    %665 = vector.shape_cast %664 : vector<1x12x48xbf16> to vector<12x48xbf16>
    %cst_235 = arith.constant dense<0.000000e+00> : vector<2x48xf32>
    %666 = tpu.matmul %574, %665, %cst_235 {dimension_numbers = #tpu.dot_dimension_numbers<[1], [0], [0], [1], [0, 0, 1, 1], [], []>} : vector<2x12xbf16>, vector<12x48xbf16>, vector<2x48xf32> -> vector<2x48xf32>
    %667 = arith.addf %663, %666 : vector<2x48xf32>
    %668 = arith.mulf %8, %667 : vector<2x48xf32>
    %669 = math.tanh %668 : vector<2x48xf32>
    %670 = arith.mulf %8, %669 : vector<2x48xf32>
    %671 = arith.addf %670, %11 : vector<2x48xf32>
    %672 = vector.extract_strided_slice %671 {offsets = [0, 0], sizes = [2, 12], strides = [1, 1]} : vector<2x48xf32> to vector<2x12xf32>
    %673 = vector.extract_strided_slice %671 {offsets = [0, 12], sizes = [2, 12], strides = [1, 1]} : vector<2x48xf32> to vector<2x12xf32>
    %674 = vector.extract_strided_slice %671 {offsets = [0, 24], sizes = [2, 12], strides = [1, 1]} : vector<2x48xf32> to vector<2x12xf32>
    %675 = vector.extract_strided_slice %671 {offsets = [0, 36], sizes = [2, 12], strides = [1, 1]} : vector<2x48xf32> to vector<2x12xf32>
    %676 = arith.mulf %673, %571 : vector<2x12xf32>
    %677 = arith.mulf %672, %674 : vector<2x12xf32>
    %678 = arith.addf %676, %677 : vector<2x12xf32>
    %679 = math.tanh %678 : vector<2x12xf32>
    %680 = arith.mulf %675, %679 : vector<2x12xf32>
    %681 = arith.truncf %680 : vector<2x12xf32> to vector<2x12xbf16>
    %c0_236 = arith.constant 0 : index
    %c0_237 = arith.constant 0 : index
    %c0_238 = arith.constant 0 : index
    %682 = vector.load %arg2[%c0_236, %c0_237, %c0_238] : memref<4x12x48xbf16, #tpu.memory_space<vmem>>, vector<1x12x48xbf16>
    %683 = vector.shape_cast %682 : vector<1x12x48xbf16> to vector<12x48xbf16>
    %cst_239 = arith.constant dense<0.000000e+00> : vector<2x48xf32>
    %684 = tpu.matmul %593, %683, %cst_239 {dimension_numbers = #tpu.dot_dimension_numbers<[1], [0], [0], [1], [0, 0, 1, 1], [], []>} : vector<2x12xbf16>, vector<12x48xbf16>, vector<2x48xf32> -> vector<2x48xf32>
    %685 = arith.addf %15, %684 : vector<2x48xf32>
    %c1_240 = arith.constant 1 : index
    %c0_241 = arith.constant 0 : index
    %c0_242 = arith.constant 0 : index
    %686 = vector.load %arg3[%c1_240, %c0_241, %c0_242] : memref<5x12x48xbf16, #tpu.memory_space<vmem>>, vector<1x12x48xbf16>
    %687 = vector.shape_cast %686 : vector<1x12x48xbf16> to vector<12x48xbf16>
    %cst_243 = arith.constant dense<0.000000e+00> : vector<2x48xf32>
    %688 = tpu.matmul %615, %687, %cst_243 {dimension_numbers = #tpu.dot_dimension_numbers<[1], [0], [0], [1], [0, 0, 1, 1], [], []>} : vector<2x12xbf16>, vector<12x48xbf16>, vector<2x48xf32> -> vector<2x48xf32>
    %689 = arith.addf %685, %688 : vector<2x48xf32>
    %690 = arith.mulf %8, %689 : vector<2x48xf32>
    %691 = math.tanh %690 : vector<2x48xf32>
    %692 = arith.mulf %8, %691 : vector<2x48xf32>
    %693 = arith.addf %692, %11 : vector<2x48xf32>
    %694 = vector.extract_strided_slice %693 {offsets = [0, 0], sizes = [2, 12], strides = [1, 1]} : vector<2x48xf32> to vector<2x12xf32>
    %695 = vector.extract_strided_slice %693 {offsets = [0, 12], sizes = [2, 12], strides = [1, 1]} : vector<2x48xf32> to vector<2x12xf32>
    %696 = vector.extract_strided_slice %693 {offsets = [0, 24], sizes = [2, 12], strides = [1, 1]} : vector<2x48xf32> to vector<2x12xf32>
    %697 = vector.extract_strided_slice %693 {offsets = [0, 36], sizes = [2, 12], strides = [1, 1]} : vector<2x48xf32> to vector<2x12xf32>
    %698 = arith.mulf %695, %612 : vector<2x12xf32>
    %699 = arith.mulf %694, %696 : vector<2x12xf32>
    %700 = arith.addf %698, %699 : vector<2x12xf32>
    %701 = math.tanh %700 : vector<2x12xf32>
    %702 = arith.mulf %697, %701 : vector<2x12xf32>
    %703 = arith.truncf %702 : vector<2x12xf32> to vector<2x12xbf16>
    %c1_244 = arith.constant 1 : index
    %c0_245 = arith.constant 0 : index
    %c0_246 = arith.constant 0 : index
    %704 = vector.load %arg2[%c1_244, %c0_245, %c0_246] : memref<4x12x48xbf16, #tpu.memory_space<vmem>>, vector<1x12x48xbf16>
    %705 = vector.shape_cast %704 : vector<1x12x48xbf16> to vector<12x48xbf16>
    %cst_247 = arith.constant dense<0.000000e+00> : vector<2x48xf32>
    %706 = tpu.matmul %615, %705, %cst_247 {dimension_numbers = #tpu.dot_dimension_numbers<[1], [0], [0], [1], [0, 0, 1, 1], [], []>} : vector<2x12xbf16>, vector<12x48xbf16>, vector<2x48xf32> -> vector<2x48xf32>
    %707 = arith.addf %19, %706 : vector<2x48xf32>
    %c2_248 = arith.constant 2 : index
    %c0_249 = arith.constant 0 : index
    %c0_250 = arith.constant 0 : index
    %708 = vector.load %arg3[%c2_248, %c0_249, %c0_250] : memref<5x12x48xbf16, #tpu.memory_space<vmem>>, vector<1x12x48xbf16>
    %709 = vector.shape_cast %708 : vector<1x12x48xbf16> to vector<12x48xbf16>
    %cst_251 = arith.constant dense<0.000000e+00> : vector<2x48xf32>
    %710 = tpu.matmul %637, %709, %cst_251 {dimension_numbers = #tpu.dot_dimension_numbers<[1], [0], [0], [1], [0, 0, 1, 1], [], []>} : vector<2x12xbf16>, vector<12x48xbf16>, vector<2x48xf32> -> vector<2x48xf32>
    %711 = arith.addf %707, %710 : vector<2x48xf32>
    %712 = arith.mulf %8, %711 : vector<2x48xf32>
    %713 = math.tanh %712 : vector<2x48xf32>
    %714 = arith.mulf %8, %713 : vector<2x48xf32>
    %715 = arith.addf %714, %11 : vector<2x48xf32>
    %716 = vector.extract_strided_slice %715 {offsets = [0, 0], sizes = [2, 12], strides = [1, 1]} : vector<2x48xf32> to vector<2x12xf32>
    %717 = vector.extract_strided_slice %715 {offsets = [0, 12], sizes = [2, 12], strides = [1, 1]} : vector<2x48xf32> to vector<2x12xf32>
    %718 = vector.extract_strided_slice %715 {offsets = [0, 24], sizes = [2, 12], strides = [1, 1]} : vector<2x48xf32> to vector<2x12xf32>
    %719 = vector.extract_strided_slice %715 {offsets = [0, 36], sizes = [2, 12], strides = [1, 1]} : vector<2x48xf32> to vector<2x12xf32>
    %720 = arith.mulf %717, %634 : vector<2x12xf32>
    %721 = arith.mulf %716, %718 : vector<2x12xf32>
    %722 = arith.addf %720, %721 : vector<2x12xf32>
    %723 = math.tanh %722 : vector<2x12xf32>
    %724 = arith.mulf %719, %723 : vector<2x12xf32>
    %725 = arith.truncf %724 : vector<2x12xf32> to vector<2x12xbf16>
    %c2_252 = arith.constant 2 : index
    %c0_253 = arith.constant 0 : index
    %c0_254 = arith.constant 0 : index
    %726 = vector.load %arg2[%c2_252, %c0_253, %c0_254] : memref<4x12x48xbf16, #tpu.memory_space<vmem>>, vector<1x12x48xbf16>
    %727 = vector.shape_cast %726 : vector<1x12x48xbf16> to vector<12x48xbf16>
    %cst_255 = arith.constant dense<0.000000e+00> : vector<2x48xf32>
    %728 = tpu.matmul %637, %727, %cst_255 {dimension_numbers = #tpu.dot_dimension_numbers<[1], [0], [0], [1], [0, 0, 1, 1], [], []>} : vector<2x12xbf16>, vector<12x48xbf16>, vector<2x48xf32> -> vector<2x48xf32>
    %729 = arith.addf %23, %728 : vector<2x48xf32>
    %c3_256 = arith.constant 3 : index
    %c0_257 = arith.constant 0 : index
    %c0_258 = arith.constant 0 : index
    %730 = vector.load %arg3[%c3_256, %c0_257, %c0_258] : memref<5x12x48xbf16, #tpu.memory_space<vmem>>, vector<1x12x48xbf16>
    %731 = vector.shape_cast %730 : vector<1x12x48xbf16> to vector<12x48xbf16>
    %cst_259 = arith.constant dense<0.000000e+00> : vector<2x48xf32>
    %732 = tpu.matmul %659, %731, %cst_259 {dimension_numbers = #tpu.dot_dimension_numbers<[1], [0], [0], [1], [0, 0, 1, 1], [], []>} : vector<2x12xbf16>, vector<12x48xbf16>, vector<2x48xf32> -> vector<2x48xf32>
    %733 = arith.addf %729, %732 : vector<2x48xf32>
    %734 = arith.mulf %8, %733 : vector<2x48xf32>
    %735 = math.tanh %734 : vector<2x48xf32>
    %736 = arith.mulf %8, %735 : vector<2x48xf32>
    %737 = arith.addf %736, %11 : vector<2x48xf32>
    %738 = vector.extract_strided_slice %737 {offsets = [0, 0], sizes = [2, 12], strides = [1, 1]} : vector<2x48xf32> to vector<2x12xf32>
    %739 = vector.extract_strided_slice %737 {offsets = [0, 12], sizes = [2, 12], strides = [1, 1]} : vector<2x48xf32> to vector<2x12xf32>
    %740 = vector.extract_strided_slice %737 {offsets = [0, 24], sizes = [2, 12], strides = [1, 1]} : vector<2x48xf32> to vector<2x12xf32>
    %741 = vector.extract_strided_slice %737 {offsets = [0, 36], sizes = [2, 12], strides = [1, 1]} : vector<2x48xf32> to vector<2x12xf32>
    %742 = arith.mulf %739, %656 : vector<2x12xf32>
    %743 = arith.mulf %738, %740 : vector<2x12xf32>
    %744 = arith.addf %742, %743 : vector<2x12xf32>
    %745 = math.tanh %744 : vector<2x12xf32>
    %746 = arith.mulf %741, %745 : vector<2x12xf32>
    %747 = arith.truncf %746 : vector<2x12xf32> to vector<2x12xbf16>
    %c3_260 = arith.constant 3 : index
    %c0_261 = arith.constant 0 : index
    %c0_262 = arith.constant 0 : index
    %748 = vector.load %arg2[%c3_260, %c0_261, %c0_262] : memref<4x12x48xbf16, #tpu.memory_space<vmem>>, vector<1x12x48xbf16>
    %749 = vector.shape_cast %748 : vector<1x12x48xbf16> to vector<12x48xbf16>
    %cst_263 = arith.constant dense<0.000000e+00> : vector<2x48xf32>
    %750 = tpu.matmul %659, %749, %cst_263 {dimension_numbers = #tpu.dot_dimension_numbers<[1], [0], [0], [1], [0, 0, 1, 1], [], []>} : vector<2x12xbf16>, vector<12x48xbf16>, vector<2x48xf32> -> vector<2x48xf32>
    %751 = arith.addf %27, %750 : vector<2x48xf32>
    %c4_264 = arith.constant 4 : index
    %c0_265 = arith.constant 0 : index
    %c0_266 = arith.constant 0 : index
    %752 = vector.load %arg3[%c4_264, %c0_265, %c0_266] : memref<5x12x48xbf16, #tpu.memory_space<vmem>>, vector<1x12x48xbf16>
    %753 = vector.shape_cast %752 : vector<1x12x48xbf16> to vector<12x48xbf16>
    %cst_267 = arith.constant dense<0.000000e+00> : vector<2x48xf32>
    %754 = tpu.matmul %681, %753, %cst_267 {dimension_numbers = #tpu.dot_dimension_numbers<[1], [0], [0], [1], [0, 0, 1, 1], [], []>} : vector<2x12xbf16>, vector<12x48xbf16>, vector<2x48xf32> -> vector<2x48xf32>
    %755 = arith.addf %751, %754 : vector<2x48xf32>
    %756 = arith.mulf %8, %755 : vector<2x48xf32>
    %757 = math.tanh %756 : vector<2x48xf32>
    %758 = arith.mulf %8, %757 : vector<2x48xf32>
    %759 = arith.addf %758, %11 : vector<2x48xf32>
    %760 = vector.extract_strided_slice %759 {offsets = [0, 0], sizes = [2, 12], strides = [1, 1]} : vector<2x48xf32> to vector<2x12xf32>
    %761 = vector.extract_strided_slice %759 {offsets = [0, 12], sizes = [2, 12], strides = [1, 1]} : vector<2x48xf32> to vector<2x12xf32>
    %762 = vector.extract_strided_slice %759 {offsets = [0, 24], sizes = [2, 12], strides = [1, 1]} : vector<2x48xf32> to vector<2x12xf32>
    %763 = vector.extract_strided_slice %759 {offsets = [0, 36], sizes = [2, 12], strides = [1, 1]} : vector<2x48xf32> to vector<2x12xf32>
    %764 = arith.mulf %761, %678 : vector<2x12xf32>
    %765 = arith.mulf %760, %762 : vector<2x12xf32>
    %766 = arith.addf %764, %765 : vector<2x12xf32>
    %767 = math.tanh %766 : vector<2x12xf32>
    %768 = arith.mulf %763, %767 : vector<2x12xf32>
    %769 = arith.truncf %768 : vector<2x12xf32> to vector<2x12xbf16>
    %c1_268 = arith.constant 1 : index
    %c0_269 = arith.constant 0 : index
    %c0_270 = arith.constant 0 : index
    %770 = vector.load %arg2[%c1_268, %c0_269, %c0_270] : memref<4x12x48xbf16, #tpu.memory_space<vmem>>, vector<1x12x48xbf16>
    %771 = vector.shape_cast %770 : vector<1x12x48xbf16> to vector<12x48xbf16>
    %cst_271 = arith.constant dense<0.000000e+00> : vector<2x48xf32>
    %772 = tpu.matmul %703, %771, %cst_271 {dimension_numbers = #tpu.dot_dimension_numbers<[1], [0], [0], [1], [0, 0, 1, 1], [], []>} : vector<2x12xbf16>, vector<12x48xbf16>, vector<2x48xf32> -> vector<2x48xf32>
    %773 = arith.addf %19, %772 : vector<2x48xf32>
    %c2_272 = arith.constant 2 : index
    %c0_273 = arith.constant 0 : index
    %c0_274 = arith.constant 0 : index
    %774 = vector.load %arg3[%c2_272, %c0_273, %c0_274] : memref<5x12x48xbf16, #tpu.memory_space<vmem>>, vector<1x12x48xbf16>
    %775 = vector.shape_cast %774 : vector<1x12x48xbf16> to vector<12x48xbf16>
    %cst_275 = arith.constant dense<0.000000e+00> : vector<2x48xf32>
    %776 = tpu.matmul %725, %775, %cst_275 {dimension_numbers = #tpu.dot_dimension_numbers<[1], [0], [0], [1], [0, 0, 1, 1], [], []>} : vector<2x12xbf16>, vector<12x48xbf16>, vector<2x48xf32> -> vector<2x48xf32>
    %777 = arith.addf %773, %776 : vector<2x48xf32>
    %778 = arith.mulf %8, %777 : vector<2x48xf32>
    %779 = math.tanh %778 : vector<2x48xf32>
    %780 = arith.mulf %8, %779 : vector<2x48xf32>
    %781 = arith.addf %780, %11 : vector<2x48xf32>
    %782 = vector.extract_strided_slice %781 {offsets = [0, 0], sizes = [2, 12], strides = [1, 1]} : vector<2x48xf32> to vector<2x12xf32>
    %783 = vector.extract_strided_slice %781 {offsets = [0, 12], sizes = [2, 12], strides = [1, 1]} : vector<2x48xf32> to vector<2x12xf32>
    %784 = vector.extract_strided_slice %781 {offsets = [0, 24], sizes = [2, 12], strides = [1, 1]} : vector<2x48xf32> to vector<2x12xf32>
    %785 = vector.extract_strided_slice %781 {offsets = [0, 36], sizes = [2, 12], strides = [1, 1]} : vector<2x48xf32> to vector<2x12xf32>
    %786 = arith.mulf %783, %722 : vector<2x12xf32>
    %787 = arith.mulf %782, %784 : vector<2x12xf32>
    %788 = arith.addf %786, %787 : vector<2x12xf32>
    %789 = math.tanh %788 : vector<2x12xf32>
    %790 = arith.mulf %785, %789 : vector<2x12xf32>
    %791 = arith.truncf %790 : vector<2x12xf32> to vector<2x12xbf16>
    %c2_276 = arith.constant 2 : index
    %c0_277 = arith.constant 0 : index
    %c0_278 = arith.constant 0 : index
    %792 = vector.load %arg2[%c2_276, %c0_277, %c0_278] : memref<4x12x48xbf16, #tpu.memory_space<vmem>>, vector<1x12x48xbf16>
    %793 = vector.shape_cast %792 : vector<1x12x48xbf16> to vector<12x48xbf16>
    %cst_279 = arith.constant dense<0.000000e+00> : vector<2x48xf32>
    %794 = tpu.matmul %725, %793, %cst_279 {dimension_numbers = #tpu.dot_dimension_numbers<[1], [0], [0], [1], [0, 0, 1, 1], [], []>} : vector<2x12xbf16>, vector<12x48xbf16>, vector<2x48xf32> -> vector<2x48xf32>
    %795 = arith.addf %23, %794 : vector<2x48xf32>
    %c3_280 = arith.constant 3 : index
    %c0_281 = arith.constant 0 : index
    %c0_282 = arith.constant 0 : index
    %796 = vector.load %arg3[%c3_280, %c0_281, %c0_282] : memref<5x12x48xbf16, #tpu.memory_space<vmem>>, vector<1x12x48xbf16>
    %797 = vector.shape_cast %796 : vector<1x12x48xbf16> to vector<12x48xbf16>
    %cst_283 = arith.constant dense<0.000000e+00> : vector<2x48xf32>
    %798 = tpu.matmul %747, %797, %cst_283 {dimension_numbers = #tpu.dot_dimension_numbers<[1], [0], [0], [1], [0, 0, 1, 1], [], []>} : vector<2x12xbf16>, vector<12x48xbf16>, vector<2x48xf32> -> vector<2x48xf32>
    %799 = arith.addf %795, %798 : vector<2x48xf32>
    %800 = arith.mulf %8, %799 : vector<2x48xf32>
    %801 = math.tanh %800 : vector<2x48xf32>
    %802 = arith.mulf %8, %801 : vector<2x48xf32>
    %803 = arith.addf %802, %11 : vector<2x48xf32>
    %804 = vector.extract_strided_slice %803 {offsets = [0, 0], sizes = [2, 12], strides = [1, 1]} : vector<2x48xf32> to vector<2x12xf32>
    %805 = vector.extract_strided_slice %803 {offsets = [0, 12], sizes = [2, 12], strides = [1, 1]} : vector<2x48xf32> to vector<2x12xf32>
    %806 = vector.extract_strided_slice %803 {offsets = [0, 24], sizes = [2, 12], strides = [1, 1]} : vector<2x48xf32> to vector<2x12xf32>
    %807 = vector.extract_strided_slice %803 {offsets = [0, 36], sizes = [2, 12], strides = [1, 1]} : vector<2x48xf32> to vector<2x12xf32>
    %808 = arith.mulf %805, %744 : vector<2x12xf32>
    %809 = arith.mulf %804, %806 : vector<2x12xf32>
    %810 = arith.addf %808, %809 : vector<2x12xf32>
    %811 = math.tanh %810 : vector<2x12xf32>
    %812 = arith.mulf %807, %811 : vector<2x12xf32>
    %813 = arith.truncf %812 : vector<2x12xf32> to vector<2x12xbf16>
    %c3_284 = arith.constant 3 : index
    %c0_285 = arith.constant 0 : index
    %c0_286 = arith.constant 0 : index
    %814 = vector.load %arg2[%c3_284, %c0_285, %c0_286] : memref<4x12x48xbf16, #tpu.memory_space<vmem>>, vector<1x12x48xbf16>
    %815 = vector.shape_cast %814 : vector<1x12x48xbf16> to vector<12x48xbf16>
    %cst_287 = arith.constant dense<0.000000e+00> : vector<2x48xf32>
    %816 = tpu.matmul %747, %815, %cst_287 {dimension_numbers = #tpu.dot_dimension_numbers<[1], [0], [0], [1], [0, 0, 1, 1], [], []>} : vector<2x12xbf16>, vector<12x48xbf16>, vector<2x48xf32> -> vector<2x48xf32>
    %817 = arith.addf %27, %816 : vector<2x48xf32>
    %c4_288 = arith.constant 4 : index
    %c0_289 = arith.constant 0 : index
    %c0_290 = arith.constant 0 : index
    %818 = vector.load %arg3[%c4_288, %c0_289, %c0_290] : memref<5x12x48xbf16, #tpu.memory_space<vmem>>, vector<1x12x48xbf16>
    %819 = vector.shape_cast %818 : vector<1x12x48xbf16> to vector<12x48xbf16>
    %cst_291 = arith.constant dense<0.000000e+00> : vector<2x48xf32>
    %820 = tpu.matmul %769, %819, %cst_291 {dimension_numbers = #tpu.dot_dimension_numbers<[1], [0], [0], [1], [0, 0, 1, 1], [], []>} : vector<2x12xbf16>, vector<12x48xbf16>, vector<2x48xf32> -> vector<2x48xf32>
    %821 = arith.addf %817, %820 : vector<2x48xf32>
    %822 = arith.mulf %8, %821 : vector<2x48xf32>
    %823 = math.tanh %822 : vector<2x48xf32>
    %824 = arith.mulf %8, %823 : vector<2x48xf32>
    %825 = arith.addf %824, %11 : vector<2x48xf32>
    %826 = vector.extract_strided_slice %825 {offsets = [0, 0], sizes = [2, 12], strides = [1, 1]} : vector<2x48xf32> to vector<2x12xf32>
    %827 = vector.extract_strided_slice %825 {offsets = [0, 12], sizes = [2, 12], strides = [1, 1]} : vector<2x48xf32> to vector<2x12xf32>
    %828 = vector.extract_strided_slice %825 {offsets = [0, 24], sizes = [2, 12], strides = [1, 1]} : vector<2x48xf32> to vector<2x12xf32>
    %829 = vector.extract_strided_slice %825 {offsets = [0, 36], sizes = [2, 12], strides = [1, 1]} : vector<2x48xf32> to vector<2x12xf32>
    %830 = arith.mulf %827, %766 : vector<2x12xf32>
    %831 = arith.mulf %826, %828 : vector<2x12xf32>
    %832 = arith.addf %830, %831 : vector<2x12xf32>
    %833 = math.tanh %832 : vector<2x12xf32>
    %834 = arith.mulf %829, %833 : vector<2x12xf32>
    %835 = arith.truncf %834 : vector<2x12xf32> to vector<2x12xbf16>
    %c2_292 = arith.constant 2 : index
    %c0_293 = arith.constant 0 : index
    %c0_294 = arith.constant 0 : index
    %836 = vector.load %arg2[%c2_292, %c0_293, %c0_294] : memref<4x12x48xbf16, #tpu.memory_space<vmem>>, vector<1x12x48xbf16>
    %837 = vector.shape_cast %836 : vector<1x12x48xbf16> to vector<12x48xbf16>
    %cst_295 = arith.constant dense<0.000000e+00> : vector<2x48xf32>
    %838 = tpu.matmul %791, %837, %cst_295 {dimension_numbers = #tpu.dot_dimension_numbers<[1], [0], [0], [1], [0, 0, 1, 1], [], []>} : vector<2x12xbf16>, vector<12x48xbf16>, vector<2x48xf32> -> vector<2x48xf32>
    %839 = arith.addf %23, %838 : vector<2x48xf32>
    %c3_296 = arith.constant 3 : index
    %c0_297 = arith.constant 0 : index
    %c0_298 = arith.constant 0 : index
    %840 = vector.load %arg3[%c3_296, %c0_297, %c0_298] : memref<5x12x48xbf16, #tpu.memory_space<vmem>>, vector<1x12x48xbf16>
    %841 = vector.shape_cast %840 : vector<1x12x48xbf16> to vector<12x48xbf16>
    %cst_299 = arith.constant dense<0.000000e+00> : vector<2x48xf32>
    %842 = tpu.matmul %813, %841, %cst_299 {dimension_numbers = #tpu.dot_dimension_numbers<[1], [0], [0], [1], [0, 0, 1, 1], [], []>} : vector<2x12xbf16>, vector<12x48xbf16>, vector<2x48xf32> -> vector<2x48xf32>
    %843 = arith.addf %839, %842 : vector<2x48xf32>
    %844 = arith.mulf %8, %843 : vector<2x48xf32>
    %845 = math.tanh %844 : vector<2x48xf32>
    %846 = arith.mulf %8, %845 : vector<2x48xf32>
    %847 = arith.addf %846, %11 : vector<2x48xf32>
    %848 = vector.extract_strided_slice %847 {offsets = [0, 0], sizes = [2, 12], strides = [1, 1]} : vector<2x48xf32> to vector<2x12xf32>
    %849 = vector.extract_strided_slice %847 {offsets = [0, 12], sizes = [2, 12], strides = [1, 1]} : vector<2x48xf32> to vector<2x12xf32>
    %850 = vector.extract_strided_slice %847 {offsets = [0, 24], sizes = [2, 12], strides = [1, 1]} : vector<2x48xf32> to vector<2x12xf32>
    %851 = vector.extract_strided_slice %847 {offsets = [0, 36], sizes = [2, 12], strides = [1, 1]} : vector<2x48xf32> to vector<2x12xf32>
    %852 = arith.mulf %849, %810 : vector<2x12xf32>
    %853 = arith.mulf %848, %850 : vector<2x12xf32>
    %854 = arith.addf %852, %853 : vector<2x12xf32>
    %855 = math.tanh %854 : vector<2x12xf32>
    %856 = arith.mulf %851, %855 : vector<2x12xf32>
    %857 = arith.truncf %856 : vector<2x12xf32> to vector<2x12xbf16>
    %c3_300 = arith.constant 3 : index
    %c0_301 = arith.constant 0 : index
    %c0_302 = arith.constant 0 : index
    %858 = vector.load %arg2[%c3_300, %c0_301, %c0_302] : memref<4x12x48xbf16, #tpu.memory_space<vmem>>, vector<1x12x48xbf16>
    %859 = vector.shape_cast %858 : vector<1x12x48xbf16> to vector<12x48xbf16>
    %cst_303 = arith.constant dense<0.000000e+00> : vector<2x48xf32>
    %860 = tpu.matmul %813, %859, %cst_303 {dimension_numbers = #tpu.dot_dimension_numbers<[1], [0], [0], [1], [0, 0, 1, 1], [], []>} : vector<2x12xbf16>, vector<12x48xbf16>, vector<2x48xf32> -> vector<2x48xf32>
    %861 = arith.addf %27, %860 : vector<2x48xf32>
    %c4_304 = arith.constant 4 : index
    %c0_305 = arith.constant 0 : index
    %c0_306 = arith.constant 0 : index
    %862 = vector.load %arg3[%c4_304, %c0_305, %c0_306] : memref<5x12x48xbf16, #tpu.memory_space<vmem>>, vector<1x12x48xbf16>
    %863 = vector.shape_cast %862 : vector<1x12x48xbf16> to vector<12x48xbf16>
    %cst_307 = arith.constant dense<0.000000e+00> : vector<2x48xf32>
    %864 = tpu.matmul %835, %863, %cst_307 {dimension_numbers = #tpu.dot_dimension_numbers<[1], [0], [0], [1], [0, 0, 1, 1], [], []>} : vector<2x12xbf16>, vector<12x48xbf16>, vector<2x48xf32> -> vector<2x48xf32>
    %865 = arith.addf %861, %864 : vector<2x48xf32>
    %866 = arith.mulf %8, %865 : vector<2x48xf32>
    %867 = math.tanh %866 : vector<2x48xf32>
    %868 = arith.mulf %8, %867 : vector<2x48xf32>
    %869 = arith.addf %868, %11 : vector<2x48xf32>
    %870 = vector.extract_strided_slice %869 {offsets = [0, 0], sizes = [2, 12], strides = [1, 1]} : vector<2x48xf32> to vector<2x12xf32>
    %871 = vector.extract_strided_slice %869 {offsets = [0, 12], sizes = [2, 12], strides = [1, 1]} : vector<2x48xf32> to vector<2x12xf32>
    %872 = vector.extract_strided_slice %869 {offsets = [0, 24], sizes = [2, 12], strides = [1, 1]} : vector<2x48xf32> to vector<2x12xf32>
    %873 = vector.extract_strided_slice %869 {offsets = [0, 36], sizes = [2, 12], strides = [1, 1]} : vector<2x48xf32> to vector<2x12xf32>
    %874 = arith.mulf %871, %832 : vector<2x12xf32>
    %875 = arith.mulf %870, %872 : vector<2x12xf32>
    %876 = arith.addf %874, %875 : vector<2x12xf32>
    %877 = math.tanh %876 : vector<2x12xf32>
    %878 = arith.mulf %873, %877 : vector<2x12xf32>
    %879 = arith.truncf %878 : vector<2x12xf32> to vector<2x12xbf16>
    %c3_308 = arith.constant 3 : index
    %c0_309 = arith.constant 0 : index
    %c0_310 = arith.constant 0 : index
    %880 = vector.load %arg2[%c3_308, %c0_309, %c0_310] : memref<4x12x48xbf16, #tpu.memory_space<vmem>>, vector<1x12x48xbf16>
    %881 = vector.shape_cast %880 : vector<1x12x48xbf16> to vector<12x48xbf16>
    %cst_311 = arith.constant dense<0.000000e+00> : vector<2x48xf32>
    %882 = tpu.matmul %857, %881, %cst_311 {dimension_numbers = #tpu.dot_dimension_numbers<[1], [0], [0], [1], [0, 0, 1, 1], [], []>} : vector<2x12xbf16>, vector<12x48xbf16>, vector<2x48xf32> -> vector<2x48xf32>
    %883 = arith.addf %27, %882 : vector<2x48xf32>
    %c4_312 = arith.constant 4 : index
    %c0_313 = arith.constant 0 : index
    %c0_314 = arith.constant 0 : index
    %884 = vector.load %arg3[%c4_312, %c0_313, %c0_314] : memref<5x12x48xbf16, #tpu.memory_space<vmem>>, vector<1x12x48xbf16>
    %885 = vector.shape_cast %884 : vector<1x12x48xbf16> to vector<12x48xbf16>
    %cst_315 = arith.constant dense<0.000000e+00> : vector<2x48xf32>
    %886 = tpu.matmul %879, %885, %cst_315 {dimension_numbers = #tpu.dot_dimension_numbers<[1], [0], [0], [1], [0, 0, 1, 1], [], []>} : vector<2x12xbf16>, vector<12x48xbf16>, vector<2x48xf32> -> vector<2x48xf32>
    %887 = arith.addf %883, %886 : vector<2x48xf32>
    %888 = arith.mulf %8, %887 : vector<2x48xf32>
    %889 = math.tanh %888 : vector<2x48xf32>
    %890 = arith.mulf %8, %889 : vector<2x48xf32>
    %891 = arith.addf %890, %11 : vector<2x48xf32>
    %892 = vector.extract_strided_slice %891 {offsets = [0, 0], sizes = [2, 12], strides = [1, 1]} : vector<2x48xf32> to vector<2x12xf32>
    %893 = vector.extract_strided_slice %891 {offsets = [0, 12], sizes = [2, 12], strides = [1, 1]} : vector<2x48xf32> to vector<2x12xf32>
    %894 = vector.extract_strided_slice %891 {offsets = [0, 24], sizes = [2, 12], strides = [1, 1]} : vector<2x48xf32> to vector<2x12xf32>
    %895 = vector.extract_strided_slice %891 {offsets = [0, 36], sizes = [2, 12], strides = [1, 1]} : vector<2x48xf32> to vector<2x12xf32>
    %896 = arith.mulf %893, %876 : vector<2x12xf32>
    %897 = arith.mulf %892, %894 : vector<2x12xf32>
    %898 = arith.addf %896, %897 : vector<2x12xf32>
    %899 = math.tanh %898 : vector<2x12xf32>
    %900 = arith.mulf %895, %899 : vector<2x12xf32>
    %901 = tpu.concatenate %680, %768, %834, %878, %900 in 1 : vector<2x12xf32>, vector<2x12xf32>, vector<2x12xf32>, vector<2x12xf32>, vector<2x12xf32> -> vector<2x60xf32>
    %cst_316 = arith.constant 0.000000e+00 : f32
    %902 = vector.broadcast %cst_316 : f32 to vector<2x60xf32>
    %903 = arith.maximumf %901, %902 : vector<2x60xf32>
    %904 = arith.truncf %903 : vector<2x60xf32> to vector<2x60xbf16>
    %c0_317 = arith.constant 0 : index
    %c0_318 = arith.constant 0 : index
    %905 = vector.load %arg5[%c0_317, %c0_318] : memref<60x128xbf16, #tpu.memory_space<vmem>>, vector<60x128xbf16>
    %cst_319 = arith.constant dense<0.000000e+00> : vector<2x128xf32>
    %906 = tpu.matmul %904, %905, %cst_319 {dimension_numbers = #tpu.dot_dimension_numbers<[1], [0], [0], [1], [0, 0, 1, 1], [], []>} : vector<2x60xbf16>, vector<60x128xbf16>, vector<2x128xf32> -> vector<2x128xf32>
    %c0_320 = arith.constant 0 : index
    %c0_321 = arith.constant 0 : index
    %907 = vector.load %arg6[%c0_320, %c0_321] : memref<1x128xf32, #tpu.memory_space<vmem>>, vector<1x128xf32>
    %908 = vector.broadcast %907 : vector<1x128xf32> to vector<2x128xf32>
    %909 = arith.addf %906, %908 : vector<2x128xf32>
    %cst_322 = arith.constant 0.000000e+00 : f32
    %910 = vector.broadcast %cst_322 : f32 to vector<2x128xf32>
    %911 = arith.maximumf %909, %910 : vector<2x128xf32>
    %912 = arith.truncf %911 : vector<2x128xf32> to vector<2x128xbf16>
    %c0_323 = arith.constant 0 : index
    %c0_324 = arith.constant 0 : index
    %913 = vector.load %arg7[%c0_323, %c0_324] : memref<128x3xbf16, #tpu.memory_space<vmem>>, vector<128x3xbf16>
    %cst_325 = arith.constant dense<0.000000e+00> : vector<2x3xf32>
    %914 = tpu.matmul %912, %913, %cst_325 {dimension_numbers = #tpu.dot_dimension_numbers<[1], [0], [0], [1], [0, 0, 1, 1], [], []>} : vector<2x128xbf16>, vector<128x3xbf16>, vector<2x3xf32> -> vector<2x3xf32>
    %c0_326 = arith.constant 0 : index
    %c0_327 = arith.constant 0 : index
    %915 = vector.load %arg8[%c0_326, %c0_327] : memref<1x3xf32, #tpu.memory_space<vmem>>, vector<1x3xf32>
    %916 = vector.broadcast %915 : vector<1x3xf32> to vector<2x3xf32>
    %917 = arith.addf %914, %916 : vector<2x3xf32>
    %c0_328 = arith.constant 0 : index
    %c0_329 = arith.constant 0 : index
    %918 = vector.load %arg9[%c0_328, %c0_329] : memref<2x3xf32, #tpu.memory_space<vmem>>, vector<2x3xf32>
    tpu.vector_store %arg9[%c0_328, %c0_329], %917 {strides = array<i32>} : memref<2x3xf32, #tpu.memory_space<vmem>>, vector<2x3xf32>,
    return
  }
}

</mosaic_0001>

<llo_original>
// kernel: lstm2_forward.1
$region0: #{lstm2_forward.1}
  #allocation0 [shape = 'u32[]', space=smem, size = 0x4, offset = 0x4, fixed_abs, tag = 'smem constant byte address 0x4 - core index']
  #allocation1 [shape = 'u32[72,128]{1,0:T(1,128)}', space=vmem, size = 0x9000, scoped, tag = 'internal scratch']
  %s0 = inlined_call_operand.vmem [shape: bf16[16,4], index: 0, kind: input, shape index: {}]
  %s1 = inlined_call_operand.vmem [shape: bf16[4,48], index: 1, kind: input, shape index: {}]
  %s2 = inlined_call_operand.vmem [shape: bf16[4,12,48], index: 2, kind: input, shape index: {}]
  %s3 = inlined_call_operand.vmem [shape: bf16[5,12,48], index: 3, kind: input, shape index: {}]
  %s4 = inlined_call_operand.vmem [shape: f32[5,1,48], index: 4, kind: input, shape index: {}]
  %s5 = inlined_call_operand.vmem [shape: bf16[60,128], index: 5, kind: input, shape index: {}]
  %s6 = inlined_call_operand.vmem [shape: f32[1,128], index: 6, kind: input, shape index: {}]
  %s7 = inlined_call_operand.vmem [shape: bf16[128,3], index: 7, kind: input, shape index: {}]
  %s8 = inlined_call_operand.vmem [shape: f32[1,3], index: 8, kind: input, shape index: {}]
  %s9 = inlined_call_operand.hbm [shape: f32[2,3], index: 9, kind: output, shape index: {}]
  %s10 = sld [smem:[#allocation0]]
  $region46: #{lstm2_forward.1} parent=0
    _
  %s12 = ssub.s32 1, %s10
  %s13 = scalar_select 0, %s12, %s10
  $region1: #{lstm2_forward.1} parent=0
    #allocation2 [shape = 'u8[1024]{0}', space=vmem, size = 0x400, scoped, tag = 'output window, operand 0, single buffered']
    #allocation3 [shape = 's32[1]{0}', space=sflag, size = 0x4, scoped, tag = 'scoped memory for lstm2_forward.1']
    %14 = vsyncpa [#allocation3], 0
    // Predicated region
    $region2: #{lstm2_forward.1} parent=1 // pred_check
      _
    $region3: #{lstm2_forward.1} parent=1 // pred_check_branch
      %16 = sbr.rel (0) target = $region5
    $region4: #{lstm2_forward.1} parent=1 // pred_region
      _
    $region5: #{lstm2_forward.1} parent=1 // pred_fallthru
      _
    // Predicated region
    $region6: #{lstm2_forward.1} parent=1 // pred_check
      _
    $region7: #{lstm2_forward.1} parent=1 // pred_check_branch
      %18 = sbr.rel (0) target = $region9
    $region8: #{lstm2_forward.1} parent=1 // pred_region
      _
    $region9: #{lstm2_forward.1} parent=1 // pred_fallthru
      _
    // Predicated region
    $region10: #{lstm2_forward.1} parent=1 // pred_check
      _
    $region11: #{lstm2_forward.1} parent=1 // pred_check_branch
      %20 = sbr.rel (0) target = $region13
    $region12: #{lstm2_forward.1} parent=1 // pred_region
      _
    $region13: #{lstm2_forward.1} parent=1 // pred_fallthru
      _
    // Predicated region
    $region14: #{lstm2_forward.1} parent=1 // pred_check
      _
    $region15: #{lstm2_forward.1} parent=1 // pred_check_branch
      %22 = sbr.rel (0) target = $region17
    $region16: #{lstm2_forward.1} parent=1 // pred_region
      _
    $region17: #{lstm2_forward.1} parent=1 // pred_fallthru
      _
    // Predicated region
    $region18: #{lstm2_forward.1} parent=1 // pred_check
      _
    $region19: #{lstm2_forward.1} parent=1 // pred_check_branch
      %24 = sbr.rel (0) target = $region21
    $region20: #{lstm2_forward.1} parent=1 // pred_region
      _
    $region21: #{lstm2_forward.1} parent=1 // pred_fallthru
      _
    // Predicated region
    $region22: #{lstm2_forward.1} parent=1 // pred_check
      _
    $region23: #{lstm2_forward.1} parent=1 // pred_check_branch
      %26 = sbr.rel (0) target = $region25
    $region24: #{lstm2_forward.1} parent=1 // pred_region
      _
    $region25: #{lstm2_forward.1} parent=1 // pred_fallthru
      _
    // Predicated region
    $region26: #{lstm2_forward.1} parent=1 // pred_check
      _
    $region27: #{lstm2_forward.1} parent=1 // pred_check_branch
      %28 = sbr.rel (0) target = $region29
    $region28: #{lstm2_forward.1} parent=1 // pred_region
      _
    $region29: #{lstm2_forward.1} parent=1 // pred_fallthru
      _
    // Predicated region
    $region30: #{lstm2_forward.1} parent=1 // pred_check
      _
    $region31: #{lstm2_forward.1} parent=1 // pred_check_branch
      %30 = sbr.rel (0) target = $region33
    $region32: #{lstm2_forward.1} parent=1 // pred_region
      _
    $region33: #{lstm2_forward.1} parent=1 // pred_fallthru
      _
    // Predicated region
    $region34: #{lstm2_forward.1} parent=1 // pred_check
      _
    $region35: #{lstm2_forward.1} parent=1 // pred_check_branch
      %32 = sbr.rel (0) target = $region37
    $region36: #{lstm2_forward.1} parent=1 // pred_region
      _
    $region37: #{lstm2_forward.1} parent=1 // pred_fallthru
      _
    %v34 = vlaneseq
    %v35 = vand.u32 %v34, 127
    %vm36 = vcmp.ge.s32.totalorder %v35, 24
    %vm37 = vcmp.lt.s32.totalorder %v35, 36
    %vm38 = vmand %vm36, %vm37
    %v39 = vsel %vm38, 1.0, 0.5
    %v40 = vsel %vm38, 0.0, 0.5
    %s41 = scalar_lea.vmem %s4, 1
    %v42 = vld [vmem:[%s41] sm:$0x1]
    %v44 = vperm.slane %v42, 0
    %s46 = scalar_lea.vmem %s4, 2
    %v47 = vld [vmem:[%s46] sm:$0x1]
    %v49 = vperm.slane %v47, 0
    %s51 = scalar_lea.vmem %s4, 3
    %v52 = vld [vmem:[%s51] sm:$0x1]
    %v54 = vperm.slane %v52, 0
    %s56 = scalar_lea.vmem %s4, 4
    %v57 = vld [vmem:[%s56] sm:$0x1]
    %v59 = vperm.slane %v57, 0
    %v61 = vld [vmem:[%s0] sm:$0xf]
    %v62 = vld [vmem:[%s0 + $0x4] sm:$0xf]
    %v63 = vld [vmem:[%s1] sm:$0x3]
    %v64 = vld [vmem:[%s4] sm:$0x1]
    %v66 = vperm.slane %v64, 0
    %v70 = vunpack.c.l.b16 %v61
    %v71 = vunpack.c.l.b16 %v62
    %v72 = vpack.c.b16 %v71, %v70
    %vm73 = vcmask 31744
    %v75 = vsel %vm73, %v72, 0
    %vm77 = vcmask 1041408
    %v79 = vsel %vm77, %v63, 0
    %81 = vmatpush.bf16.msra.mxu0 0
    %82 = vmatpush.bf16.msra.mxu0 0
    %83 = vmatpush.bf16.msra.mxu0 0
    %84 = vmatpush.bf16.msra.mxu0 0
    %85 = vmatpush.bf16.msra.mxu0 0
    %86 = vmatpush.bf16.msra.mxu0 0
    %87 = vmatpush.bf16.msra.mxu0 0
    %88 = vmatpush.bf16.msra.mxu0 %v79
    %89 = vmatmul.bf16.gmra.mxu0 %v75
    %v90 = vpop.f32.mrf.mxu0
    %v91 = vadd.f32 %v66, %v90
    %v92 = vpop.f32.mrf.mxu0
    %v93 = vadd.f32 %v66, %v92
    %94 = vdwg.mxu0
    %v95 = vld [vmem:[%s3] sm:$0xf]
    %v96 = vld [vmem:[%s3 + $0x4] sm:$0x3]
    %v99 = vunpack.c.l.b16 %v95
    %v100 = vunpack.c.l.b16 %v96
    %v101 = vpack.c.b16 %v100, %v99
    %vm102 = vcmask 97280
    %v104 = vsel %vm102, 0, 0
    %vm106 = vcmask 1045504
    %v108 = vsel %vm106, %v101, 0
    %110 = vmatpush.bf16.msra.mxu0 0
    %111 = vmatpush.bf16.msra.mxu0 0
    %112 = vmatpush.bf16.msra.mxu0 0
    %113 = vmatpush.bf16.msra.mxu0 0
    %114 = vmatpush.bf16.msra.mxu0 0
    %115 = vmatpush.bf16.msra.mxu0 0
    %116 = vmatpush.bf16.msra.mxu0 0
    %117 = vmatpush.bf16.msra.mxu0 %v108
    %118 = vmatmul.bf16.gmra.mxu0 %v104
    %v119 = vpop.f32.mrf.mxu0
    %v120 = vadd.f32 0.0, %v119
    %v121 = vpop.f32.mrf.mxu0
    %122 = vdwg.mxu0
    %v123 = vadd.f32 %v91, %v120
    %v124 = vmul.f32 %v39, %v123
    %v125 = vtanh.pop %v124
    %v126 = vmul.f32 %v39, %v125
    %v127 = vadd.f32 %v126, %v40
    %v128 = vmul.f32 %v127, 0.0
    %130 = vrot.lane.b32.xlu0 %v127, 104
    %v131 = vpop.permute.xlu0 %130
    %v133 = vmul.f32 %v127, %v131
    %135 = vrot.lane.b32.xlu0 %v133, 12
    %v136 = vpop.permute.xlu0 %135
    %v138 = vadd.f32 %v128, %v136
    %v139 = vtanh.pop %v138
    %141 = vrot.lane.b32.xlu0 %v139, 24
    %v142 = vpop.permute.xlu0 %141
    %v144 = vmul.f32 %v127, %v142
    %v145 = vpack.c.bf16 %v144, %v144
    %147 = vrot.lane.b32.xlu0 %v145, 92
    %v148 = vpop.permute.xlu0 %147
    %v150 = vsel %vm102, %v148, 0
    %152 = vmatpush.bf16.msra.mxu0 0
    %153 = vmatpush.bf16.msra.mxu0 0
    %154 = vmatpush.bf16.msra.mxu0 0
    %155 = vmatpush.bf16.msra.mxu0 0
    %156 = vmatpush.bf16.msra.mxu0 0
    %157 = vmatpush.bf16.msra.mxu0 0
    %158 = vmatpush.bf16.msra.mxu0 0
    %159 = vmatpush.bf16.msra.mxu0 %v108
    %160 = vmatmul.bf16.gmra.mxu0 %v150
    %v161 = vpop.f32.mrf.mxu0
    %v162 = vadd.f32 0.0, %v161
    %v163 = vpop.f32.mrf.mxu0
    %164 = vdwg.mxu0
    %v166 = vrot.slane %v162, 6
    %v168 = vadd.f32 %v91, %v166
    %v169 = vmul.f32 %v39, %v168
    %v170 = vtanh.pop %v169
    %v171 = vmul.f32 %v39, %v170
    %v172 = vadd.f32 %v171, %v40
    %v174 = vrot.slane %v138, 6
    %v176 = vmul.f32 %v172, %v174
    %178 = vrot.lane.b32.xlu0 %v172, 104
    %v179 = vpop.permute.xlu0 %178
    %v181 = vmul.f32 %v172, %v179
    %183 = vrot.lane.b32.xlu0 %v181, 12
    %v184 = vpop.permute.xlu0 %183
    %v186 = vadd.f32 %v176, %v184
    %v187 = vtanh.pop %v186
    %189 = vrot.lane.b32.xlu0 %v187, 24
    %v190 = vpop.permute.xlu0 %189
    %v192 = vmul.f32 %v172, %v190
    %v193 = vpack.c.bf16 %v192, %v192
    %v194 = vld [vmem:[%s2] sm:$0xf]
    %v195 = vld [vmem:[%s2 + $0x4] sm:$0x3]
    %v198 = vunpack.c.l.b16 %v194
    %v199 = vunpack.c.l.b16 %v195
    %v200 = vpack.c.b16 %v199, %v198
    %v202 = vsel %vm106, %v200, 0
    %204 = vmatpush.bf16.msra.mxu0 0
    %205 = vmatpush.bf16.msra.mxu0 0
    %206 = vmatpush.bf16.msra.mxu0 0
    %207 = vmatpush.bf16.msra.mxu0 0
    %208 = vmatpush.bf16.msra.mxu0 0
    %209 = vmatpush.bf16.msra.mxu0 0
    %210 = vmatpush.bf16.msra.mxu0 0
    %211 = vmatpush.bf16.msra.mxu0 %v202
    %212 = vmatmul.bf16.gmra.mxu0 %v150
    %v213 = vpop.f32.mrf.mxu0
    %v214 = vadd.f32 0.0, %v213
    %v215 = vpop.f32.mrf.mxu0
    %216 = vdwg.mxu0
    %v217 = vadd.f32 %v44, %v214
    %s218 = scalar_lea.vmem %s3, 8
    %v219 = vld [vmem:[%s218] sm:$0xf]
    %v220 = vld [vmem:[%s218 + $0x4] sm:$0x3]
    %v223 = vunpack.c.l.b16 %v219
    %v224 = vunpack.c.l.b16 %v220
    %v225 = vpack.c.b16 %v224, %v223
    %v227 = vsel %vm106, %v225, 0
    %229 = vmatpush.bf16.msra.mxu0 0
    %230 = vmatpush.bf16.msra.mxu0 0
    %231 = vmatpush.bf16.msra.mxu0 0
    %232 = vmatpush.bf16.msra.mxu0 0
    %233 = vmatpush.bf16.msra.mxu0 0
    %234 = vmatpush.bf16.msra.mxu0 0
    %235 = vmatpush.bf16.msra.mxu0 0
    %236 = vmatpush.bf16.msra.mxu0 %v227
    %237 = vmatmul.bf16.gmra.mxu0 %v104
    %v238 = vpop.f32.mrf.mxu0
    %v239 = vadd.f32 0.0, %v238
    %v240 = vpop.f32.mrf.mxu0
    %241 = vdwg.mxu0
    %v242 = vadd.f32 %v217, %v239
    %v243 = vmul.f32 %v39, %v242
    %v244 = vtanh.pop %v243
    %v245 = vmul.f32 %v39, %v244
    %v246 = vadd.f32 %v245, %v40
    %v247 = vmul.f32 %v246, 0.0
    %249 = vrot.lane.b32.xlu0 %v246, 104
    %v250 = vpop.permute.xlu0 %249
    %v252 = vmul.f32 %v246, %v250
    %254 = vrot.lane.b32.xlu0 %v252, 12
    %v255 = vpop.permute.xlu0 %254
    %v257 = vadd.f32 %v247, %v255
    %v258 = vtanh.pop %v257
    %260 = vrot.lane.b32.xlu0 %v258, 24
    %v261 = vpop.permute.xlu0 %260
    %v263 = vmul.f32 %v246, %v261
    %v264 = vpack.c.bf16 %v263, %v263
    %v266 = vrot.slane %v193, 1
    %267 = vrot.lane.b32.xlu0 %v266, 92
    %v268 = vpop.permute.xlu0 %267
    %v270 = vsel %vm102, %v268, 0
    %272 = vmatpush.bf16.msra.mxu0 0
    %273 = vmatpush.bf16.msra.mxu0 0
    %274 = vmatpush.bf16.msra.mxu0 0
    %275 = vmatpush.bf16.msra.mxu0 0
    %276 = vmatpush.bf16.msra.mxu0 0
    %277 = vmatpush.bf16.msra.mxu0 0
    %278 = vmatpush.bf16.msra.mxu0 0
    %279 = vmatpush.bf16.msra.mxu0 %v108
    %280 = vmatmul.bf16.gmra.mxu0 %v270
    %v281 = vpop.f32.mrf.mxu0
    %v282 = vadd.f32 0.0, %v281
    %v283 = vpop.f32.mrf.mxu0
    %284 = vdwg.mxu0
    %v286 = vrot.slane %v282, 4
    %v288 = vadd.f32 %v91, %v286
    %v289 = vmul.f32 %v39, %v288
    %v290 = vtanh.pop %v289
    %v291 = vmul.f32 %v39, %v290
    %v292 = vadd.f32 %v291, %v40
    %v294 = vrot.slane %v186, 6
    %v296 = vmul.f32 %v292, %v294
    %298 = vrot.lane.b32.xlu0 %v292, 104
    %v299 = vpop.permute.xlu0 %298
    %v301 = vmul.f32 %v292, %v299
    %303 = vrot.lane.b32.xlu0 %v301, 12
    %v304 = vpop.permute.xlu0 %303
    %v306 = vadd.f32 %v296, %v304
    %v307 = vtanh.pop %v306
    %309 = vrot.lane.b32.xlu0 %v307, 24
    %v310 = vpop.permute.xlu0 %309
    %v312 = vmul.f32 %v292, %v310
    %v313 = vpack.c.bf16 %v312, %v312
    %314 = vmatpush.bf16.msra.mxu0 0
    %315 = vmatpush.bf16.msra.mxu0 0
    %316 = vmatpush.bf16.msra.mxu0 0
    %317 = vmatpush.bf16.msra.mxu0 0
    %318 = vmatpush.bf16.msra.mxu0 0
    %319 = vmatpush.bf16.msra.mxu0 0
    %320 = vmatpush.bf16.msra.mxu0 0
    %321 = vmatpush.bf16.msra.mxu0 %v202
    %322 = vmatmul.bf16.gmra.mxu0 %v270
    %v323 = vpop.f32.mrf.mxu0
    %v324 = vadd.f32 0.0, %v323
    %v325 = vpop.f32.mrf.mxu0
    %326 = vdwg.mxu0
    %v327 = vadd.f32 %v44, %v324
    %329 = vrot.lane.b32.xlu0 %v264, 92
    %v330 = vpop.permute.xlu0 %329
    %v332 = vsel %vm102, %v330, 0
    %334 = vmatpush.bf16.msra.mxu0 0
    %335 = vmatpush.bf16.msra.mxu0 0
    %336 = vmatpush.bf16.msra.mxu0 0
    %337 = vmatpush.bf16.msra.mxu0 0
    %338 = vmatpush.bf16.msra.mxu0 0
    %339 = vmatpush.bf16.msra.mxu0 0
    %340 = vmatpush.bf16.msra.mxu0 0
    %341 = vmatpush.bf16.msra.mxu0 %v227
    %342 = vmatmul.bf16.gmra.mxu0 %v332
    %v343 = vpop.f32.mrf.mxu0
    %v344 = vadd.f32 0.0, %v343
    %v345 = vpop.f32.mrf.mxu0
    %346 = vdwg.mxu0
    %v347 = vadd.f32 %v327, %v344
    %v348 = vmul.f32 %v39, %v347
    %v349 = vtanh.pop %v348
    %v350 = vmul.f32 %v39, %v349
    %v351 = vadd.f32 %v350, %v40
    %v352 = vmul.f32 %v351, %v257
    %354 = vrot.lane.b32.xlu0 %v351, 104
    %v355 = vpop.permute.xlu0 %354
    %v357 = vmul.f32 %v351, %v355
    %359 = vrot.lane.b32.xlu0 %v357, 12
    %v360 = vpop.permute.xlu0 %359
    %v362 = vadd.f32 %v352, %v360
    %v363 = vtanh.pop %v362
    %365 = vrot.lane.b32.xlu0 %v363, 24
    %v366 = vpop.permute.xlu0 %365
    %v368 = vmul.f32 %v351, %v366
    %v369 = vpack.c.bf16 %v368, %v368
    %s370 = scalar_lea.vmem %s2, 8
    %v371 = vld [vmem:[%s370] sm:$0xf]
    %v372 = vld [vmem:[%s370 + $0x4] sm:$0x3]
    %v375 = vunpack.c.l.b16 %v371
    %v376 = vunpack.c.l.b16 %v372
    %v377 = vpack.c.b16 %v376, %v375
    %v379 = vsel %vm106, %v377, 0
    %381 = vmatpush.bf16.msra.mxu0 0
    %382 = vmatpush.bf16.msra.mxu0 0
    %383 = vmatpush.bf16.msra.mxu0 0
    %384 = vmatpush.bf16.msra.mxu0 0
    %385 = vmatpush.bf16.msra.mxu0 0
    %386 = vmatpush.bf16.msra.mxu0 0
    %387 = vmatpush.bf16.msra.mxu0 0
    %388 = vmatpush.bf16.msra.mxu0 %v379
    %389 = vmatmul.bf16.gmra.mxu0 %v332
    %v390 = vpop.f32.mrf.mxu0
    %v391 = vadd.f32 0.0, %v390
    %v392 = vpop.f32.mrf.mxu0
    %393 = vdwg.mxu0
    %v394 = vadd.f32 %v49, %v391
    %s395 = scalar_lea.vmem %s3, 16
    %v396 = vld [vmem:[%s395] sm:$0xf]
    %v397 = vld [vmem:[%s395 + $0x4] sm:$0x3]
    %v400 = vunpack.c.l.b16 %v396
    %v401 = vunpack.c.l.b16 %v397
    %v402 = vpack.c.b16 %v401, %v400
    %v404 = vsel %vm106, %v402, 0
    %406 = vmatpush.bf16.msra.mxu0 0
    %407 = vmatpush.bf16.msra.mxu0 0
    %408 = vmatpush.bf16.msra.mxu0 0
    %409 = vmatpush.bf16.msra.mxu0 0
    %410 = vmatpush.bf16.msra.mxu0 0
    %411 = vmatpush.bf16.msra.mxu0 0
    %412 = vmatpush.bf16.msra.mxu0 0
    %413 = vmatpush.bf16.msra.mxu0 %v404
    %414 = vmatmul.bf16.gmra.mxu0 %v104
    %v415 = vpop.f32.mrf.mxu0
    %v416 = vadd.f32 0.0, %v415
    %v417 = vpop.f32.mrf.mxu0
    %418 = vdwg.mxu0
    %v419 = vadd.f32 %v394, %v416
    %v420 = vmul.f32 %v39, %v419
    %v421 = vtanh.pop %v420
    %v422 = vmul.f32 %v39, %v421
    %v423 = vadd.f32 %v422, %v40
    %v424 = vmul.f32 %v423, 0.0
    %426 = vrot.lane.b32.xlu0 %v423, 104
    %v427 = vpop.permute.xlu0 %426
    %v429 = vmul.f32 %v423, %v427
    %431 = vrot.lane.b32.xlu0 %v429, 12
    %v432 = vpop.permute.xlu0 %431
    %v434 = vadd.f32 %v424, %v432
    %v435 = vtanh.pop %v434
    %437 = vrot.lane.b32.xlu0 %v435, 24
    %v438 = vpop.permute.xlu0 %437
    %v440 = vmul.f32 %v423, %v438
    %v441 = vpack.c.bf16 %v440, %v440
    %v443 = vrot.slane %v313, 2
    %444 = vrot.lane.b32.xlu0 %v443, 92
    %v445 = vpop.permute.xlu0 %444
    %v447 = vsel %vm102, %v445, 0
    %449 = vmatpush.bf16.msra.mxu0 0
    %450 = vmatpush.bf16.msra.mxu0 0
    %451 = vmatpush.bf16.msra.mxu0 0
    %452 = vmatpush.bf16.msra.mxu0 0
    %453 = vmatpush.bf16.msra.mxu0 0
    %454 = vmatpush.bf16.msra.mxu0 0
    %455 = vmatpush.bf16.msra.mxu0 0
    %456 = vmatpush.bf16.msra.mxu0 %v108
    %457 = vmatmul.bf16.gmra.mxu0 %v447
    %v458 = vpop.f32.mrf.mxu0
    %v459 = vadd.f32 0.0, %v458
    %v460 = vpop.f32.mrf.mxu0
    %461 = vdwg.mxu0
    %v463 = vrot.slane %v459, 2
    %v465 = vadd.f32 %v91, %v463
    %v466 = vmul.f32 %v39, %v465
    %v467 = vtanh.pop %v466
    %v468 = vmul.f32 %v39, %v467
    %v469 = vadd.f32 %v468, %v40
    %v471 = vrot.slane %v306, 6
    %v473 = vmul.f32 %v469, %v471
    %475 = vrot.lane.b32.xlu0 %v469, 104
    %v476 = vpop.permute.xlu0 %475
    %v478 = vmul.f32 %v469, %v476
    %480 = vrot.lane.b32.xlu0 %v478, 12
    %v481 = vpop.permute.xlu0 %480
    %v483 = vadd.f32 %v473, %v481
    %v484 = vtanh.pop %v483
    %486 = vrot.lane.b32.xlu0 %v484, 24
    %v487 = vpop.permute.xlu0 %486
    %v489 = vmul.f32 %v469, %v487
    %v490 = vpack.c.bf16 %v489, %v489
    %491 = vmatpush.bf16.msra.mxu0 0
    %492 = vmatpush.bf16.msra.mxu0 0
    %493 = vmatpush.bf16.msra.mxu0 0
    %494 = vmatpush.bf16.msra.mxu0 0
    %495 = vmatpush.bf16.msra.mxu0 0
    %496 = vmatpush.bf16.msra.mxu0 0
    %497 = vmatpush.bf16.msra.mxu0 0
    %498 = vmatpush.bf16.msra.mxu0 %v202
    %499 = vmatmul.bf16.gmra.mxu0 %v447
    %v500 = vpop.f32.mrf.mxu0
    %v501 = vadd.f32 0.0, %v500
    %v502 = vpop.f32.mrf.mxu0
    %503 = vdwg.mxu0
    %v504 = vadd.f32 %v44, %v501
    %506 = vrot.lane.b32.xlu0 %v369, 92
    %v507 = vpop.permute.xlu0 %506
    %v509 = vsel %vm102, %v507, 0
    %511 = vmatpush.bf16.msra.mxu0 0
    %512 = vmatpush.bf16.msra.mxu0 0
    %513 = vmatpush.bf16.msra.mxu0 0
    %514 = vmatpush.bf16.msra.mxu0 0
    %515 = vmatpush.bf16.msra.mxu0 0
    %516 = vmatpush.bf16.msra.mxu0 0
    %517 = vmatpush.bf16.msra.mxu0 0
    %518 = vmatpush.bf16.msra.mxu0 %v227
    %519 = vmatmul.bf16.gmra.mxu0 %v509
    %v520 = vpop.f32.mrf.mxu0
    %v521 = vadd.f32 0.0, %v520
    %v522 = vpop.f32.mrf.mxu0
    %523 = vdwg.mxu0
    %v524 = vadd.f32 %v504, %v521
    %v525 = vmul.f32 %v39, %v524
    %v526 = vtanh.pop %v525
    %v527 = vmul.f32 %v39, %v526
    %v528 = vadd.f32 %v527, %v40
    %v529 = vmul.f32 %v528, %v362
    %531 = vrot.lane.b32.xlu0 %v528, 104
    %v532 = vpop.permute.xlu0 %531
    %v534 = vmul.f32 %v528, %v532
    %536 = vrot.lane.b32.xlu0 %v534, 12
    %v537 = vpop.permute.xlu0 %536
    %v539 = vadd.f32 %v529, %v537
    %v540 = vtanh.pop %v539
    %542 = vrot.lane.b32.xlu0 %v540, 24
    %v543 = vpop.permute.xlu0 %542
    %v545 = vmul.f32 %v528, %v543
    %v546 = vpack.c.bf16 %v545, %v545
    %547 = vmatpush.bf16.msra.mxu0 0
    %548 = vmatpush.bf16.msra.mxu0 0
    %549 = vmatpush.bf16.msra.mxu0 0
    %550 = vmatpush.bf16.msra.mxu0 0
    %551 = vmatpush.bf16.msra.mxu0 0
    %552 = vmatpush.bf16.msra.mxu0 0
    %553 = vmatpush.bf16.msra.mxu0 0
    %554 = vmatpush.bf16.msra.mxu0 %v379
    %555 = vmatmul.bf16.gmra.mxu0 %v509
    %v556 = vpop.f32.mrf.mxu0
    %v557 = vadd.f32 0.0, %v556
    %v558 = vpop.f32.mrf.mxu0
    %559 = vdwg.mxu0
    %v560 = vadd.f32 %v49, %v557
    %562 = vrot.lane.b32.xlu0 %v441, 92
    %v563 = vpop.permute.xlu0 %562
    %v565 = vsel %vm102, %v563, 0
    %567 = vmatpush.bf16.msra.mxu0 0
    %568 = vmatpush.bf16.msra.mxu0 0
    %569 = vmatpush.bf16.msra.mxu0 0
    %570 = vmatpush.bf16.msra.mxu0 0
    %571 = vmatpush.bf16.msra.mxu0 0
    %572 = vmatpush.bf16.msra.mxu0 0
    %573 = vmatpush.bf16.msra.mxu0 0
    %574 = vmatpush.bf16.msra.mxu0 %v404
    %575 = vmatmul.bf16.gmra.mxu0 %v565
    %v576 = vpop.f32.mrf.mxu0
    %v577 = vadd.f32 0.0, %v576
    %v578 = vpop.f32.mrf.mxu0
    %579 = vdwg.mxu0
    %v580 = vadd.f32 %v560, %v577
    %v581 = vmul.f32 %v39, %v580
    %v582 = vtanh.pop %v581
    %v583 = vmul.f32 %v39, %v582
    %v584 = vadd.f32 %v583, %v40
    %v585 = vmul.f32 %v584, %v434
    %587 = vrot.lane.b32.xlu0 %v584, 104
    %v588 = vpop.permute.xlu0 %587
    %v590 = vmul.f32 %v584, %v588
    %592 = vrot.lane.b32.xlu0 %v590, 12
    %v593 = vpop.permute.xlu0 %592
    %v595 = vadd.f32 %v585, %v593
    %v596 = vtanh.pop %v595
    %598 = vrot.lane.b32.xlu0 %v596, 24
    %v599 = vpop.permute.xlu0 %598
    %v601 = vmul.f32 %v584, %v599
    %v602 = vpack.c.bf16 %v601, %v601
    %s603 = scalar_lea.vmem %s2, 16
    %v604 = vld [vmem:[%s603] sm:$0xf]
    %v605 = vld [vmem:[%s603 + $0x4] sm:$0x3]
    %v608 = vunpack.c.l.b16 %v604
    %v609 = vunpack.c.l.b16 %v605
    %v610 = vpack.c.b16 %v609, %v608
    %v612 = vsel %vm106, %v610, 0
    %614 = vmatpush.bf16.msra.mxu0 0
    %615 = vmatpush.bf16.msra.mxu0 0
    %616 = vmatpush.bf16.msra.mxu0 0
    %617 = vmatpush.bf16.msra.mxu0 0
    %618 = vmatpush.bf16.msra.mxu0 0
    %619 = vmatpush.bf16.msra.mxu0 0
    %620 = vmatpush.bf16.msra.mxu0 0
    %621 = vmatpush.bf16.msra.mxu0 %v612
    %622 = vmatmul.bf16.gmra.mxu0 %v565
    %v623 = vpop.f32.mrf.mxu0
    %v624 = vadd.f32 0.0, %v623
    %v625 = vpop.f32.mrf.mxu0
    %626 = vdwg.mxu0
    %v627 = vadd.f32 %v54, %v624
    %s628 = scalar_lea.vmem %s3, 24
    %v629 = vld [vmem:[%s628] sm:$0xf]
    %v630 = vld [vmem:[%s628 + $0x4] sm:$0x3]
    %v633 = vunpack.c.l.b16 %v629
    %v634 = vunpack.c.l.b16 %v630
    %v635 = vpack.c.b16 %v634, %v633
    %v637 = vsel %vm106, %v635, 0
    %639 = vmatpush.bf16.msra.mxu0 0
    %640 = vmatpush.bf16.msra.mxu0 0
    %641 = vmatpush.bf16.msra.mxu0 0
    %642 = vmatpush.bf16.msra.mxu0 0
    %643 = vmatpush.bf16.msra.mxu0 0
    %644 = vmatpush.bf16.msra.mxu0 0
    %645 = vmatpush.bf16.msra.mxu0 0
    %646 = vmatpush.bf16.msra.mxu0 %v637
    %647 = vmatmul.bf16.gmra.mxu0 %v104
    %v648 = vpop.f32.mrf.mxu0
    %v649 = vadd.f32 0.0, %v648
    %v650 = vpop.f32.mrf.mxu0
    %651 = vdwg.mxu0
    %v652 = vadd.f32 %v627, %v649
    %v653 = vmul.f32 %v39, %v652
    %v654 = vtanh.pop %v653
    %v655 = vmul.f32 %v39, %v654
    %v656 = vadd.f32 %v655, %v40
    %v657 = vmul.f32 %v656, 0.0
    %659 = vrot.lane.b32.xlu0 %v656, 104
    %v660 = vpop.permute.xlu0 %659
    %v662 = vmul.f32 %v656, %v660
    %664 = vrot.lane.b32.xlu0 %v662, 12
    %v665 = vpop.permute.xlu0 %664
    %v667 = vadd.f32 %v657, %v665
    %v668 = vtanh.pop %v667
    %670 = vrot.lane.b32.xlu0 %v668, 24
    %v671 = vpop.permute.xlu0 %670
    %v673 = vmul.f32 %v656, %v671
    %v674 = vpack.c.bf16 %v673, %v673
    %v676 = vrot.slane %v490, 3
    %677 = vrot.lane.b32.xlu0 %v676, 92
    %v678 = vpop.permute.xlu0 %677
    %v680 = vsel %vm102, %v678, 0
    %682 = vmatpush.bf16.msra.mxu0 0
    %683 = vmatpush.bf16.msra.mxu0 0
    %684 = vmatpush.bf16.msra.mxu0 0
    %685 = vmatpush.bf16.msra.mxu0 0
    %686 = vmatpush.bf16.msra.mxu0 0
    %687 = vmatpush.bf16.msra.mxu0 0
    %688 = vmatpush.bf16.msra.mxu0 0
    %689 = vmatpush.bf16.msra.mxu0 %v108
    %690 = vmatmul.bf16.gmra.mxu0 %v680
    %v691 = vpop.f32.mrf.mxu0
    %v692 = vadd.f32 0.0, %v691
    %v693 = vpop.f32.mrf.mxu0
    %694 = vdwg.mxu0
    %v695 = vadd.f32 %v93, %v692
    %v696 = vmul.f32 %v39, %v695
    %v697 = vtanh.pop %v696
    %v698 = vmul.f32 %v39, %v697
    %v699 = vadd.f32 %v698, %v40
    %v701 = vrot.slane %v483, 6
    %v703 = vmul.f32 %v699, %v701
    %705 = vrot.lane.b32.xlu0 %v699, 104
    %v706 = vpop.permute.xlu0 %705
    %v708 = vmul.f32 %v699, %v706
    %710 = vrot.lane.b32.xlu0 %v708, 12
    %v711 = vpop.permute.xlu0 %710
    %v713 = vadd.f32 %v703, %v711
    %v714 = vtanh.pop %v713
    %716 = vrot.lane.b32.xlu0 %v714, 24
    %v717 = vpop.permute.xlu0 %716
    %v719 = vmul.f32 %v699, %v717
    %v720 = vpack.c.bf16 %v719, %v719
    %721 = vmatpush.bf16.msra.mxu0 0
    %722 = vmatpush.bf16.msra.mxu0 0
    %723 = vmatpush.bf16.msra.mxu0 0
    %724 = vmatpush.bf16.msra.mxu0 0
    %725 = vmatpush.bf16.msra.mxu0 0
    %726 = vmatpush.bf16.msra.mxu0 0
    %727 = vmatpush.bf16.msra.mxu0 0
    %728 = vmatpush.bf16.msra.mxu0 %v202
    %729 = vmatmul.bf16.gmra.mxu0 %v680
    %v730 = vpop.f32.mrf.mxu0
    %v731 = vadd.f32 0.0, %v730
    %v732 = vpop.f32.mrf.mxu0
    %733 = vdwg.mxu0
    %v734 = vadd.f32 %v44, %v731
    %736 = vrot.lane.b32.xlu0 %v546, 92
    %v737 = vpop.permute.xlu0 %736
    %v739 = vsel %vm102, %v737, 0
    %741 = vmatpush.bf16.msra.mxu0 0
    %742 = vmatpush.bf16.msra.mxu0 0
    %743 = vmatpush.bf16.msra.mxu0 0
    %744 = vmatpush.bf16.msra.mxu0 0
    %745 = vmatpush.bf16.msra.mxu0 0
    %746 = vmatpush.bf16.msra.mxu0 0
    %747 = vmatpush.bf16.msra.mxu0 0
    %748 = vmatpush.bf16.msra.mxu0 %v227
    %749 = vmatmul.bf16.gmra.mxu0 %v739
    %v750 = vpop.f32.mrf.mxu0
    %v751 = vadd.f32 0.0, %v750
    %v752 = vpop.f32.mrf.mxu0
    %753 = vdwg.mxu0
    %v754 = vadd.f32 %v734, %v751
    %v755 = vmul.f32 %v39, %v754
    %v756 = vtanh.pop %v755
    %v757 = vmul.f32 %v39, %v756
    %v758 = vadd.f32 %v757, %v40
    %v759 = vmul.f32 %v758, %v539
    %761 = vrot.lane.b32.xlu0 %v758, 104
    %v762 = vpop.permute.xlu0 %761
    %v764 = vmul.f32 %v758, %v762
    %766 = vrot.lane.b32.xlu0 %v764, 12
    %v767 = vpop.permute.xlu0 %766
    %v769 = vadd.f32 %v759, %v767
    %v770 = vtanh.pop %v769
    %772 = vrot.lane.b32.xlu0 %v770, 24
    %v773 = vpop.permute.xlu0 %772
    %v775 = vmul.f32 %v758, %v773
    %v776 = vpack.c.bf16 %v775, %v775
    %777 = vmatpush.bf16.msra.mxu0 0
    %778 = vmatpush.bf16.msra.mxu0 0
    %779 = vmatpush.bf16.msra.mxu0 0
    %780 = vmatpush.bf16.msra.mxu0 0
    %781 = vmatpush.bf16.msra.mxu0 0
    %782 = vmatpush.bf16.msra.mxu0 0
    %783 = vmatpush.bf16.msra.mxu0 0
    %784 = vmatpush.bf16.msra.mxu0 %v379
    %785 = vmatmul.bf16.gmra.mxu0 %v739
    %v786 = vpop.f32.mrf.mxu0
    %v787 = vadd.f32 0.0, %v786
    %v788 = vpop.f32.mrf.mxu0
    %789 = vdwg.mxu0
    %v790 = vadd.f32 %v49, %v787
    %792 = vrot.lane.b32.xlu0 %v602, 92
    %v793 = vpop.permute.xlu0 %792
    %v795 = vsel %vm102, %v793, 0
    %797 = vmatpush.bf16.msra.mxu0 0
    %798 = vmatpush.bf16.msra.mxu0 0
    %799 = vmatpush.bf16.msra.mxu0 0
    %800 = vmatpush.bf16.msra.mxu0 0
    %801 = vmatpush.bf16.msra.mxu0 0
    %802 = vmatpush.bf16.msra.mxu0 0
    %803 = vmatpush.bf16.msra.mxu0 0
    %804 = vmatpush.bf16.msra.mxu0 %v404
    %805 = vmatmul.bf16.gmra.mxu0 %v795
    %v806 = vpop.f32.mrf.mxu0
    %v807 = vadd.f32 0.0, %v806
    %v808 = vpop.f32.mrf.mxu0
    %809 = vdwg.mxu0
    %v810 = vadd.f32 %v790, %v807
    %v811 = vmul.f32 %v39, %v810
    %v812 = vtanh.pop %v811
    %v813 = vmul.f32 %v39, %v812
    %v814 = vadd.f32 %v813, %v40
    %v815 = vmul.f32 %v814, %v595
    %817 = vrot.lane.b32.xlu0 %v814, 104
    %v818 = vpop.permute.xlu0 %817
    %v820 = vmul.f32 %v814, %v818
    %822 = vrot.lane.b32.xlu0 %v820, 12
    %v823 = vpop.permute.xlu0 %822
    %v825 = vadd.f32 %v815, %v823
    %v826 = vtanh.pop %v825
    %828 = vrot.lane.b32.xlu0 %v826, 24
    %v829 = vpop.permute.xlu0 %828
    %v831 = vmul.f32 %v814, %v829
    %v832 = vpack.c.bf16 %v831, %v831
    %833 = vmatpush.bf16.msra.mxu0 0
    %834 = vmatpush.bf16.msra.mxu0 0
    %835 = vmatpush.bf16.msra.mxu0 0
    %836 = vmatpush.bf16.msra.mxu0 0
    %837 = vmatpush.bf16.msra.mxu0 0
    %838 = vmatpush.bf16.msra.mxu0 0
    %839 = vmatpush.bf16.msra.mxu0 0
    %840 = vmatpush.bf16.msra.mxu0 %v612
    %841 = vmatmul.bf16.gmra.mxu0 %v795
    %v842 = vpop.f32.mrf.mxu0
    %v843 = vadd.f32 0.0, %v842
    %v844 = vpop.f32.mrf.mxu0
    %845 = vdwg.mxu0
    %v846 = vadd.f32 %v54, %v843
    %848 = vrot.lane.b32.xlu0 %v674, 92
    %v849 = vpop.permute.xlu0 %848
    %v851 = vsel %vm102, %v849, 0
    %853 = vmatpush.bf16.msra.mxu0 0
    %854 = vmatpush.bf16.msra.mxu0 0
    %855 = vmatpush.bf16.msra.mxu0 0
    %856 = vmatpush.bf16.msra.mxu0 0
    %857 = vmatpush.bf16.msra.mxu0 0
    %858 = vmatpush.bf16.msra.mxu0 0
    %859 = vmatpush.bf16.msra.mxu0 0
    %860 = vmatpush.bf16.msra.mxu0 %v637
    %861 = vmatmul.bf16.gmra.mxu0 %v851
    %v862 = vpop.f32.mrf.mxu0
    %v863 = vadd.f32 0.0, %v862
    %v864 = vpop.f32.mrf.mxu0
    %865 = vdwg.mxu0
    %v866 = vadd.f32 %v846, %v863
    %v867 = vmul.f32 %v39, %v866
    %v868 = vtanh.pop %v867
    %v869 = vmul.f32 %v39, %v868
    %v870 = vadd.f32 %v869, %v40
    %v871 = vmul.f32 %v870, %v667
    %873 = vrot.lane.b32.xlu0 %v870, 104
    %v874 = vpop.permute.xlu0 %873
    %v876 = vmul.f32 %v870, %v874
    %878 = vrot.lane.b32.xlu0 %v876, 12
    %v879 = vpop.permute.xlu0 %878
    %v881 = vadd.f32 %v871, %v879
    %v882 = vtanh.pop %v881
    %884 = vrot.lane.b32.xlu0 %v882, 24
    %v885 = vpop.permute.xlu0 %884
    %v887 = vmul.f32 %v870, %v885
    %v888 = vpack.c.bf16 %v887, %v887
    %s889 = scalar_lea.vmem %s2, 24
    %v890 = vld [vmem:[%s889] sm:$0xf]
    %v891 = vld [vmem:[%s889 + $0x4] sm:$0x3]
    %v894 = vunpack.c.l.b16 %v890
    %v895 = vunpack.c.l.b16 %v891
    %v896 = vpack.c.b16 %v895, %v894
    %v898 = vsel %vm106, %v896, 0
    %900 = vmatpush.bf16.msra.mxu0 0
    %901 = vmatpush.bf16.msra.mxu0 0
    %902 = vmatpush.bf16.msra.mxu0 0
    %903 = vmatpush.bf16.msra.mxu0 0
    %904 = vmatpush.bf16.msra.mxu0 0
    %905 = vmatpush.bf16.msra.mxu0 0
    %906 = vmatpush.bf16.msra.mxu0 0
    %907 = vmatpush.bf16.msra.mxu0 %v898
    %908 = vmatmul.bf16.gmra.mxu0 %v851
    %v909 = vpop.f32.mrf.mxu0
    %v910 = vadd.f32 0.0, %v909
    %v911 = vpop.f32.mrf.mxu0
    %912 = vdwg.mxu0
    %v913 = vadd.f32 %v59, %v910
    %s914 = scalar_lea.vmem %s3, 32
    %v915 = vld [vmem:[%s914] sm:$0xf]
    %v916 = vld [vmem:[%s914 + $0x4] sm:$0x3]
    %v919 = vunpack.c.l.b16 %v915
    %v920 = vunpack.c.l.b16 %v916
    %v921 = vpack.c.b16 %v920, %v919
    %v923 = vsel %vm106, %v921, 0
    %925 = vmatpush.bf16.msra.mxu0 0
    %926 = vmatpush.bf16.msra.mxu0 0
    %927 = vmatpush.bf16.msra.mxu0 0
    %928 = vmatpush.bf16.msra.mxu0 0
    %929 = vmatpush.bf16.msra.mxu0 0
    %930 = vmatpush.bf16.msra.mxu0 0
    %931 = vmatpush.bf16.msra.mxu0 0
    %932 = vmatpush.bf16.msra.mxu0 %v923
    %933 = vmatmul.bf16.gmra.mxu0 %v104
    %v934 = vpop.f32.mrf.mxu0
    %v935 = vadd.f32 0.0, %v934
    %v936 = vpop.f32.mrf.mxu0
    %937 = vdwg.mxu0
    %v938 = vadd.f32 %v913, %v935
    %v939 = vmul.f32 %v39, %v938
    %v940 = vtanh.pop %v939
    %v941 = vmul.f32 %v39, %v940
    %v942 = vadd.f32 %v941, %v40
    %v943 = vmul.f32 %v942, 0.0
    %945 = vrot.lane.b32.xlu0 %v942, 104
    %v946 = vpop.permute.xlu0 %945
    %v948 = vmul.f32 %v942, %v946
    %950 = vrot.lane.b32.xlu0 %v948, 12
    %v951 = vpop.permute.xlu0 %950
    %v953 = vadd.f32 %v943, %v951
    %v954 = vtanh.pop %v953
    %956 = vrot.lane.b32.xlu0 %v954, 24
    %v957 = vpop.permute.xlu0 %956
    %v959 = vmul.f32 %v942, %v957
    %v960 = vpack.c.bf16 %v959, %v959
    %962 = vrot.lane.b32.xlu0 %v720, 92
    %v963 = vpop.permute.xlu0 %962
    %v965 = vsel %vm102, %v963, 0
    %967 = vmatpush.bf16.msra.mxu0 0
    %968 = vmatpush.bf16.msra.mxu0 0
    %969 = vmatpush.bf16.msra.mxu0 0
    %970 = vmatpush.bf16.msra.mxu0 0
    %971 = vmatpush.bf16.msra.mxu0 0
    %972 = vmatpush.bf16.msra.mxu0 0
    %973 = vmatpush.bf16.msra.mxu0 0
    %974 = vmatpush.bf16.msra.mxu0 %v108
    %975 = vmatmul.bf16.gmra.mxu0 %v965
    %v976 = vpop.f32.mrf.mxu0
    %v977 = vadd.f32 0.0, %v976
    %v978 = vpop.f32.mrf.mxu0
    %979 = vdwg.mxu0
    %v981 = vrot.slane %v977, 6
    %v983 = vadd.f32 %v93, %v981
    %v984 = vmul.f32 %v39, %v983
    %v985 = vtanh.pop %v984
    %v986 = vmul.f32 %v39, %v985
    %v987 = vadd.f32 %v986, %v40
    %v989 = vrot.slane %v713, 6
    %v991 = vmul.f32 %v987, %v989
    %993 = vrot.lane.b32.xlu0 %v987, 104
    %v994 = vpop.permute.xlu0 %993
    %v996 = vmul.f32 %v987, %v994
    %998 = vrot.lane.b32.xlu0 %v996, 12
    %v999 = vpop.permute.xlu0 %998
    %v1001 = vadd.f32 %v991, %v999
    %v1002 = vtanh.pop %v1001
    %1004 = vrot.lane.b32.xlu0 %v1002, 24
    %v1005 = vpop.permute.xlu0 %1004
    %v1007 = vmul.f32 %v987, %v1005
    %v1008 = vpack.c.bf16 %v1007, %v1007
    %1009 = vmatpush.bf16.msra.mxu0 0
    %1010 = vmatpush.bf16.msra.mxu0 0
    %1011 = vmatpush.bf16.msra.mxu0 0
    %1012 = vmatpush.bf16.msra.mxu0 0
    %1013 = vmatpush.bf16.msra.mxu0 0
    %1014 = vmatpush.bf16.msra.mxu0 0
    %1015 = vmatpush.bf16.msra.mxu0 0
    %1016 = vmatpush.bf16.msra.mxu0 %v202
    %1017 = vmatmul.bf16.gmra.mxu0 %v965
    %v1018 = vpop.f32.mrf.mxu0
    %v1019 = vadd.f32 0.0, %v1018
    %v1020 = vpop.f32.mrf.mxu0
    %1021 = vdwg.mxu0
    %v1022 = vadd.f32 %v44, %v1019
    %1024 = vrot.lane.b32.xlu0 %v776, 92
    %v1025 = vpop.permute.xlu0 %1024
    %v1027 = vsel %vm102, %v1025, 0
    %1029 = vmatpush.bf16.msra.mxu0 0
    %1030 = vmatpush.bf16.msra.mxu0 0
    %1031 = vmatpush.bf16.msra.mxu0 0
    %1032 = vmatpush.bf16.msra.mxu0 0
    %1033 = vmatpush.bf16.msra.mxu0 0
    %1034 = vmatpush.bf16.msra.mxu0 0
    %1035 = vmatpush.bf16.msra.mxu0 0
    %1036 = vmatpush.bf16.msra.mxu0 %v227
    %1037 = vmatmul.bf16.gmra.mxu0 %v1027
    %v1038 = vpop.f32.mrf.mxu0
    %v1039 = vadd.f32 0.0, %v1038
    %v1040 = vpop.f32.mrf.mxu0
    %1041 = vdwg.mxu0
    %v1042 = vadd.f32 %v1022, %v1039
    %v1043 = vmul.f32 %v39, %v1042
    %v1044 = vtanh.pop %v1043
    %v1045 = vmul.f32 %v39, %v1044
    %v1046 = vadd.f32 %v1045, %v40
    %v1047 = vmul.f32 %v1046, %v769
    %1049 = vrot.lane.b32.xlu0 %v1046, 104
    %v1050 = vpop.permute.xlu0 %1049
    %v1052 = vmul.f32 %v1046, %v1050
    %1054 = vrot.lane.b32.xlu0 %v1052, 12
    %v1055 = vpop.permute.xlu0 %1054
    %v1057 = vadd.f32 %v1047, %v1055
    %v1058 = vtanh.pop %v1057
    %1060 = vrot.lane.b32.xlu0 %v1058, 24
    %v1061 = vpop.permute.xlu0 %1060
    %v1063 = vmul.f32 %v1046, %v1061
    %v1064 = vpack.c.bf16 %v1063, %v1063
    %1065 = vmatpush.bf16.msra.mxu0 0
    %1066 = vmatpush.bf16.msra.mxu0 0
    %1067 = vmatpush.bf16.msra.mxu0 0
    %1068 = vmatpush.bf16.msra.mxu0 0
    %1069 = vmatpush.bf16.msra.mxu0 0
    %1070 = vmatpush.bf16.msra.mxu0 0
    %1071 = vmatpush.bf16.msra.mxu0 0
    %1072 = vmatpush.bf16.msra.mxu0 %v379
    %1073 = vmatmul.bf16.gmra.mxu0 %v1027
    %v1074 = vpop.f32.mrf.mxu0
    %v1075 = vadd.f32 0.0, %v1074
    %v1076 = vpop.f32.mrf.mxu0
    %1077 = vdwg.mxu0
    %v1078 = vadd.f32 %v49, %v1075
    %1080 = vrot.lane.b32.xlu0 %v832, 92
    %v1081 = vpop.permute.xlu0 %1080
    %v1083 = vsel %vm102, %v1081, 0
    %1085 = vmatpush.bf16.msra.mxu0 0
    %1086 = vmatpush.bf16.msra.mxu0 0
    %1087 = vmatpush.bf16.msra.mxu0 0
    %1088 = vmatpush.bf16.msra.mxu0 0
    %1089 = vmatpush.bf16.msra.mxu0 0
    %1090 = vmatpush.bf16.msra.mxu0 0
    %1091 = vmatpush.bf16.msra.mxu0 0
    %1092 = vmatpush.bf16.msra.mxu0 %v404
    %1093 = vmatmul.bf16.gmra.mxu0 %v1083
    %v1094 = vpop.f32.mrf.mxu0
    %v1095 = vadd.f32 0.0, %v1094
    %v1096 = vpop.f32.mrf.mxu0
    %1097 = vdwg.mxu0
    %v1098 = vadd.f32 %v1078, %v1095
    %v1099 = vmul.f32 %v39, %v1098
    %v1100 = vtanh.pop %v1099
    %v1101 = vmul.f32 %v39, %v1100
    %v1102 = vadd.f32 %v1101, %v40
    %v1103 = vmul.f32 %v1102, %v825
    %1105 = vrot.lane.b32.xlu0 %v1102, 104
    %v1106 = vpop.permute.xlu0 %1105
    %v1108 = vmul.f32 %v1102, %v1106
    %1110 = vrot.lane.b32.xlu0 %v1108, 12
    %v1111 = vpop.permute.xlu0 %1110
    %v1113 = vadd.f32 %v1103, %v1111
    %v1114 = vtanh.pop %v1113
    %1116 = vrot.lane.b32.xlu0 %v1114, 24
    %v1117 = vpop.permute.xlu0 %1116
    %v1119 = vmul.f32 %v1102, %v1117
    %v1120 = vpack.c.bf16 %v1119, %v1119
    %1121 = vmatpush.bf16.msra.mxu0 0
    %1122 = vmatpush.bf16.msra.mxu0 0
    %1123 = vmatpush.bf16.msra.mxu0 0
    %1124 = vmatpush.bf16.msra.mxu0 0
    %1125 = vmatpush.bf16.msra.mxu0 0
    %1126 = vmatpush.bf16.msra.mxu0 0
    %1127 = vmatpush.bf16.msra.mxu0 0
    %1128 = vmatpush.bf16.msra.mxu0 %v612
    %1129 = vmatmul.bf16.gmra.mxu0 %v1083
    %v1130 = vpop.f32.mrf.mxu0
    %v1131 = vadd.f32 0.0, %v1130
    %v1132 = vpop.f32.mrf.mxu0
    %1133 = vdwg.mxu0
    %v1134 = vadd.f32 %v54, %v1131
    %1136 = vrot.lane.b32.xlu0 %v888, 92
    %v1137 = vpop.permute.xlu0 %1136
    %v1139 = vsel %vm102, %v1137, 0
    %1141 = vmatpush.bf16.msra.mxu0 0
    %1142 = vmatpush.bf16.msra.mxu0 0
    %1143 = vmatpush.bf16.msra.mxu0 0
    %1144 = vmatpush.bf16.msra.mxu0 0
    %1145 = vmatpush.bf16.msra.mxu0 0
    %1146 = vmatpush.bf16.msra.mxu0 0
    %1147 = vmatpush.bf16.msra.mxu0 0
    %1148 = vmatpush.bf16.msra.mxu0 %v637
    %1149 = vmatmul.bf16.gmra.mxu0 %v1139
    %v1150 = vpop.f32.mrf.mxu0
    %v1151 = vadd.f32 0.0, %v1150
    %v1152 = vpop.f32.mrf.mxu0
    %1153 = vdwg.mxu0
    %v1154 = vadd.f32 %v1134, %v1151
    %v1155 = vmul.f32 %v39, %v1154
    %v1156 = vtanh.pop %v1155
    %v1157 = vmul.f32 %v39, %v1156
    %v1158 = vadd.f32 %v1157, %v40
    %v1159 = vmul.f32 %v1158, %v881
    %1161 = vrot.lane.b32.xlu0 %v1158, 104
    %v1162 = vpop.permute.xlu0 %1161
    %v1164 = vmul.f32 %v1158, %v1162
    %1166 = vrot.lane.b32.xlu0 %v1164, 12
    %v1167 = vpop.permute.xlu0 %1166
    %v1169 = vadd.f32 %v1159, %v1167
    %v1170 = vtanh.pop %v1169
    %1172 = vrot.lane.b32.xlu0 %v1170, 24
    %v1173 = vpop.permute.xlu0 %1172
    %v1175 = vmul.f32 %v1158, %v1173
    %v1176 = vpack.c.bf16 %v1175, %v1175
    %1177 = vmatpush.bf16.msra.mxu0 0
    %1178 = vmatpush.bf16.msra.mxu0 0
    %1179 = vmatpush.bf16.msra.mxu0 0
    %1180 = vmatpush.bf16.msra.mxu0 0
    %1181 = vmatpush.bf16.msra.mxu0 0
    %1182 = vmatpush.bf16.msra.mxu0 0
    %1183 = vmatpush.bf16.msra.mxu0 0
    %1184 = vmatpush.bf16.msra.mxu0 %v898
    %1185 = vmatmul.bf16.gmra.mxu0 %v1139
    %v1186 = vpop.f32.mrf.mxu0
    %v1187 = vadd.f32 0.0, %v1186
    %v1188 = vpop.f32.mrf.mxu0
    %1189 = vdwg.mxu0
    %v1190 = vadd.f32 %v59, %v1187
    %1192 = vrot.lane.b32.xlu0 %v960, 92
    %v1193 = vpop.permute.xlu0 %1192
    %v1195 = vsel %vm102, %v1193, 0
    %1197 = vmatpush.bf16.msra.mxu0 0
    %1198 = vmatpush.bf16.msra.mxu0 0
    %1199 = vmatpush.bf16.msra.mxu0 0
    %1200 = vmatpush.bf16.msra.mxu0 0
    %1201 = vmatpush.bf16.msra.mxu0 0
    %1202 = vmatpush.bf16.msra.mxu0 0
    %1203 = vmatpush.bf16.msra.mxu0 0
    %1204 = vmatpush.bf16.msra.mxu0 %v923
    %1205 = vmatmul.bf16.gmra.mxu0 %v1195
    %v1206 = vpop.f32.mrf.mxu0
    %v1207 = vadd.f32 0.0, %v1206
    %v1208 = vpop.f32.mrf.mxu0
    %1209 = vdwg.mxu0
    %v1210 = vadd.f32 %v1190, %v1207
    %v1211 = vmul.f32 %v39, %v1210
    %v1212 = vtanh.pop %v1211
    %v1213 = vmul.f32 %v39, %v1212
    %v1214 = vadd.f32 %v1213, %v40
    %v1215 = vmul.f32 %v1214, %v953
    %1217 = vrot.lane.b32.xlu0 %v1214, 104
    %v1218 = vpop.permute.xlu0 %1217
    %v1220 = vmul.f32 %v1214, %v1218
    %1222 = vrot.lane.b32.xlu0 %v1220, 12
    %v1223 = vpop.permute.xlu0 %1222
    %v1225 = vadd.f32 %v1215, %v1223
    %v1226 = vtanh.pop %v1225
    %1228 = vrot.lane.b32.xlu0 %v1226, 24
    %v1229 = vpop.permute.xlu0 %1228
    %v1231 = vmul.f32 %v1214, %v1229
    %v1232 = vpack.c.bf16 %v1231, %v1231
    %v1234 = vrot.slane %v1008, 1
    %1235 = vrot.lane.b32.xlu0 %v1234, 92
    %v1236 = vpop.permute.xlu0 %1235
    %v1238 = vsel %vm102, %v1236, 0
    %1240 = vmatpush.bf16.msra.mxu0 0
    %1241 = vmatpush.bf16.msra.mxu0 0
    %1242 = vmatpush.bf16.msra.mxu0 0
    %1243 = vmatpush.bf16.msra.mxu0 0
    %1244 = vmatpush.bf16.msra.mxu0 0
    %1245 = vmatpush.bf16.msra.mxu0 0
    %1246 = vmatpush.bf16.msra.mxu0 0
    %1247 = vmatpush.bf16.msra.mxu0 %v108
    %1248 = vmatmul.bf16.gmra.mxu0 %v1238
    %v1249 = vpop.f32.mrf.mxu0
    %v1250 = vadd.f32 0.0, %v1249
    %v1251 = vpop.f32.mrf.mxu0
    %1252 = vdwg.mxu0
    %v1254 = vrot.slane %v1250, 4
    %v1256 = vadd.f32 %v93, %v1254
    %v1257 = vmul.f32 %v39, %v1256
    %v1258 = vtanh.pop %v1257
    %v1259 = vmul.f32 %v39, %v1258
    %v1260 = vadd.f32 %v1259, %v40
    %v1262 = vrot.slane %v1001, 6
    %v1264 = vmul.f32 %v1260, %v1262
    %1266 = vrot.lane.b32.xlu0 %v1260, 104
    %v1267 = vpop.permute.xlu0 %1266
    %v1269 = vmul.f32 %v1260, %v1267
    %1271 = vrot.lane.b32.xlu0 %v1269, 12
    %v1272 = vpop.permute.xlu0 %1271
    %v1274 = vadd.f32 %v1264, %v1272
    %v1275 = vtanh.pop %v1274
    %1277 = vrot.lane.b32.xlu0 %v1275, 24
    %v1278 = vpop.permute.xlu0 %1277
    %v1280 = vmul.f32 %v1260, %v1278
    %v1281 = vpack.c.bf16 %v1280, %v1280
    %1282 = vmatpush.bf16.msra.mxu0 0
    %1283 = vmatpush.bf16.msra.mxu0 0
    %1284 = vmatpush.bf16.msra.mxu0 0
    %1285 = vmatpush.bf16.msra.mxu0 0
    %1286 = vmatpush.bf16.msra.mxu0 0
    %1287 = vmatpush.bf16.msra.mxu0 0
    %1288 = vmatpush.bf16.msra.mxu0 0
    %1289 = vmatpush.bf16.msra.mxu0 %v202
    %1290 = vmatmul.bf16.gmra.mxu0 %v1238
    %v1291 = vpop.f32.mrf.mxu0
    %v1292 = vadd.f32 0.0, %v1291
    %v1293 = vpop.f32.mrf.mxu0
    %1294 = vdwg.mxu0
    %v1295 = vadd.f32 %v44, %v1292
    %1297 = vrot.lane.b32.xlu0 %v1064, 92
    %v1298 = vpop.permute.xlu0 %1297
    %v1300 = vsel %vm102, %v1298, 0
    %1302 = vmatpush.bf16.msra.mxu0 0
    %1303 = vmatpush.bf16.msra.mxu0 0
    %1304 = vmatpush.bf16.msra.mxu0 0
    %1305 = vmatpush.bf16.msra.mxu0 0
    %1306 = vmatpush.bf16.msra.mxu0 0
    %1307 = vmatpush.bf16.msra.mxu0 0
    %1308 = vmatpush.bf16.msra.mxu0 0
    %1309 = vmatpush.bf16.msra.mxu0 %v227
    %1310 = vmatmul.bf16.gmra.mxu0 %v1300
    %v1311 = vpop.f32.mrf.mxu0
    %v1312 = vadd.f32 0.0, %v1311
    %v1313 = vpop.f32.mrf.mxu0
    %1314 = vdwg.mxu0
    %v1315 = vadd.f32 %v1295, %v1312
    %v1316 = vmul.f32 %v39, %v1315
    %v1317 = vtanh.pop %v1316
    %v1318 = vmul.f32 %v39, %v1317
    %v1319 = vadd.f32 %v1318, %v40
    %v1320 = vmul.f32 %v1319, %v1057
    %1322 = vrot.lane.b32.xlu0 %v1319, 104
    %v1323 = vpop.permute.xlu0 %1322
    %v1325 = vmul.f32 %v1319, %v1323
    %1327 = vrot.lane.b32.xlu0 %v1325, 12
    %v1328 = vpop.permute.xlu0 %1327
    %v1330 = vadd.f32 %v1320, %v1328
    %v1331 = vtanh.pop %v1330
    %1333 = vrot.lane.b32.xlu0 %v1331, 24
    %v1334 = vpop.permute.xlu0 %1333
    %v1336 = vmul.f32 %v1319, %v1334
    %v1337 = vpack.c.bf16 %v1336, %v1336
    %1338 = vmatpush.bf16.msra.mxu0 0
    %1339 = vmatpush.bf16.msra.mxu0 0
    %1340 = vmatpush.bf16.msra.mxu0 0
    %1341 = vmatpush.bf16.msra.mxu0 0
    %1342 = vmatpush.bf16.msra.mxu0 0
    %1343 = vmatpush.bf16.msra.mxu0 0
    %1344 = vmatpush.bf16.msra.mxu0 0
    %1345 = vmatpush.bf16.msra.mxu0 %v379
    %1346 = vmatmul.bf16.gmra.mxu0 %v1300
    %v1347 = vpop.f32.mrf.mxu0
    %v1348 = vadd.f32 0.0, %v1347
    %v1349 = vpop.f32.mrf.mxu0
    %1350 = vdwg.mxu0
    %v1351 = vadd.f32 %v49, %v1348
    %1353 = vrot.lane.b32.xlu0 %v1120, 92
    %v1354 = vpop.permute.xlu0 %1353
    %v1356 = vsel %vm102, %v1354, 0
    %1358 = vmatpush.bf16.msra.mxu0 0
    %1359 = vmatpush.bf16.msra.mxu0 0
    %1360 = vmatpush.bf16.msra.mxu0 0
    %1361 = vmatpush.bf16.msra.mxu0 0
    %1362 = vmatpush.bf16.msra.mxu0 0
    %1363 = vmatpush.bf16.msra.mxu0 0
    %1364 = vmatpush.bf16.msra.mxu0 0
    %1365 = vmatpush.bf16.msra.mxu0 %v404
    %1366 = vmatmul.bf16.gmra.mxu0 %v1356
    %v1367 = vpop.f32.mrf.mxu0
    %v1368 = vadd.f32 0.0, %v1367
    %v1369 = vpop.f32.mrf.mxu0
    %1370 = vdwg.mxu0
    %v1371 = vadd.f32 %v1351, %v1368
    %v1372 = vmul.f32 %v39, %v1371
    %v1373 = vtanh.pop %v1372
    %v1374 = vmul.f32 %v39, %v1373
    %v1375 = vadd.f32 %v1374, %v40
    %v1376 = vmul.f32 %v1375, %v1113
    %1378 = vrot.lane.b32.xlu0 %v1375, 104
    %v1379 = vpop.permute.xlu0 %1378
    %v1381 = vmul.f32 %v1375, %v1379
    %1383 = vrot.lane.b32.xlu0 %v1381, 12
    %v1384 = vpop.permute.xlu0 %1383
    %v1386 = vadd.f32 %v1376, %v1384
    %v1387 = vtanh.pop %v1386
    %1389 = vrot.lane.b32.xlu0 %v1387, 24
    %v1390 = vpop.permute.xlu0 %1389
    %v1392 = vmul.f32 %v1375, %v1390
    %v1393 = vpack.c.bf16 %v1392, %v1392
    %1394 = vmatpush.bf16.msra.mxu0 0
    %1395 = vmatpush.bf16.msra.mxu0 0
    %1396 = vmatpush.bf16.msra.mxu0 0
    %1397 = vmatpush.bf16.msra.mxu0 0
    %1398 = vmatpush.bf16.msra.mxu0 0
    %1399 = vmatpush.bf16.msra.mxu0 0
    %1400 = vmatpush.bf16.msra.mxu0 0
    %1401 = vmatpush.bf16.msra.mxu0 %v612
    %1402 = vmatmul.bf16.gmra.mxu0 %v1356
    %v1403 = vpop.f32.mrf.mxu0
    %v1404 = vadd.f32 0.0, %v1403
    %v1405 = vpop.f32.mrf.mxu0
    %1406 = vdwg.mxu0
    %v1407 = vadd.f32 %v54, %v1404
    %1409 = vrot.lane.b32.xlu0 %v1176, 92
    %v1410 = vpop.permute.xlu0 %1409
    %v1412 = vsel %vm102, %v1410, 0
    %1414 = vmatpush.bf16.msra.mxu0 0
    %1415 = vmatpush.bf16.msra.mxu0 0
    %1416 = vmatpush.bf16.msra.mxu0 0
    %1417 = vmatpush.bf16.msra.mxu0 0
    %1418 = vmatpush.bf16.msra.mxu0 0
    %1419 = vmatpush.bf16.msra.mxu0 0
    %1420 = vmatpush.bf16.msra.mxu0 0
    %1421 = vmatpush.bf16.msra.mxu0 %v637
    %1422 = vmatmul.bf16.gmra.mxu0 %v1412
    %v1423 = vpop.f32.mrf.mxu0
    %v1424 = vadd.f32 0.0, %v1423
    %v1425 = vpop.f32.mrf.mxu0
    %1426 = vdwg.mxu0
    %v1427 = vadd.f32 %v1407, %v1424
    %v1428 = vmul.f32 %v39, %v1427
    %v1429 = vtanh.pop %v1428
    %v1430 = vmul.f32 %v39, %v1429
    %v1431 = vadd.f32 %v1430, %v40
    %v1432 = vmul.f32 %v1431, %v1169
    %1434 = vrot.lane.b32.xlu0 %v1431, 104
    %v1435 = vpop.permute.xlu0 %1434
    %v1437 = vmul.f32 %v1431, %v1435
    %1439 = vrot.lane.b32.xlu0 %v1437, 12
    %v1440 = vpop.permute.xlu0 %1439
    %v1442 = vadd.f32 %v1432, %v1440
    %v1443 = vtanh.pop %v1442
    %1445 = vrot.lane.b32.xlu0 %v1443, 24
    %v1446 = vpop.permute.xlu0 %1445
    %v1448 = vmul.f32 %v1431, %v1446
    %v1449 = vpack.c.bf16 %v1448, %v1448
    %1450 = vmatpush.bf16.msra.mxu0 0
    %1451 = vmatpush.bf16.msra.mxu0 0
    %1452 = vmatpush.bf16.msra.mxu0 0
    %1453 = vmatpush.bf16.msra.mxu0 0
    %1454 = vmatpush.bf16.msra.mxu0 0
    %1455 = vmatpush.bf16.msra.mxu0 0
    %1456 = vmatpush.bf16.msra.mxu0 0
    %1457 = vmatpush.bf16.msra.mxu0 %v898
    %1458 = vmatmul.bf16.gmra.mxu0 %v1412
    %v1459 = vpop.f32.mrf.mxu0
    %v1460 = vadd.f32 0.0, %v1459
    %v1461 = vpop.f32.mrf.mxu0
    %1462 = vdwg.mxu0
    %v1463 = vadd.f32 %v59, %v1460
    %1465 = vrot.lane.b32.xlu0 %v1232, 92
    %v1466 = vpop.permute.xlu0 %1465
    %v1468 = vsel %vm102, %v1466, 0
    %1470 = vmatpush.bf16.msra.mxu0 0
    %1471 = vmatpush.bf16.msra.mxu0 0
    %1472 = vmatpush.bf16.msra.mxu0 0
    %1473 = vmatpush.bf16.msra.mxu0 0
    %1474 = vmatpush.bf16.msra.mxu0 0
    %1475 = vmatpush.bf16.msra.mxu0 0
    %1476 = vmatpush.bf16.msra.mxu0 0
    %1477 = vmatpush.bf16.msra.mxu0 %v923
    %1478 = vmatmul.bf16.gmra.mxu0 %v1468
    %v1479 = vpop.f32.mrf.mxu0
    %v1480 = vadd.f32 0.0, %v1479
    %v1481 = vpop.f32.mrf.mxu0
    %1482 = vdwg.mxu0
    %v1483 = vadd.f32 %v1463, %v1480
    %v1484 = vmul.f32 %v39, %v1483
    %v1485 = vtanh.pop %v1484
    %v1486 = vmul.f32 %v39, %v1485
    %v1487 = vadd.f32 %v1486, %v40
    %v1488 = vmul.f32 %v1487, %v1225
    %1490 = vrot.lane.b32.xlu0 %v1487, 104
    %v1491 = vpop.permute.xlu0 %1490
    %v1493 = vmul.f32 %v1487, %v1491
    %1495 = vrot.lane.b32.xlu0 %v1493, 12
    %v1496 = vpop.permute.xlu0 %1495
    %v1498 = vadd.f32 %v1488, %v1496
    %v1499 = vtanh.pop %v1498
    %1501 = vrot.lane.b32.xlu0 %v1499, 24
    %v1502 = vpop.permute.xlu0 %1501
    %v1504 = vmul.f32 %v1487, %v1502
    %v1505 = vpack.c.bf16 %v1504, %v1504
    %v1507 = vrot.slane %v1281, 2
    %1508 = vrot.lane.b32.xlu0 %v1507, 92
    %v1509 = vpop.permute.xlu0 %1508
    %v1511 = vsel %vm102, %v1509, 0
    %1513 = vmatpush.bf16.msra.mxu0 0
    %1514 = vmatpush.bf16.msra.mxu0 0
    %1515 = vmatpush.bf16.msra.mxu0 0
    %1516 = vmatpush.bf16.msra.mxu0 0
    %1517 = vmatpush.bf16.msra.mxu0 0
    %1518 = vmatpush.bf16.msra.mxu0 0
    %1519 = vmatpush.bf16.msra.mxu0 0
    %1520 = vmatpush.bf16.msra.mxu0 %v108
    %1521 = vmatmul.bf16.gmra.mxu0 %v1511
    %v1522 = vpop.f32.mrf.mxu0
    %v1523 = vadd.f32 0.0, %v1522
    %v1524 = vpop.f32.mrf.mxu0
    %1525 = vdwg.mxu0
    %v1527 = vrot.slane %v1523, 2
    %v1529 = vadd.f32 %v93, %v1527
    %v1530 = vmul.f32 %v39, %v1529
    %v1531 = vtanh.pop %v1530
    %v1532 = vmul.f32 %v39, %v1531
    %v1533 = vadd.f32 %v1532, %v40
    %v1535 = vrot.slane %v1274, 6
    %v1537 = vmul.f32 %v1533, %v1535
    %1539 = vrot.lane.b32.xlu0 %v1533, 104
    %v1540 = vpop.permute.xlu0 %1539
    %v1542 = vmul.f32 %v1533, %v1540
    %1544 = vrot.lane.b32.xlu0 %v1542, 12
    %v1545 = vpop.permute.xlu0 %1544
    %v1547 = vadd.f32 %v1537, %v1545
    %v1548 = vtanh.pop %v1547
    %1550 = vrot.lane.b32.xlu0 %v1548, 24
    %v1551 = vpop.permute.xlu0 %1550
    %v1553 = vmul.f32 %v1533, %v1551
    %v1554 = vpack.c.bf16 %v1553, %v1553
    %1555 = vmatpush.bf16.msra.mxu0 0
    %1556 = vmatpush.bf16.msra.mxu0 0
    %1557 = vmatpush.bf16.msra.mxu0 0
    %1558 = vmatpush.bf16.msra.mxu0 0
    %1559 = vmatpush.bf16.msra.mxu0 0
    %1560 = vmatpush.bf16.msra.mxu0 0
    %1561 = vmatpush.bf16.msra.mxu0 0
    %1562 = vmatpush.bf16.msra.mxu0 %v202
    %1563 = vmatmul.bf16.gmra.mxu0 %v1511
    %v1564 = vpop.f32.mrf.mxu0
    %v1565 = vadd.f32 0.0, %v1564
    %v1566 = vpop.f32.mrf.mxu0
    %1567 = vdwg.mxu0
    %v1568 = vadd.f32 %v44, %v1565
    %1570 = vrot.lane.b32.xlu0 %v1337, 92
    %v1571 = vpop.permute.xlu0 %1570
    %v1573 = vsel %vm102, %v1571, 0
    %1575 = vmatpush.bf16.msra.mxu0 0
    %1576 = vmatpush.bf16.msra.mxu0 0
    %1577 = vmatpush.bf16.msra.mxu0 0
    %1578 = vmatpush.bf16.msra.mxu0 0
    %1579 = vmatpush.bf16.msra.mxu0 0
    %1580 = vmatpush.bf16.msra.mxu0 0
    %1581 = vmatpush.bf16.msra.mxu0 0
    %1582 = vmatpush.bf16.msra.mxu0 %v227
    %1583 = vmatmul.bf16.gmra.mxu0 %v1573
    %v1584 = vpop.f32.mrf.mxu0
    %v1585 = vadd.f32 0.0, %v1584
    %v1586 = vpop.f32.mrf.mxu0
    %1587 = vdwg.mxu0
    %v1588 = vadd.f32 %v1568, %v1585
    %v1589 = vmul.f32 %v39, %v1588
    %v1590 = vtanh.pop %v1589
    %v1591 = vmul.f32 %v39, %v1590
    %v1592 = vadd.f32 %v1591, %v40
    %v1593 = vmul.f32 %v1592, %v1330
    %1595 = vrot.lane.b32.xlu0 %v1592, 104
    %v1596 = vpop.permute.xlu0 %1595
    %v1598 = vmul.f32 %v1592, %v1596
    %1600 = vrot.lane.b32.xlu0 %v1598, 12
    %v1601 = vpop.permute.xlu0 %1600
    %v1603 = vadd.f32 %v1593, %v1601
    %v1604 = vtanh.pop %v1603
    %1606 = vrot.lane.b32.xlu0 %v1604, 24
    %v1607 = vpop.permute.xlu0 %1606
    %v1609 = vmul.f32 %v1592, %v1607
    %v1610 = vpack.c.bf16 %v1609, %v1609
    %1611 = vmatpush.bf16.msra.mxu0 0
    %1612 = vmatpush.bf16.msra.mxu0 0
    %1613 = vmatpush.bf16.msra.mxu0 0
    %1614 = vmatpush.bf16.msra.mxu0 0
    %1615 = vmatpush.bf16.msra.mxu0 0
    %1616 = vmatpush.bf16.msra.mxu0 0
    %1617 = vmatpush.bf16.msra.mxu0 0
    %1618 = vmatpush.bf16.msra.mxu0 %v379
    %1619 = vmatmul.bf16.gmra.mxu0 %v1573
    %v1620 = vpop.f32.mrf.mxu0
    %v1621 = vadd.f32 0.0, %v1620
    %v1622 = vpop.f32.mrf.mxu0
    %1623 = vdwg.mxu0
    %v1624 = vadd.f32 %v49, %v1621
    %1626 = vrot.lane.b32.xlu0 %v1393, 92
    %v1627 = vpop.permute.xlu0 %1626
    %v1629 = vsel %vm102, %v1627, 0
    %1631 = vmatpush.bf16.msra.mxu0 0
    %1632 = vmatpush.bf16.msra.mxu0 0
    %1633 = vmatpush.bf16.msra.mxu0 0
    %1634 = vmatpush.bf16.msra.mxu0 0
    %1635 = vmatpush.bf16.msra.mxu0 0
    %1636 = vmatpush.bf16.msra.mxu0 0
    %1637 = vmatpush.bf16.msra.mxu0 0
    %1638 = vmatpush.bf16.msra.mxu0 %v404
    %1639 = vmatmul.bf16.gmra.mxu0 %v1629
    %v1640 = vpop.f32.mrf.mxu0
    %v1641 = vadd.f32 0.0, %v1640
    %v1642 = vpop.f32.mrf.mxu0
    %1643 = vdwg.mxu0
    %v1644 = vadd.f32 %v1624, %v1641
    %v1645 = vmul.f32 %v39, %v1644
    %v1646 = vtanh.pop %v1645
    %v1647 = vmul.f32 %v39, %v1646
    %v1648 = vadd.f32 %v1647, %v40
    %v1649 = vmul.f32 %v1648, %v1386
    %1651 = vrot.lane.b32.xlu0 %v1648, 104
    %v1652 = vpop.permute.xlu0 %1651
    %v1654 = vmul.f32 %v1648, %v1652
    %1656 = vrot.lane.b32.xlu0 %v1654, 12
    %v1657 = vpop.permute.xlu0 %1656
    %v1659 = vadd.f32 %v1649, %v1657
    %v1660 = vtanh.pop %v1659
    %1662 = vrot.lane.b32.xlu0 %v1660, 24
    %v1663 = vpop.permute.xlu0 %1662
    %v1665 = vmul.f32 %v1648, %v1663
    %v1666 = vpack.c.bf16 %v1665, %v1665
    %1667 = vmatpush.bf16.msra.mxu0 0
    %1668 = vmatpush.bf16.msra.mxu0 0
    %1669 = vmatpush.bf16.msra.mxu0 0
    %1670 = vmatpush.bf16.msra.mxu0 0
    %1671 = vmatpush.bf16.msra.mxu0 0
    %1672 = vmatpush.bf16.msra.mxu0 0
    %1673 = vmatpush.bf16.msra.mxu0 0
    %1674 = vmatpush.bf16.msra.mxu0 %v612
    %1675 = vmatmul.bf16.gmra.mxu0 %v1629
    %v1676 = vpop.f32.mrf.mxu0
    %v1677 = vadd.f32 0.0, %v1676
    %v1678 = vpop.f32.mrf.mxu0
    %1679 = vdwg.mxu0
    %v1680 = vadd.f32 %v54, %v1677
    %1682 = vrot.lane.b32.xlu0 %v1449, 92
    %v1683 = vpop.permute.xlu0 %1682
    %v1685 = vsel %vm102, %v1683, 0
    %1687 = vmatpush.bf16.msra.mxu0 0
    %1688 = vmatpush.bf16.msra.mxu0 0
    %1689 = vmatpush.bf16.msra.mxu0 0
    %1690 = vmatpush.bf16.msra.mxu0 0
    %1691 = vmatpush.bf16.msra.mxu0 0
    %1692 = vmatpush.bf16.msra.mxu0 0
    %1693 = vmatpush.bf16.msra.mxu0 0
    %1694 = vmatpush.bf16.msra.mxu0 %v637
    %1695 = vmatmul.bf16.gmra.mxu0 %v1685
    %v1696 = vpop.f32.mrf.mxu0
    %v1697 = vadd.f32 0.0, %v1696
    %v1698 = vpop.f32.mrf.mxu0
    %1699 = vdwg.mxu0
    %v1700 = vadd.f32 %v1680, %v1697
    %v1701 = vmul.f32 %v39, %v1700
    %v1702 = vtanh.pop %v1701
    %v1703 = vmul.f32 %v39, %v1702
    %v1704 = vadd.f32 %v1703, %v40
    %v1705 = vmul.f32 %v1704, %v1442
    %1707 = vrot.lane.b32.xlu0 %v1704, 104
    %v1708 = vpop.permute.xlu0 %1707
    %v1710 = vmul.f32 %v1704, %v1708
    %1712 = vrot.lane.b32.xlu0 %v1710, 12
    %v1713 = vpop.permute.xlu0 %1712
    %v1715 = vadd.f32 %v1705, %v1713
    %v1716 = vtanh.pop %v1715
    %1718 = vrot.lane.b32.xlu0 %v1716, 24
    %v1719 = vpop.permute.xlu0 %1718
    %v1721 = vmul.f32 %v1704, %v1719
    %v1722 = vpack.c.bf16 %v1721, %v1721
    %1723 = vmatpush.bf16.msra.mxu0 0
    %1724 = vmatpush.bf16.msra.mxu0 0
    %1725 = vmatpush.bf16.msra.mxu0 0
    %1726 = vmatpush.bf16.msra.mxu0 0
    %1727 = vmatpush.bf16.msra.mxu0 0
    %1728 = vmatpush.bf16.msra.mxu0 0
    %1729 = vmatpush.bf16.msra.mxu0 0
    %1730 = vmatpush.bf16.msra.mxu0 %v898
    %1731 = vmatmul.bf16.gmra.mxu0 %v1685
    %v1732 = vpop.f32.mrf.mxu0
    %v1733 = vadd.f32 0.0, %v1732
    %v1734 = vpop.f32.mrf.mxu0
    %1735 = vdwg.mxu0
    %v1736 = vadd.f32 %v59, %v1733
    %1738 = vrot.lane.b32.xlu0 %v1505, 92
    %v1739 = vpop.permute.xlu0 %1738
    %v1741 = vsel %vm102, %v1739, 0
    %1743 = vmatpush.bf16.msra.mxu0 0
    %1744 = vmatpush.bf16.msra.mxu0 0
    %1745 = vmatpush.bf16.msra.mxu0 0
    %1746 = vmatpush.bf16.msra.mxu0 0
    %1747 = vmatpush.bf16.msra.mxu0 0
    %1748 = vmatpush.bf16.msra.mxu0 0
    %1749 = vmatpush.bf16.msra.mxu0 0
    %1750 = vmatpush.bf16.msra.mxu0 %v923
    %1751 = vmatmul.bf16.gmra.mxu0 %v1741
    %v1752 = vpop.f32.mrf.mxu0
    %v1753 = vadd.f32 0.0, %v1752
    %v1754 = vpop.f32.mrf.mxu0
    %1755 = vdwg.mxu0
    %v1756 = vadd.f32 %v1736, %v1753
    %v1757 = vmul.f32 %v39, %v1756
    %v1758 = vtanh.pop %v1757
    %v1759 = vmul.f32 %v39, %v1758
    %v1760 = vadd.f32 %v1759, %v40
    %v1761 = vmul.f32 %v1760, %v1498
    %1763 = vrot.lane.b32.xlu0 %v1760, 104
    %v1764 = vpop.permute.xlu0 %1763
    %v1766 = vmul.f32 %v1760, %v1764
    %1768 = vrot.lane.b32.xlu0 %v1766, 12
    %v1769 = vpop.permute.xlu0 %1768
    %v1771 = vadd.f32 %v1761, %v1769
    %v1772 = vtanh.pop %v1771
    %1774 = vrot.lane.b32.xlu0 %v1772, 24
    %v1775 = vpop.permute.xlu0 %1774
    %v1777 = vmul.f32 %v1760, %v1775
    %v1778 = vpack.c.bf16 %v1777, %v1777
    %v1780 = vrot.slane %v1554, 3
    %1781 = vrot.lane.b32.xlu0 %v1780, 92
    %v1782 = vpop.permute.xlu0 %1781
    %v1784 = vsel %vm102, %v1782, 0
    %1786 = vmatpush.bf16.msra.mxu0 0
    %1787 = vmatpush.bf16.msra.mxu0 0
    %1788 = vmatpush.bf16.msra.mxu0 0
    %1789 = vmatpush.bf16.msra.mxu0 0
    %1790 = vmatpush.bf16.msra.mxu0 0
    %1791 = vmatpush.bf16.msra.mxu0 0
    %1792 = vmatpush.bf16.msra.mxu0 0
    %1793 = vmatpush.bf16.msra.mxu0 %v202
    %1794 = vmatmul.bf16.gmra.mxu0 %v1784
    %v1795 = vpop.f32.mrf.mxu0
    %v1796 = vadd.f32 0.0, %v1795
    %v1797 = vpop.f32.mrf.mxu0
    %1798 = vdwg.mxu0
    %v1799 = vadd.f32 %v44, %v1796
    %1801 = vrot.lane.b32.xlu0 %v1610, 92
    %v1802 = vpop.permute.xlu0 %1801
    %v1804 = vsel %vm102, %v1802, 0
    %1806 = vmatpush.bf16.msra.mxu0 0
    %1807 = vmatpush.bf16.msra.mxu0 0
    %1808 = vmatpush.bf16.msra.mxu0 0
    %1809 = vmatpush.bf16.msra.mxu0 0
    %1810 = vmatpush.bf16.msra.mxu0 0
    %1811 = vmatpush.bf16.msra.mxu0 0
    %1812 = vmatpush.bf16.msra.mxu0 0
    %1813 = vmatpush.bf16.msra.mxu0 %v227
    %1814 = vmatmul.bf16.gmra.mxu0 %v1804
    %v1815 = vpop.f32.mrf.mxu0
    %v1816 = vadd.f32 0.0, %v1815
    %v1817 = vpop.f32.mrf.mxu0
    %1818 = vdwg.mxu0
    %v1819 = vadd.f32 %v1799, %v1816
    %v1820 = vmul.f32 %v39, %v1819
    %v1821 = vtanh.pop %v1820
    %v1822 = vmul.f32 %v39, %v1821
    %v1823 = vadd.f32 %v1822, %v40
    %v1824 = vmul.f32 %v1823, %v1603
    %1826 = vrot.lane.b32.xlu0 %v1823, 104
    %v1827 = vpop.permute.xlu0 %1826
    %v1829 = vmul.f32 %v1823, %v1827
    %1831 = vrot.lane.b32.xlu0 %v1829, 12
    %v1832 = vpop.permute.xlu0 %1831
    %v1834 = vadd.f32 %v1824, %v1832
    %v1835 = vtanh.pop %v1834
    %1837 = vrot.lane.b32.xlu0 %v1835, 24
    %v1838 = vpop.permute.xlu0 %1837
    %v1840 = vmul.f32 %v1823, %v1838
    %v1841 = vpack.c.bf16 %v1840, %v1840
    %1842 = vmatpush.bf16.msra.mxu0 0
    %1843 = vmatpush.bf16.msra.mxu0 0
    %1844 = vmatpush.bf16.msra.mxu0 0
    %1845 = vmatpush.bf16.msra.mxu0 0
    %1846 = vmatpush.bf16.msra.mxu0 0
    %1847 = vmatpush.bf16.msra.mxu0 0
    %1848 = vmatpush.bf16.msra.mxu0 0
    %1849 = vmatpush.bf16.msra.mxu0 %v379
    %1850 = vmatmul.bf16.gmra.mxu0 %v1804
    %v1851 = vpop.f32.mrf.mxu0
    %v1852 = vadd.f32 0.0, %v1851
    %v1853 = vpop.f32.mrf.mxu0
    %1854 = vdwg.mxu0
    %v1855 = vadd.f32 %v49, %v1852
    %1857 = vrot.lane.b32.xlu0 %v1666, 92
    %v1858 = vpop.permute.xlu0 %1857
    %v1860 = vsel %vm102, %v1858, 0
    %1862 = vmatpush.bf16.msra.mxu0 0
    %1863 = vmatpush.bf16.msra.mxu0 0
    %1864 = vmatpush.bf16.msra.mxu0 0
    %1865 = vmatpush.bf16.msra.mxu0 0
    %1866 = vmatpush.bf16.msra.mxu0 0
    %1867 = vmatpush.bf16.msra.mxu0 0
    %1868 = vmatpush.bf16.msra.mxu0 0
    %1869 = vmatpush.bf16.msra.mxu0 %v404
    %1870 = vmatmul.bf16.gmra.mxu0 %v1860
    %v1871 = vpop.f32.mrf.mxu0
    %v1872 = vadd.f32 0.0, %v1871
    %v1873 = vpop.f32.mrf.mxu0
    %1874 = vdwg.mxu0
    %v1875 = vadd.f32 %v1855, %v1872
    %v1876 = vmul.f32 %v39, %v1875
    %v1877 = vtanh.pop %v1876
    %v1878 = vmul.f32 %v39, %v1877
    %v1879 = vadd.f32 %v1878, %v40
    %v1880 = vmul.f32 %v1879, %v1659
    %1882 = vrot.lane.b32.xlu0 %v1879, 104
    %v1883 = vpop.permute.xlu0 %1882
    %v1885 = vmul.f32 %v1879, %v1883
    %1887 = vrot.lane.b32.xlu0 %v1885, 12
    %v1888 = vpop.permute.xlu0 %1887
    %v1890 = vadd.f32 %v1880, %v1888
    %v1891 = vtanh.pop %v1890
    %1893 = vrot.lane.b32.xlu0 %v1891, 24
    %v1894 = vpop.permute.xlu0 %1893
    %v1896 = vmul.f32 %v1879, %v1894
    %v1897 = vpack.c.bf16 %v1896, %v1896
    %1898 = vmatpush.bf16.msra.mxu0 0
    %1899 = vmatpush.bf16.msra.mxu0 0
    %1900 = vmatpush.bf16.msra.mxu0 0
    %1901 = vmatpush.bf16.msra.mxu0 0
    %1902 = vmatpush.bf16.msra.mxu0 0
    %1903 = vmatpush.bf16.msra.mxu0 0
    %1904 = vmatpush.bf16.msra.mxu0 0
    %1905 = vmatpush.bf16.msra.mxu0 %v612
    %1906 = vmatmul.bf16.gmra.mxu0 %v1860
    %v1907 = vpop.f32.mrf.mxu0
    %v1908 = vadd.f32 0.0, %v1907
    %v1909 = vpop.f32.mrf.mxu0
    %1910 = vdwg.mxu0
    %v1911 = vadd.f32 %v54, %v1908
    %1913 = vrot.lane.b32.xlu0 %v1722, 92
    %v1914 = vpop.permute.xlu0 %1913
    %v1916 = vsel %vm102, %v1914, 0
    %1918 = vmatpush.bf16.msra.mxu0 0
    %1919 = vmatpush.bf16.msra.mxu0 0
    %1920 = vmatpush.bf16.msra.mxu0 0
    %1921 = vmatpush.bf16.msra.mxu0 0
    %1922 = vmatpush.bf16.msra.mxu0 0
    %1923 = vmatpush.bf16.msra.mxu0 0
    %1924 = vmatpush.bf16.msra.mxu0 0
    %1925 = vmatpush.bf16.msra.mxu0 %v637
    %1926 = vmatmul.bf16.gmra.mxu0 %v1916
    %v1927 = vpop.f32.mrf.mxu0
    %v1928 = vadd.f32 0.0, %v1927
    %v1929 = vpop.f32.mrf.mxu0
    %1930 = vdwg.mxu0
    %v1931 = vadd.f32 %v1911, %v1928
    %v1932 = vmul.f32 %v39, %v1931
    %v1933 = vtanh.pop %v1932
    %v1934 = vmul.f32 %v39, %v1933
    %v1935 = vadd.f32 %v1934, %v40
    %v1936 = vmul.f32 %v1935, %v1715
    %1938 = vrot.lane.b32.xlu0 %v1935, 104
    %v1939 = vpop.permute.xlu0 %1938
    %v1941 = vmul.f32 %v1935, %v1939
    %1943 = vrot.lane.b32.xlu0 %v1941, 12
    %v1944 = vpop.permute.xlu0 %1943
    %v1946 = vadd.f32 %v1936, %v1944
    %v1947 = vtanh.pop %v1946
    %1949 = vrot.lane.b32.xlu0 %v1947, 24
    %v1950 = vpop.permute.xlu0 %1949
    %v1952 = vmul.f32 %v1935, %v1950
    %v1953 = vpack.c.bf16 %v1952, %v1952
    %1954 = vmatpush.bf16.msra.mxu0 0
    %1955 = vmatpush.bf16.msra.mxu0 0
    %1956 = vmatpush.bf16.msra.mxu0 0
    %1957 = vmatpush.bf16.msra.mxu0 0
    %1958 = vmatpush.bf16.msra.mxu0 0
    %1959 = vmatpush.bf16.msra.mxu0 0
    %1960 = vmatpush.bf16.msra.mxu0 0
    %1961 = vmatpush.bf16.msra.mxu0 %v898
    %1962 = vmatmul.bf16.gmra.mxu0 %v1916
    %v1963 = vpop.f32.mrf.mxu0
    %v1964 = vadd.f32 0.0, %v1963
    %v1965 = vpop.f32.mrf.mxu0
    %1966 = vdwg.mxu0
    %v1967 = vadd.f32 %v59, %v1964
    %1969 = vrot.lane.b32.xlu0 %v1778, 92
    %v1970 = vpop.permute.xlu0 %1969
    %v1972 = vsel %vm102, %v1970, 0
    %1974 = vmatpush.bf16.msra.mxu0 0
    %1975 = vmatpush.bf16.msra.mxu0 0
    %1976 = vmatpush.bf16.msra.mxu0 0
    %1977 = vmatpush.bf16.msra.mxu0 0
    %1978 = vmatpush.bf16.msra.mxu0 0
    %1979 = vmatpush.bf16.msra.mxu0 0
    %1980 = vmatpush.bf16.msra.mxu0 0
    %1981 = vmatpush.bf16.msra.mxu0 %v923
    %1982 = vmatmul.bf16.gmra.mxu0 %v1972
    %v1983 = vpop.f32.mrf.mxu0
    %v1984 = vadd.f32 0.0, %v1983
    %v1985 = vpop.f32.mrf.mxu0
    %1986 = vdwg.mxu0
    %v1987 = vadd.f32 %v1967, %v1984
    %v1988 = vmul.f32 %v39, %v1987
    %v1989 = vtanh.pop %v1988
    %v1990 = vmul.f32 %v39, %v1989
    %v1991 = vadd.f32 %v1990, %v40
    %v1992 = vmul.f32 %v1991, %v1771
    %1994 = vrot.lane.b32.xlu0 %v1991, 104
    %v1995 = vpop.permute.xlu0 %1994
    %v1997 = vmul.f32 %v1991, %v1995
    %1999 = vrot.lane.b32.xlu0 %v1997, 12
    %v2000 = vpop.permute.xlu0 %1999
    %v2002 = vadd.f32 %v1992, %v2000
    %v2003 = vtanh.pop %v2002
    %2005 = vrot.lane.b32.xlu0 %v2003, 24
    %v2006 = vpop.permute.xlu0 %2005
    %v2008 = vmul.f32 %v1991, %v2006
    %v2009 = vpack.c.bf16 %v2008, %v2008
    %2011 = vrot.lane.b32.xlu0 %v1841, 92
    %v2012 = vpop.permute.xlu0 %2011
    %v2014 = vsel %vm102, %v2012, 0
    %2016 = vmatpush.bf16.msra.mxu0 0
    %2017 = vmatpush.bf16.msra.mxu0 0
    %2018 = vmatpush.bf16.msra.mxu0 0
    %2019 = vmatpush.bf16.msra.mxu0 0
    %2020 = vmatpush.bf16.msra.mxu0 0
    %2021 = vmatpush.bf16.msra.mxu0 0
    %2022 = vmatpush.bf16.msra.mxu0 0
    %2023 = vmatpush.bf16.msra.mxu0 %v379
    %2024 = vmatmul.bf16.gmra.mxu0 %v2014
    %v2025 = vpop.f32.mrf.mxu0
    %v2026 = vadd.f32 0.0, %v2025
    %v2027 = vpop.f32.mrf.mxu0
    %2028 = vdwg.mxu0
    %v2029 = vadd.f32 %v49, %v2026
    %2031 = vrot.lane.b32.xlu0 %v1897, 92
    %v2032 = vpop.permute.xlu0 %2031
    %v2034 = vsel %vm102, %v2032, 0
    %2036 = vmatpush.bf16.msra.mxu0 0
    %2037 = vmatpush.bf16.msra.mxu0 0
    %2038 = vmatpush.bf16.msra.mxu0 0
    %2039 = vmatpush.bf16.msra.mxu0 0
    %2040 = vmatpush.bf16.msra.mxu0 0
    %2041 = vmatpush.bf16.msra.mxu0 0
    %2042 = vmatpush.bf16.msra.mxu0 0
    %2043 = vmatpush.bf16.msra.mxu0 %v404
    %2044 = vmatmul.bf16.gmra.mxu0 %v2034
    %v2045 = vpop.f32.mrf.mxu0
    %v2046 = vadd.f32 0.0, %v2045
    %v2047 = vpop.f32.mrf.mxu0
    %2048 = vdwg.mxu0
    %v2049 = vadd.f32 %v2029, %v2046
    %v2050 = vmul.f32 %v39, %v2049
    %v2051 = vtanh.pop %v2050
    %v2052 = vmul.f32 %v39, %v2051
    %v2053 = vadd.f32 %v2052, %v40
    %v2054 = vmul.f32 %v2053, %v1890
    %2056 = vrot.lane.b32.xlu0 %v2053, 104
    %v2057 = vpop.permute.xlu0 %2056
    %v2059 = vmul.f32 %v2053, %v2057
    %2061 = vrot.lane.b32.xlu0 %v2059, 12
    %v2062 = vpop.permute.xlu0 %2061
    %v2064 = vadd.f32 %v2054, %v2062
    %v2065 = vtanh.pop %v2064
    %2067 = vrot.lane.b32.xlu0 %v2065, 24
    %v2068 = vpop.permute.xlu0 %2067
    %v2070 = vmul.f32 %v2053, %v2068
    %v2071 = vpack.c.bf16 %v2070, %v2070
    %2072 = vmatpush.bf16.msra.mxu0 0
    %2073 = vmatpush.bf16.msra.mxu0 0
    %2074 = vmatpush.bf16.msra.mxu0 0
    %2075 = vmatpush.bf16.msra.mxu0 0
    %2076 = vmatpush.bf16.msra.mxu0 0
    %2077 = vmatpush.bf16.msra.mxu0 0
    %2078 = vmatpush.bf16.msra.mxu0 0
    %2079 = vmatpush.bf16.msra.mxu0 %v612
    %2080 = vmatmul.bf16.gmra.mxu0 %v2034
    %v2081 = vpop.f32.mrf.mxu0
    %v2082 = vadd.f32 0.0, %v2081
    %v2083 = vpop.f32.mrf.mxu0
    %2084 = vdwg.mxu0
    %v2085 = vadd.f32 %v54, %v2082
    %2087 = vrot.lane.b32.xlu0 %v1953, 92
    %v2088 = vpop.permute.xlu0 %2087
    %v2090 = vsel %vm102, %v2088, 0
    %2092 = vmatpush.bf16.msra.mxu0 0
    %2093 = vmatpush.bf16.msra.mxu0 0
    %2094 = vmatpush.bf16.msra.mxu0 0
    %2095 = vmatpush.bf16.msra.mxu0 0
    %2096 = vmatpush.bf16.msra.mxu0 0
    %2097 = vmatpush.bf16.msra.mxu0 0
    %2098 = vmatpush.bf16.msra.mxu0 0
    %2099 = vmatpush.bf16.msra.mxu0 %v637
    %2100 = vmatmul.bf16.gmra.mxu0 %v2090
    %v2101 = vpop.f32.mrf.mxu0
    %v2102 = vadd.f32 0.0, %v2101
    %v2103 = vpop.f32.mrf.mxu0
    %2104 = vdwg.mxu0
    %v2105 = vadd.f32 %v2085, %v2102
    %v2106 = vmul.f32 %v39, %v2105
    %v2107 = vtanh.pop %v2106
    %v2108 = vmul.f32 %v39, %v2107
    %v2109 = vadd.f32 %v2108, %v40
    %v2110 = vmul.f32 %v2109, %v1946
    %2112 = vrot.lane.b32.xlu0 %v2109, 104
    %v2113 = vpop.permute.xlu0 %2112
    %v2115 = vmul.f32 %v2109, %v2113
    %2117 = vrot.lane.b32.xlu0 %v2115, 12
    %v2118 = vpop.permute.xlu0 %2117
    %v2120 = vadd.f32 %v2110, %v2118
    %v2121 = vtanh.pop %v2120
    %2123 = vrot.lane.b32.xlu0 %v2121, 24
    %v2124 = vpop.permute.xlu0 %2123
    %v2126 = vmul.f32 %v2109, %v2124
    %v2127 = vpack.c.bf16 %v2126, %v2126
    %2128 = vmatpush.bf16.msra.mxu0 0
    %2129 = vmatpush.bf16.msra.mxu0 0
    %2130 = vmatpush.bf16.msra.mxu0 0
    %2131 = vmatpush.bf16.msra.mxu0 0
    %2132 = vmatpush.bf16.msra.mxu0 0
    %2133 = vmatpush.bf16.msra.mxu0 0
    %2134 = vmatpush.bf16.msra.mxu0 0
    %2135 = vmatpush.bf16.msra.mxu0 %v898
    %2136 = vmatmul.bf16.gmra.mxu0 %v2090
    %v2137 = vpop.f32.mrf.mxu0
    %v2138 = vadd.f32 0.0, %v2137
    %v2139 = vpop.f32.mrf.mxu0
    %2140 = vdwg.mxu0
    %v2141 = vadd.f32 %v59, %v2138
    %2143 = vrot.lane.b32.xlu0 %v2009, 92
    %v2144 = vpop.permute.xlu0 %2143
    %v2146 = vsel %vm102, %v2144, 0
    %2148 = vmatpush.bf16.msra.mxu0 0
    %2149 = vmatpush.bf16.msra.mxu0 0
    %2150 = vmatpush.bf16.msra.mxu0 0
    %2151 = vmatpush.bf16.msra.mxu0 0
    %2152 = vmatpush.bf16.msra.mxu0 0
    %2153 = vmatpush.bf16.msra.mxu0 0
    %2154 = vmatpush.bf16.msra.mxu0 0
    %2155 = vmatpush.bf16.msra.mxu0 %v923
    %2156 = vmatmul.bf16.gmra.mxu0 %v2146
    %v2157 = vpop.f32.mrf.mxu0
    %v2158 = vadd.f32 0.0, %v2157
    %v2159 = vpop.f32.mrf.mxu0
    %2160 = vdwg.mxu0
    %v2161 = vadd.f32 %v2141, %v2158
    %v2162 = vmul.f32 %v39, %v2161
    %v2163 = vtanh.pop %v2162
    %v2164 = vmul.f32 %v39, %v2163
    %v2165 = vadd.f32 %v2164, %v40
    %v2166 = vmul.f32 %v2165, %v2002
    %2168 = vrot.lane.b32.xlu0 %v2165, 104
    %v2169 = vpop.permute.xlu0 %2168
    %v2171 = vmul.f32 %v2165, %v2169
    %2173 = vrot.lane.b32.xlu0 %v2171, 12
    %v2174 = vpop.permute.xlu0 %2173
    %v2176 = vadd.f32 %v2166, %v2174
    %v2177 = vtanh.pop %v2176
    %2179 = vrot.lane.b32.xlu0 %v2177, 24
    %v2180 = vpop.permute.xlu0 %2179
    %v2182 = vmul.f32 %v2165, %v2180
    %v2183 = vpack.c.bf16 %v2182, %v2182
    %2185 = vrot.lane.b32.xlu0 %v2071, 92
    %v2186 = vpop.permute.xlu0 %2185
    %v2188 = vsel %vm102, %v2186, 0
    %2190 = vmatpush.bf16.msra.mxu0 0
    %2191 = vmatpush.bf16.msra.mxu0 0
    %2192 = vmatpush.bf16.msra.mxu0 0
    %2193 = vmatpush.bf16.msra.mxu0 0
    %2194 = vmatpush.bf16.msra.mxu0 0
    %2195 = vmatpush.bf16.msra.mxu0 0
    %2196 = vmatpush.bf16.msra.mxu0 0
    %2197 = vmatpush.bf16.msra.mxu0 %v612
    %2198 = vmatmul.bf16.gmra.mxu0 %v2188
    %v2199 = vpop.f32.mrf.mxu0
    %v2200 = vadd.f32 0.0, %v2199
    %v2201 = vpop.f32.mrf.mxu0
    %2202 = vdwg.mxu0
    %v2203 = vadd.f32 %v54, %v2200
    %2205 = vrot.lane.b32.xlu0 %v2127, 92
    %v2206 = vpop.permute.xlu0 %2205
    %v2208 = vsel %vm102, %v2206, 0
    %2210 = vmatpush.bf16.msra.mxu0 0
    %2211 = vmatpush.bf16.msra.mxu0 0
    %2212 = vmatpush.bf16.msra.mxu0 0
    %2213 = vmatpush.bf16.msra.mxu0 0
    %2214 = vmatpush.bf16.msra.mxu0 0
    %2215 = vmatpush.bf16.msra.mxu0 0
    %2216 = vmatpush.bf16.msra.mxu0 0
    %2217 = vmatpush.bf16.msra.mxu0 %v637
    %2218 = vmatmul.bf16.gmra.mxu0 %v2208
    %v2219 = vpop.f32.mrf.mxu0
    %v2220 = vadd.f32 0.0, %v2219
    %v2221 = vpop.f32.mrf.mxu0
    %2222 = vdwg.mxu0
    %v2223 = vadd.f32 %v2203, %v2220
    %v2224 = vmul.f32 %v39, %v2223
    %v2225 = vtanh.pop %v2224
    %v2226 = vmul.f32 %v39, %v2225
    %v2227 = vadd.f32 %v2226, %v40
    %v2228 = vmul.f32 %v2227, %v2120
    %2230 = vrot.lane.b32.xlu0 %v2227, 104
    %v2231 = vpop.permute.xlu0 %2230
    %v2233 = vmul.f32 %v2227, %v2231
    %2235 = vrot.lane.b32.xlu0 %v2233, 12
    %v2236 = vpop.permute.xlu0 %2235
    %v2238 = vadd.f32 %v2228, %v2236
    %v2239 = vtanh.pop %v2238
    %2241 = vrot.lane.b32.xlu0 %v2239, 24
    %v2242 = vpop.permute.xlu0 %2241
    %v2244 = vmul.f32 %v2227, %v2242
    %v2245 = vpack.c.bf16 %v2244, %v2244
    %2246 = vmatpush.bf16.msra.mxu0 0
    %2247 = vmatpush.bf16.msra.mxu0 0
    %2248 = vmatpush.bf16.msra.mxu0 0
    %2249 = vmatpush.bf16.msra.mxu0 0
    %2250 = vmatpush.bf16.msra.mxu0 0
    %2251 = vmatpush.bf16.msra.mxu0 0
    %2252 = vmatpush.bf16.msra.mxu0 0
    %2253 = vmatpush.bf16.msra.mxu0 %v898
    %2254 = vmatmul.bf16.gmra.mxu0 %v2208
    %v2255 = vpop.f32.mrf.mxu0
    %v2256 = vadd.f32 0.0, %v2255
    %v2257 = vpop.f32.mrf.mxu0
    %2258 = vdwg.mxu0
    %v2259 = vadd.f32 %v59, %v2256
    %2261 = vrot.lane.b32.xlu0 %v2183, 92
    %v2262 = vpop.permute.xlu0 %2261
    %v2264 = vsel %vm102, %v2262, 0
    %2266 = vmatpush.bf16.msra.mxu0 0
    %2267 = vmatpush.bf16.msra.mxu0 0
    %2268 = vmatpush.bf16.msra.mxu0 0
    %2269 = vmatpush.bf16.msra.mxu0 0
    %2270 = vmatpush.bf16.msra.mxu0 0
    %2271 = vmatpush.bf16.msra.mxu0 0
    %2272 = vmatpush.bf16.msra.mxu0 0
    %2273 = vmatpush.bf16.msra.mxu0 %v923
    %2274 = vmatmul.bf16.gmra.mxu0 %v2264
    %v2275 = vpop.f32.mrf.mxu0
    %v2276 = vadd.f32 0.0, %v2275
    %v2277 = vpop.f32.mrf.mxu0
    %2278 = vdwg.mxu0
    %v2279 = vadd.f32 %v2259, %v2276
    %v2280 = vmul.f32 %v39, %v2279
    %v2281 = vtanh.pop %v2280
    %v2282 = vmul.f32 %v39, %v2281
    %v2283 = vadd.f32 %v2282, %v40
    %v2284 = vmul.f32 %v2283, %v2176
    %2286 = vrot.lane.b32.xlu0 %v2283, 104
    %v2287 = vpop.permute.xlu0 %2286
    %v2289 = vmul.f32 %v2283, %v2287
    %2291 = vrot.lane.b32.xlu0 %v2289, 12
    %v2292 = vpop.permute.xlu0 %2291
    %v2294 = vadd.f32 %v2284, %v2292
    %v2295 = vtanh.pop %v2294
    %2297 = vrot.lane.b32.xlu0 %v2295, 24
    %v2298 = vpop.permute.xlu0 %2297
    %v2300 = vmul.f32 %v2283, %v2298
    %v2301 = vpack.c.bf16 %v2300, %v2300
    %2303 = vrot.lane.b32.xlu0 %v2245, 92
    %v2304 = vpop.permute.xlu0 %2303
    %v2306 = vsel %vm102, %v2304, 0
    %2308 = vmatpush.bf16.msra.mxu0 0
    %2309 = vmatpush.bf16.msra.mxu0 0
    %2310 = vmatpush.bf16.msra.mxu0 0
    %2311 = vmatpush.bf16.msra.mxu0 0
    %2312 = vmatpush.bf16.msra.mxu0 0
    %2313 = vmatpush.bf16.msra.mxu0 0
    %2314 = vmatpush.bf16.msra.mxu0 0
    %2315 = vmatpush.bf16.msra.mxu0 %v898
    %2316 = vmatmul.bf16.gmra.mxu0 %v2306
    %v2317 = vpop.f32.mrf.mxu0
    %v2318 = vadd.f32 0.0, %v2317
    %v2319 = vpop.f32.mrf.mxu0
    %2320 = vdwg.mxu0
    %v2321 = vadd.f32 %v59, %v2318
    %2323 = vrot.lane.b32.xlu0 %v2301, 92
    %v2324 = vpop.permute.xlu0 %2323
    %v2326 = vsel %vm102, %v2324, 0
    %2328 = vmatpush.bf16.msra.mxu0 0
    %2329 = vmatpush.bf16.msra.mxu0 0
    %2330 = vmatpush.bf16.msra.mxu0 0
    %2331 = vmatpush.bf16.msra.mxu0 0
    %2332 = vmatpush.bf16.msra.mxu0 0
    %2333 = vmatpush.bf16.msra.mxu0 0
    %2334 = vmatpush.bf16.msra.mxu0 0
    %2335 = vmatpush.bf16.msra.mxu0 %v923
    %2336 = vmatmul.bf16.gmra.mxu0 %v2326
    %v2337 = vpop.f32.mrf.mxu0
    %v2338 = vadd.f32 0.0, %v2337
    %v2339 = vpop.f32.mrf.mxu0
    %2340 = vdwg.mxu0
    %v2341 = vadd.f32 %v2321, %v2338
    %v2342 = vmul.f32 %v39, %v2341
    %v2343 = vtanh.pop %v2342
    %v2344 = vmul.f32 %v39, %v2343
    %v2345 = vadd.f32 %v2344, %v40
    %v2346 = vmul.f32 %v2345, %v2294
    %2348 = vrot.lane.b32.xlu0 %v2345, 104
    %v2349 = vpop.permute.xlu0 %2348
    %v2351 = vmul.f32 %v2345, %v2349
    %2353 = vrot.lane.b32.xlu0 %v2351, 12
    %v2354 = vpop.permute.xlu0 %2353
    %v2356 = vadd.f32 %v2346, %v2354
    %v2357 = vtanh.pop %v2356
    %2359 = vrot.lane.b32.xlu0 %v2357, 24
    %v2360 = vpop.permute.xlu0 %2359
    %v2362 = vmul.f32 %v2345, %v2360
    %2364 = vrot.lane.b32.xlu0 %v1777, 92
    %v2365 = vpop.permute.xlu0 %2364
    %2368 = vrot.lane.b32.xlu0 %v2008, 104
    %v2369 = vpop.permute.xlu0 %2368
    %2372 = vrot.lane.b32.xlu0 %v2182, 116
    %v2373 = vpop.permute.xlu0 %2372
    %2376 = vrot.lane.b32.xlu0 %v2362, 12
    %v2377 = vpop.permute.xlu0 %2376
    %v2379 = vsel %vm102, %v2365, %v2369
    %vm2380 = vcmask 195584
    %v2381 = vsel %vm2380, %v2379, %v2373
    %vm2382 = vcmask 293888
    %v2383 = vsel %vm2382, %v2381, %v2300
    %vm2384 = vcmask 392192
    %v2385 = vsel %vm2384, %v2383, %v2377
    %v2386 = vmax.f32 %v2385, 0.0
    %v2387 = vpack.c.bf16 %v2386, %v2386
    %v2388 = vld [vmem:[%s5] sm:$0xf]
    %v2389 = vld [vmem:[%s5 + $0x4] sm:$0xf]
    %v2390 = vld [vmem:[%s5 + $0x8] sm:$0xf]
    %v2391 = vld [vmem:[%s5 + $0xc] sm:$0xf]
    %v2392 = vld [vmem:[%s5 + $0x10] sm:$0xf]
    %v2393 = vld [vmem:[%s5 + $0x14] sm:$0xf]
    %v2394 = vld [vmem:[%s5 + $0x18] sm:$0xf]
    %v2395 = vld [vmem:[%s5 + $0x1c] sm:$0x3]
    %v2396 = vld [vmem:[%s6] sm:$0x1]
    %v2398 = vperm.slane %v2396, 0
    %v2408 = vunpack.c.l.b16 %v2388
    %v2409 = vunpack.c.l.b16 %v2389
    %v2410 = vunpack.c.l.b16 %v2390
    %v2411 = vunpack.c.l.b16 %v2391
    %v2412 = vunpack.c.l.b16 %v2392
    %v2413 = vunpack.c.l.b16 %v2393
    %v2414 = vunpack.c.l.b16 %v2394
    %v2415 = vunpack.c.l.b16 %v2395
    %v2416 = vpack.c.b16 %v2409, %v2408
    %v2417 = vpack.c.b16 %v2411, %v2410
    %v2418 = vpack.c.b16 %v2413, %v2412
    %v2419 = vpack.c.b16 %v2415, %v2414
    %vm2423 = vcmask 490496
    %v2425 = vsel %vm2423, %v2387, 0
    %v2428 = vsel %vm106, %v2419, 0
    %2430 = vmatpush.bf16.msra.mxu0 0
    %2431 = vmatpush.bf16.msra.mxu0 0
    %2432 = vmatpush.bf16.msra.mxu0 0
    %2433 = vmatpush.bf16.msra.mxu0 0
    %2434 = vmatpush.bf16.msra.mxu0 %v2428
    %2435 = vmatpush.bf16.msra.mxu0 %v2418
    %2436 = vmatpush.bf16.msra.mxu0 %v2417
    %2437 = vmatpush.bf16.msra.mxu0 %v2416
    %2438 = vmatmul.bf16.gmra.mxu0 %v2425
    %v2439 = vpop.f32.mrf.mxu0
    %v2440 = vadd.f32 %v2398, %v2439
    %v2441 = vpop.f32.mrf.mxu0
    %2442 = vdwg.mxu0
    %v2443 = vmax.f32 %v2440, 0.0
    %v2444 = vpack.c.bf16 %v2443, %v2443
    %v2445 = vld [vmem:[%s7] sm:$0xf]
    %v2446 = vld [vmem:[%s7 + $0x4] sm:$0xf]
    %v2447 = vld [vmem:[%s7 + $0x8] sm:$0xf]
    %v2448 = vld [vmem:[%s7 + $0xc] sm:$0xf]
    %v2449 = vld [vmem:[%s7 + $0x10] sm:$0xf]
    %v2450 = vld [vmem:[%s7 + $0x14] sm:$0xf]
    %v2451 = vld [vmem:[%s7 + $0x18] sm:$0xf]
    %v2452 = vld [vmem:[%s7 + $0x1c] sm:$0xf]
    %v2453 = vld [vmem:[%s7 + $0x20] sm:$0xf]
    %v2454 = vld [vmem:[%s7 + $0x24] sm:$0xf]
    %v2455 = vld [vmem:[%s7 + $0x28] sm:$0xf]
    %v2456 = vld [vmem:[%s7 + $0x2c] sm:$0xf]
    %v2457 = vld [vmem:[%s7 + $0x30] sm:$0xf]
    %v2458 = vld [vmem:[%s7 + $0x34] sm:$0xf]
    %v2459 = vld [vmem:[%s7 + $0x38] sm:$0xf]
    %v2460 = vld [vmem:[%s7 + $0x3c] sm:$0xf]
    %v2461 = vld [vmem:[%s8] sm:$0x1]
    %v2463 = vperm.slane %v2461, 0
    %v2481 = vunpack.c.l.b16 %v2445
    %v2482 = vunpack.c.l.b16 %v2446
    %v2483 = vunpack.c.l.b16 %v2447
    %v2484 = vunpack.c.l.b16 %v2448
    %v2485 = vunpack.c.l.b16 %v2449
    %v2486 = vunpack.c.l.b16 %v2450
    %v2487 = vunpack.c.l.b16 %v2451
    %v2488 = vunpack.c.l.b16 %v2452
    %v2489 = vunpack.c.l.b16 %v2453
    %v2490 = vunpack.c.l.b16 %v2454
    %v2491 = vunpack.c.l.b16 %v2455
    %v2492 = vunpack.c.l.b16 %v2456
    %v2493 = vunpack.c.l.b16 %v2457
    %v2494 = vunpack.c.l.b16 %v2458
    %v2495 = vunpack.c.l.b16 %v2459
    %v2496 = vunpack.c.l.b16 %v2460
    %v2497 = vpack.c.b16 %v2482, %v2481
    %v2498 = vpack.c.b16 %v2484, %v2483
    %v2499 = vpack.c.b16 %v2486, %v2485
    %v2500 = vpack.c.b16 %v2488, %v2487
    %v2501 = vpack.c.b16 %v2490, %v2489
    %v2502 = vpack.c.b16 %v2492, %v2491
    %v2503 = vpack.c.b16 %v2494, %v2493
    %v2504 = vpack.c.b16 %v2496, %v2495
    %2513 = vmatpush.bf16.msra.mxu0 %v2504
    %2514 = vmatpush.bf16.msra.mxu0 %v2503
    %2515 = vmatpush.bf16.msra.mxu0 %v2502
    %2516 = vmatpush.bf16.msra.mxu0 %v2501
    %2517 = vmatpush.bf16.msra.mxu0 %v2500
    %2518 = vmatpush.bf16.msra.mxu0 %v2499
    %2519 = vmatpush.bf16.msra.mxu0 %v2498
    %2520 = vmatpush.bf16.msra.mxu0 %v2497
    %2521 = vmatmul.bf16.gmra.mxu0 %v2444
    %v2522 = vpop.f32.mrf.mxu0
    %v2523 = vadd.f32 %v2463, %v2522
    %v2524 = vpop.f32.mrf.mxu0
    %2525 = vdwg.mxu0
    %vm2526 = vcmask 17408
    %2527 = vst.msk [vmem:[#allocation2] sm:$0x3] %vm2526, %v2523
    // Predicated region
    $region38: #{lstm2_forward.1} parent=1 // pred_check
      _
    $region39: #{lstm2_forward.1} parent=1 // pred_check_branch
      %2529 = sbr.rel (0) target = $region41
    $region40: #{lstm2_forward.1} parent=1 // pred_region
      %2531 = vsyncadd [#allocation3], 0
      %s2533 = sshll.u32 [#allocation2], 4
      %s2534 = int_to_ptr.vmem [resolvable:$true] %s2533
      %s2535 = sshll.u32 %s9, 4
      %s2536 = int_to_ptr.hbm [resolvable:$true] %s2535
      %2538 = dma.vmem_to_hbm [thread:$0]  %s2534, 32, %s2536, [#allocation3]
    $region41: #{lstm2_forward.1} parent=1 // pred_fallthru
      _
    // Predicated region
    $region42: #{lstm2_forward.1} parent=1 // pred_check
      _
    $region43: #{lstm2_forward.1} parent=1 // pred_check_branch
      %2540 = sbr.rel (0) target = $region45
    $region44: #{lstm2_forward.1} parent=1 // pred_region
      %2542 = dma.done [#allocation3], 32
    $region45: #{lstm2_forward.1} parent=1 // pred_fallthru
      _
    %2543 = vsyncpa [#allocation3], 1

</llo_original>
